<compile_context>
chip_gen: v7x
topology: tpu7x:2x2x1
jax: 0.10.0
libtpu: 0.0.40
codegen_flags: <defaults>
</compile_context>

<pallas_src>
import functools

import jax
import jax.numpy as jnp
from jax.experimental import pallas as pl
from jax.experimental.pallas import tpu as pltpu

GEM_EPS = 1e-6   # clamp floor in GeneralizedMeanPoolingP
BN_EPS = 1e-5    # nn.BatchNorm1d default eps


def _vmem_ceiling_bytes():
    """Generation-aware scoped-VMEM ceiling: physical capacity minus ~16 MiB of
    headroom for Mosaic internal scratch (v7x: 64 MiB -> ~48 MiB usable,
    v5e/v6e: 128 MiB -> ~112 MiB)."""
    try:
        cap = int(pltpu.get_tpu_info().vmem_capacity_bytes)
    except Exception:
        cap = 64 << 20          # conservative fallback
    return max(16 << 20, cap - (16 << 20))


# --------------------------------------------------------------------------- #
# Kernel 1: GeM pooling + folded (inference) BatchNorm, tiled over channels.   #
# --------------------------------------------------------------------------- #
def gem_bn_kernel(p_ref,        # SMEM (1,)      learnable GeM power (runtime path only)
                  x_ref,        # VMEM (N, tc, HW)  native backbone layout
                  scale_ref,    # VMEM (1, tc)   gamma * rsqrt(var + eps)
                  shift_ref,    # VMEM (1, tc)   beta - mean * scale
                  bn_f32_ref,   # VMEM (N, tc)   f32 bn_features (user output)
                  bn_bf16_ref,  # VMEM (N, tc)   bf16 bn (matmul LHS for kernel 2)
                  *, p_static):
    x = x_ref[...].astype(jnp.float32)              # (N, tc, HW)
    xc = jnp.maximum(x, GEM_EPS)

    if p_static is not None:
        # p is a trace-time Python constant: pow and root use the SAME value.
        p_int = None
        if float(p_static) == round(p_static) and 1.0 <= p_static <= 8.0:
            p_int = int(round(p_static))
        if p_int is not None:
            # Integer p (e.g. the init value 3.0): repeated multiplies on the
            # 4 VALU slots instead of exp/log on the single EUP slot.
            xp = xc
            for _ in range(p_int - 1):
                xp = xp * xc
        else:
            xp = xc ** p_static
        pooled = jnp.mean(xp, axis=-1)               # (N, tc): lane reduction (XLU)
        feat = pooled ** (1.0 / p_static)            # only (N, tc) transcendentals
    else:
        # Runtime learnable p (e.g. while p is being trained): EUP exp/log path,
        # pow and root both read the same SMEM scalar.
        p = p_ref[0]
        pooled = jnp.mean(xc ** p, axis=-1)
        feat = pooled ** (1.0 / p)

    bn = feat * scale_ref[...] + shift_ref[...]      # folded BatchNorm1d (inference)
    bn_f32_ref[...] = bn.astype(bn_f32_ref.dtype)
    bn_bf16_ref[...] = bn.astype(bn_bf16_ref.dtype)


# --------------------------------------------------------------------------- #
# Kernel 2: bias-free classifier matmul, streaming bf16 weight tiles.          #
# --------------------------------------------------------------------------- #
def linear_kernel(bn_ref,    # VMEM (N, C)  bf16 BN features (constant block)
                  w_ref,     # VMEM (C, tn) bf16 weight tile
                  out_ref):  # VMEM (N, tn) f32 logits tile
    out_ref[...] = jnp.dot(bn_ref[...], w_ref[...],
                           preferred_element_type=jnp.float32)


# --------------------------------------------------------------------------- #
# Wrapper                                                                      #
# --------------------------------------------------------------------------- #
def classifier_forward(features_map, params, *, p_static=3.0, tc=256, tn=1024):
    """features_map: (N, C, H, W) f32/bf16 -> (bn_features (N,C) f32, cls_score (N,P) f32).

    p_static: GeM power as a static Python float (jit-safe specialization; must
              match the trained value of params["p"]).  Pass None to read the
              learnable p from params["p"] at runtime instead.
    tc:       channel tile for the GeM/BN call (multiple of 128, or >= C).
    tn:       class tile for the weight-streaming matmul (multiple of 128, or >= P).
    """
    N, C, H, W = features_map.shape
    HW = H * W
    P = params["w_t"].shape[1]

    # Native layout: just collapse H,W (free) — no HBM round-trip transpose.
    x = features_map.reshape(N, C, HW)

    # Learnable p (only read in-kernel when p_static is None).
    p_arr = jnp.asarray(params["p"], jnp.float32).reshape(1)

    # Fold BN (inference mode, running stats) into one scale/shift (O(C), cheap).
    gamma = params["bn_gamma"].astype(jnp.float32)
    beta = params["bn_beta"].astype(jnp.float32)
    mean = params["bn_mean"].astype(jnp.float32)
    var = params["bn_var"].astype(jnp.float32)
    scale = (gamma * jax.lax.rsqrt(var + BN_EPS)).reshape(1, C)
    shift = (beta - mean * scale[0]).reshape(1, C)

    # Classifier weight should already be stored in bf16 (C, P) — cast here is a
    # fallback only (it adds a full extra HBM pass if hit every call).
    w = params["w_t"]
    if w.dtype != jnp.bfloat16:
        w = w.astype(jnp.bfloat16)

    tc = min(tc, C)
    if tc != C:
        assert tc % 128 == 0, "channel tile must be a multiple of 128 lanes"
    tn = min(tn, P)
    if tn != P:
        assert tn % 128 == 0, "class tile must be a multiple of 128 lanes"

    ceiling = _vmem_ceiling_bytes()

    # ---------------- call 1: GeM + BN (parallel over channel tiles) -------- #
    x_blk_bytes = N * tc * HW * x.dtype.itemsize
    gem_vmem = min(ceiling, max(16 << 20,
                                2 * x_blk_bytes            # double-buffered input tile
                                + 4 * N * tc * HW * 4      # f32 elementwise temporaries
                                + 4 * N * tc * 4           # pooled / bn / outputs
                                + (4 << 20)))
    int_p = p_static is not None and float(p_static) == round(p_static)
    gem_cost = pl.CostEstimate(
        flops=6 * N * HW * C + 4 * N * C,
        transcendentals=N * C + (0 if int_p else 2 * N * HW * C),
        bytes_accessed=N * C * HW * x.dtype.itemsize + 2 * C * 4 + N * C * (4 + 2),
    )

    bn_features, bn_bf16 = pl.pallas_call(
        functools.partial(gem_bn_kernel, p_static=p_static),
        out_shape=(
            jax.ShapeDtypeStruct((N, C), jnp.float32),
            jax.ShapeDtypeStruct((N, C), jnp.bfloat16),
        ),
        grid=(pl.cdiv(C, tc),),
        in_specs=[
            pl.BlockSpec(memory_space=pltpu.MemorySpace.SMEM),   # p (scalar)
            pl.BlockSpec((N, tc, HW), lambda c: (0, c, 0)),      # feature-map tile
            pl.BlockSpec((1, tc), lambda c: (0, c)),             # BN scale
            pl.BlockSpec((1, tc), lambda c: (0, c)),             # BN shift
        ],
        out_specs=(
            pl.BlockSpec((N, tc), lambda c: (0, c)),             # bn_features (f32)
            pl.BlockSpec((N, tc), lambda c: (0, c)),             # bn bf16 (matmul LHS)
        ),
        compiler_params=pltpu.CompilerParams(
            dimension_semantics=("parallel",),
            vmem_limit_bytes=int(gem_vmem),
        ),
        cost_estimate=gem_cost,
    )(p_arr, x, scale, shift)

    # -------- call 2: weight-streaming matmul (parallel over class tiles) --- #
    mm_vmem = min(ceiling, max(16 << 20,
                               2 * (C * tn * 2 + N * tn * 4 + N * C * 2) + (4 << 20)))
    mm_cost = pl.CostEstimate(
        flops=2 * N * C * P,
        transcendentals=0,
        bytes_accessed=C * P * 2 + N * C * 2 + N * P * 4,
    )

    cls_score = pl.pallas_call(
        linear_kernel,
        out_shape=jax.ShapeDtypeStruct((N, P), jnp.float32),
        grid=(pl.cdiv(P, tn),),
        in_specs=[
            pl.BlockSpec((N, C), lambda j: (0, 0)),              # bn LHS (constant block)
            pl.BlockSpec((C, tn), lambda j: (0, j)),             # streamed bf16 weight tile
        ],
        out_specs=pl.BlockSpec((N, tn), lambda j: (0, j)),
        compiler_params=pltpu.CompilerParams(
            dimension_semantics=("parallel",),                   # shards across v7x's 2 TCs
            vmem_limit_bytes=int(mm_vmem),
        ),
        cost_estimate=mm_cost,
    )(bn_bf16, w)

    return bn_features, cls_score


def init_params(key, c_dim, pid_num):
    """Deterministic parameter init mirroring the PyTorch module's __init__.

    The classifier weight is stored transposed AND pre-cast to bf16 once here,
    so the forward never re-casts it (the kernel is weight-HBM-bandwidth bound).
    """
    # GeneralizedMeanPoolingP: p initialized to 3.0 (learnable)
    p = jnp.array([3.0], dtype=jnp.float32)
    # BatchNorm1d + weights_init_kaiming: weight=1, bias=0; fresh running stats
    bn_gamma = jnp.ones((c_dim,), dtype=jnp.float32)
    bn_beta = jnp.zeros((c_dim,), dtype=jnp.float32)
    bn_mean = jnp.zeros((c_dim,), dtype=jnp.float32)
    bn_var = jnp.ones((c_dim,), dtype=jnp.float32)
    # Linear(c_dim, pid_num, bias=False) + weights_init_classifier: N(0, 0.001)
    w = 0.001 * jax.random.normal(key, (pid_num, c_dim), dtype=jnp.float32)
    return {
        "p": p,
        "bn_gamma": bn_gamma,
        "bn_beta": bn_beta,
        "bn_mean": bn_mean,
        "bn_var": bn_var,
        "w_t": w.T.astype(jnp.bfloat16),   # (C, P) bf16, cast ONCE at init
    }


if __name__ == "__main__":
    # Small demo shapes: C=256 with tc=128 exercises 2 GeM grid steps,
    # PID_NUM=3072 with the production-default tn=1024 exercises 3 weight tiles.
    N, C, H, W = 4, 256, 8, 8
    PID_NUM = 3072

    key = jax.random.PRNGKey(0)
    k_x, k_w = jax.random.split(key)

    # Backbone output kept in bf16 (halves GeM-phase HBM traffic); kernel does
    # the clamp/pow math in f32.
    features_map = jax.random.normal(k_x, (N, C, H, W), dtype=jnp.float32)
    features_map = features_map.astype(jnp.bfloat16)
    params = init_params(k_w, C, PID_NUM)

    bn_features, cls_score = classifier_forward(features_map, params,
                                                p_static=3.0, tc=128, tn=1024)
    jax.block_until_ready((bn_features, cls_score))
    assert bn_features.shape == (N, C) and cls_score.shape == (N, PID_NUM)

    # Pure-JAX reference of the same semantics (same bf16 input / bf16 weight).
    p_val = float(params["p"][0])
    xf = features_map.astype(jnp.float32).reshape(N, C, H * W)
    xc = jnp.maximum(xf, GEM_EPS)
    feat_ref = jnp.mean(xc ** p_val, axis=-1) ** (1.0 / p_val)
    scale_ref = params["bn_gamma"] / jnp.sqrt(params["bn_var"] + BN_EPS)
    bn_ref = (feat_ref - params["bn_mean"]) * scale_ref + params["bn_beta"]
    w_f32 = params["w_t"].astype(jnp.float32)
    cls_ref = jnp.dot(bn_ref.astype(jnp.bfloat16).astype(jnp.float32), w_f32)

    assert jnp.allclose(bn_features, bn_ref, atol=1e-4, rtol=1e-4)
    assert jnp.allclose(cls_score, cls_ref, atol=1e-3, rtol=1e-3)

    print("KERNEL_OK")
</pallas_src>

<mosaic_0001>
module attributes {stable_mosaic.version = 11 : i64} {
  func.func @gem_bn_kernel(%arg0: i32, %arg1: memref<1xf32, #tpu.memory_space<smem>>, %arg2: memref<4x128x64xbf16, #tpu.memory_space<vmem>>, %arg3: memref<1x128xf32, #tpu.memory_space<vmem>>, %arg4: memref<1x128xf32, #tpu.memory_space<vmem>>, %arg5: memref<4x128xf32, #tpu.memory_space<vmem>>, %arg6: memref<4x128xbf16, #tpu.memory_space<vmem>>) attributes {dimension_semantics = [#tpu.dimension_semantics<parallel>], iteration_bounds = array<i64: 2>, scalar_prefetch = 0 : i64, scratch_operands = 0 : i64, tpu.core_type = #tpu.core_type<tc>, window_params = [{transform_indices = @transform_0, window_bounds = array<i64: 1>}, {transform_indices = @transform_1, window_bounds = array<i64: 4, 128, 64>}, {transform_indices = @transform_2, window_bounds = array<i64: 1, 128>}, {transform_indices = @transform_3, window_bounds = array<i64: 1, 128>}, {transform_indices = @transform_4, window_bounds = array<i64: 4, 128>}, {transform_indices = @transform_5, window_bounds = array<i64: 4, 128>}]} {
    %c0 = arith.constant 0 : index
    %c0_0 = arith.constant 0 : index
    %c0_1 = arith.constant 0 : index
    %0 = vector.load %arg2[%c0, %c0_0, %c0_1] : memref<4x128x64xbf16, #tpu.memory_space<vmem>>, vector<4x128x64xbf16>
    %1 = arith.extf %0 : vector<4x128x64xbf16> to vector<4x128x64xf32>
    %cst = arith.constant 9.99999997E-7 : f32
    %2 = vector.broadcast %cst : f32 to vector<4x128x64xf32>
    %3 = arith.maximumf %1, %2 : vector<4x128x64xf32>
    %4 = arith.mulf %3, %3 : vector<4x128x64xf32>
    %5 = arith.mulf %4, %3 : vector<4x128x64xf32>
    %cst_2 = arith.constant dense<0.000000e+00> : vector<4x128xf32>
    %6 = vector.multi_reduction <add>, %5, %cst_2 [2] : vector<4x128x64xf32> to vector<4x128xf32>
    %cst_3 = arith.constant 6.400000e+01 : f32
    %7 = vector.broadcast %cst_3 : f32 to vector<4x128xf32>
    %8 = arith.divf %6, %7 : vector<4x128xf32>
    %cst_4 = arith.constant 0.333333343 : f32
    %9 = vector.broadcast %cst_4 : f32 to vector<4x128xf32>
    %10 = math.powf %8, %9 : vector<4x128xf32>
    %c0_5 = arith.constant 0 : index
    %c0_6 = arith.constant 0 : index
    %11 = vector.load %arg3[%c0_5, %c0_6] : memref<1x128xf32, #tpu.memory_space<vmem>>, vector<1x128xf32>
    %12 = vector.broadcast %11 : vector<1x128xf32> to vector<4x128xf32>
    %13 = arith.mulf %10, %12 : vector<4x128xf32>
    %c0_7 = arith.constant 0 : index
    %c0_8 = arith.constant 0 : index
    %14 = vector.load %arg4[%c0_7, %c0_8] : memref<1x128xf32, #tpu.memory_space<vmem>>, vector<1x128xf32>
    %15 = vector.broadcast %14 : vector<1x128xf32> to vector<4x128xf32>
    %16 = arith.addf %13, %15 : vector<4x128xf32>
    %c0_9 = arith.constant 0 : index
    %c0_10 = arith.constant 0 : index
    %17 = vector.load %arg5[%c0_9, %c0_10] : memref<4x128xf32, #tpu.memory_space<vmem>>, vector<4x128xf32>
    tpu.vector_store %arg5[%c0_9, %c0_10], %16 {strides = array<i32>} : memref<4x128xf32, #tpu.memory_space<vmem>>, vector<4x128xf32>,
    %18 = arith.truncf %16 : vector<4x128xf32> to vector<4x128xbf16>
    %c0_11 = arith.constant 0 : index
    %c0_12 = arith.constant 0 : index
    %19 = vector.load %arg6[%c0_11, %c0_12] : memref<4x128xbf16, #tpu.memory_space<vmem>>, vector<4x128xbf16>
    tpu.vector_store %arg6[%c0_11, %c0_12], %18 {strides = array<i32>} : memref<4x128xbf16, #tpu.memory_space<vmem>>, vector<4x128xbf16>,
    return
  }
  func.func @transform_0(%arg0: i32) -> i32 {
    %c0_i32 = arith.constant 0 : i32
    %c0_i32_0 = arith.constant 0 : i32
    return %c0_i32 : i32
  }
  func.func @transform_1(%arg0: i32) -> (i32, i32, i32) {
    %c0_i32 = arith.constant 0 : i32
    %c0_i32_0 = arith.constant 0 : i32
    %c0_i32_1 = arith.constant 0 : i32
    return %c0_i32, %arg0, %c0_i32_0 : i32, i32, i32
  }
  func.func @transform_2(%arg0: i32) -> (i32, i32) {
    %c0_i32 = arith.constant 0 : i32
    %c0_i32_0 = arith.constant 0 : i32
    return %c0_i32, %arg0 : i32, i32
  }
  func.func @transform_3(%arg0: i32) -> (i32, i32) {
    %c0_i32 = arith.constant 0 : i32
    %c0_i32_0 = arith.constant 0 : i32
    return %c0_i32, %arg0 : i32, i32
  }
  func.func @transform_4(%arg0: i32) -> (i32, i32) {
    %c0_i32 = arith.constant 0 : i32
    %c0_i32_0 = arith.constant 0 : i32
    return %c0_i32, %arg0 : i32, i32
  }
  func.func @transform_5(%arg0: i32) -> (i32, i32) {
    %c0_i32 = arith.constant 0 : i32
    %c0_i32_0 = arith.constant 0 : i32
    return %c0_i32, %arg0 : i32, i32
  }
}

</mosaic_0001>

<llo_original>
// kernel: tpu_custom_call.1
$region0: #{tpu_custom_call.1}
  #allocation0 [shape = 'u32[]', space=smem, size = 0x4, offset = 0x4, fixed_abs, tag = 'smem constant byte address 0x4 - core index']
  #allocation1 [shape = 'u32[144,128]{1,0:T(1,128)}', space=vmem, size = 0x12000, scoped, tag = 'internal scratch']
  #allocation2 [shape = 'f32[1]{0:T(128)S(6)}', space=smem, size = 0x200, scoped, tag = 'scoped memory for tpu_custom_call.1']
  %s0 = inlined_call_operand.<no memory space> [shape: f32[1], index: 0, kind: input, shape index: {}]
  %s1 = inlined_call_operand.vmem [shape: bf16[4,256,64], index: 1, kind: input, shape index: {}]
  %s2 = inlined_call_operand.vmem [shape: f32[1,256], index: 2, kind: input, shape index: {}]
  %s3 = inlined_call_operand.vmem [shape: f32[1,256], index: 3, kind: input, shape index: {}]
  %s4 = inlined_call_operand.hbm [shape: f32[4,256], index: 4, kind: output, shape index: {0}]
  %s5 = inlined_call_operand.hbm [shape: bf16[4,256], index: 5, kind: output, shape index: {1}]
  %6 = xla_tuple %s4, %s5
  %s7 = sld [smem:[#allocation0]]
  $region98: #{tpu_custom_call.1} parent=0
    _
  %s9 = ssub.s32 1, %s7
  %s10 = scalar_select 0, %s9, %s7
  %11 = sst [smem:[#allocation2]] %s0
  $region1: #{tpu_custom_call.1} parent=0
    #allocation3 [shape = 'u8[262144]{0}', space=vmem, size = 0x40000, scoped, tag = 'input window, operand 1']
    #allocation4 [shape = 'u8[4096]{0}', space=vmem, size = 0x1000, scoped, tag = 'output window, operand 0']
    #allocation5 [shape = 's32[2]{0}', space=sflag, size = 0x8, scoped, tag = 'scoped memory for tpu_custom_call.1']
    #allocation6 [shape = 'u8[2048]{0}', space=vmem, size = 0x800, scoped, tag = 'output window, operand 1']
    #allocation7 [shape = 's32[2]{0}', space=sflag, size = 0x8, scoped, tag = 'scoped memory for tpu_custom_call.1']
    %12 = vsyncpa [#allocation5], 0
    %s13 = scalar_lea.sflag [#allocation5], 1
    %14 = vsyncpa %s13, 0
    %15 = vsyncpa [#allocation7], 0
    %s16 = scalar_lea.sflag [#allocation7], 1
    %17 = vsyncpa %s16, 0
    loop: start=0, step=1, limit=4
    $region2: #{tpu_custom_call.1} parent=1 // loop_pre_header
      _
    $region3: #{tpu_custom_call.1} parent=1 // loop_header
      %s19 = sphi 0, %s23
      %p20 = scmp.ge.s32.totalorder %s19, 4
      %s27 = sphi 0, %s27
      %s29 = sphi 0, %s27
      %s30 = sphi 0, %s29
      %s44 = sphi 0, %s30
      %s50 = sphi 0, %s52
      %s53 = sphi 0, %s50
      %s54 = sphi 0, %s53
      %s70 = sphi 0, %s54
      %s76 = sphi 0, %s78
      %s79 = sphi 0, %s76
      %s80 = sphi 0, %s79
      %s96 = sphi 0, %s80
      %s102 = sphi 0, %s104
      %s105 = sphi 0, %s102
      %s106 = sphi 0, %s105
      %s122 = sphi 0, %s106
      %s128 = sphi 0, %s130
      %s131 = sphi 0, %s128
      %s132 = sphi 0, %s131
      %s148 = sphi 0, %s132
      %s154 = sphi 0, %s156
      %s157 = sphi 0, %s154
      %s158 = sphi 0, %s157
      %s174 = sphi 0, %s158
    $region4: #{tpu_custom_call.1} parent=1 // loop_header_branch
      %22 = sbr.rel (%p20) target = $region8
    $region5: #{tpu_custom_call.1} parent=1 // loop_body
      %s24 = ssub.s32 %s19, 1
      %s25 = ssub.s32 %s19, 2
      %s26 = sadd.s32 %s19, 1
      %s28 = sadd.s32 %s27, 1
      %p31 = scmp.eq.s32.totalorder %s19, 1
      %p32 = scmp.ne.s32.totalorder %s27, %s29
      %p33 = scmp.eq.s32.totalorder %s19, 0
      %p34 = por %p32, %p33
      %p35 = scmp.ne.s32.totalorder %s27, %s29
      %p36 = scmp.eq.s32.totalorder %s24, 1
      %p37 = por %p35, %p36
      %p38 = scmp.ne.s32.totalorder %s29, %s30
      %p39 = scmp.eq.s32.totalorder %s24, 0
      %p40 = por %p38, %p39
      %p41 = scmp.ne.s32.totalorder %s29, %s30
      %p42 = scmp.eq.s32.totalorder %s25, 1
      %p43 = por %p41, %p42
      %p45 = scmp.ne.s32.totalorder %s30, %s44
      %p46 = scmp.eq.s32.totalorder %s25, 0
      %p47 = por %p45, %p46
      %s48 = ssub.s32 %s19, %s26
      %p49 = scmp.eq.s32.totalorder %s48, 0
      %s51 = sadd.s32 %s50, 1
      %s52 = scalar_select %p49, %s50, %s51
      %p55 = pneg %p49
      %p56 = scmp.eq.s32.totalorder %s19, 1
      %p57 = por %p55, %p56
      %p58 = scmp.ne.s32.totalorder %s50, %s53
      %p59 = scmp.eq.s32.totalorder %s19, 0
      %p60 = por %p58, %p59
      %p61 = scmp.ne.s32.totalorder %s50, %s53
      %p62 = scmp.eq.s32.totalorder %s24, 1
      %p63 = por %p61, %p62
      %p64 = scmp.ne.s32.totalorder %s53, %s54
      %p65 = scmp.eq.s32.totalorder %s24, 0
      %p66 = por %p64, %p65
      %p67 = scmp.ne.s32.totalorder %s53, %s54
      %p68 = scmp.eq.s32.totalorder %s25, 1
      %p69 = por %p67, %p68
      %p71 = scmp.ne.s32.totalorder %s54, %s70
      %p72 = scmp.eq.s32.totalorder %s25, 0
      %p73 = por %p71, %p72
      %s74 = ssub.s32 %s19, %s26
      %p75 = scmp.eq.s32.totalorder %s74, 0
      %s77 = sadd.s32 %s76, 1
      %s78 = scalar_select %p75, %s76, %s77
      %p81 = pneg %p75
      %p82 = scmp.eq.s32.totalorder %s19, 1
      %p83 = por %p81, %p82
      %p84 = scmp.ne.s32.totalorder %s76, %s79
      %p85 = scmp.eq.s32.totalorder %s19, 0
      %p86 = por %p84, %p85
      %p87 = scmp.ne.s32.totalorder %s76, %s79
      %p88 = scmp.eq.s32.totalorder %s24, 1
      %p89 = por %p87, %p88
      %p90 = scmp.ne.s32.totalorder %s79, %s80
      %p91 = scmp.eq.s32.totalorder %s24, 0
      %p92 = por %p90, %p91
      %p93 = scmp.ne.s32.totalorder %s79, %s80
      %p94 = scmp.eq.s32.totalorder %s25, 1
      %p95 = por %p93, %p94
      %p97 = scmp.ne.s32.totalorder %s80, %s96
      %p98 = scmp.eq.s32.totalorder %s25, 0
      %p99 = por %p97, %p98
      %s100 = ssub.s32 %s19, %s26
      %p101 = scmp.eq.s32.totalorder %s100, 0
      %s103 = sadd.s32 %s102, 1
      %s104 = scalar_select %p101, %s102, %s103
      %p107 = pneg %p101
      %p108 = scmp.eq.s32.totalorder %s19, 1
      %p109 = por %p107, %p108
      %p110 = scmp.ne.s32.totalorder %s102, %s105
      %p111 = scmp.eq.s32.totalorder %s19, 0
      %p112 = por %p110, %p111
      %p113 = scmp.ne.s32.totalorder %s102, %s105
      %p114 = scmp.eq.s32.totalorder %s24, 1
      %p115 = por %p113, %p114
      %p116 = scmp.ne.s32.totalorder %s105, %s106
      %p117 = scmp.eq.s32.totalorder %s24, 0
      %p118 = por %p116, %p117
      %p119 = scmp.ne.s32.totalorder %s105, %s106
      %p120 = scmp.eq.s32.totalorder %s25, 1
      %p121 = por %p119, %p120
      %p123 = scmp.ne.s32.totalorder %s106, %s122
      %p124 = scmp.eq.s32.totalorder %s25, 0
      %p125 = por %p123, %p124
      %s126 = ssub.s32 %s19, %s26
      %p127 = scmp.eq.s32.totalorder %s126, 0
      %s129 = sadd.s32 %s128, 1
      %s130 = scalar_select %p127, %s128, %s129
      %p133 = pneg %p127
      %p134 = scmp.eq.s32.totalorder %s19, 1
      %p135 = por %p133, %p134
      %p136 = scmp.ne.s32.totalorder %s128, %s131
      %p137 = scmp.eq.s32.totalorder %s19, 0
      %p138 = por %p136, %p137
      %p139 = scmp.ne.s32.totalorder %s128, %s131
      %p140 = scmp.eq.s32.totalorder %s24, 1
      %p141 = por %p139, %p140
      %p142 = scmp.ne.s32.totalorder %s131, %s132
      %p143 = scmp.eq.s32.totalorder %s24, 0
      %p144 = por %p142, %p143
      %p145 = scmp.ne.s32.totalorder %s131, %s132
      %p146 = scmp.eq.s32.totalorder %s25, 1
      %p147 = por %p145, %p146
      %p149 = scmp.ne.s32.totalorder %s132, %s148
      %p150 = scmp.eq.s32.totalorder %s25, 0
      %p151 = por %p149, %p150
      %s152 = ssub.s32 %s19, %s26
      %p153 = scmp.eq.s32.totalorder %s152, 0
      %s155 = sadd.s32 %s154, 1
      %s156 = scalar_select %p153, %s154, %s155
      %p159 = pneg %p153
      %p160 = scmp.eq.s32.totalorder %s19, 1
      %p161 = por %p159, %p160
      %p162 = scmp.ne.s32.totalorder %s154, %s157
      %p163 = scmp.eq.s32.totalorder %s19, 0
      %p164 = por %p162, %p163
      %p165 = scmp.ne.s32.totalorder %s154, %s157
      %p166 = scmp.eq.s32.totalorder %s24, 1
      %p167 = por %p165, %p166
      %p168 = scmp.ne.s32.totalorder %s157, %s158
      %p169 = scmp.eq.s32.totalorder %s24, 0
      %p170 = por %p168, %p169
      %p171 = scmp.ne.s32.totalorder %s157, %s158
      %p172 = scmp.eq.s32.totalorder %s25, 1
      %p173 = por %p171, %p172
      %p175 = scmp.ne.s32.totalorder %s158, %s174
      %p176 = scmp.eq.s32.totalorder %s25, 0
      %p177 = por %p175, %p176
      %p178 = scmp.le.s32.totalorder 1, %s19
      %p179 = scmp.lt.s32.totalorder %s19, 3
      %p180 = pnand %p178, %p179
      %p181 = pneg %p180
      // Predicated region
      $region9: #{tpu_custom_call.1} parent=5 // pred_check
        _
      $region10: #{tpu_custom_call.1} parent=5 // pred_check_branch
        %183 = sbr.rel (%p180) target = $region12
      $region11: #{tpu_custom_call.1} parent=5 // pred_region
        %s184 = ssub.s32 %s19, 1
        // Predicated region
        $region13: #{tpu_custom_call.1} parent=11 // pred_check
          %p185 = pneg %p40
        $region14: #{tpu_custom_call.1} parent=11 // pred_check_branch
          %187 = sbr.rel (%p185) target = $region16
        $region15: #{tpu_custom_call.1} parent=11 // pred_region
          _
        $region16: #{tpu_custom_call.1} parent=11 // pred_fallthru
          _
      $region12: #{tpu_custom_call.1} parent=5 // pred_fallthru
        _
      %p188 = scmp.lt.s32.totalorder %s19, 2
      // Predicated region
      $region17: #{tpu_custom_call.1} parent=5 // pred_check
        %p189 = pneg %p188
      $region18: #{tpu_custom_call.1} parent=5 // pred_check_branch
        %191 = sbr.rel (%p189) target = $region20
      $region19: #{tpu_custom_call.1} parent=5 // pred_region
        // Predicated region
        $region21: #{tpu_custom_call.1} parent=19 // pred_check
          %p192 = pneg %p60
        $region22: #{tpu_custom_call.1} parent=19 // pred_check_branch
          %194 = sbr.rel (%p192) target = $region24
        $region23: #{tpu_custom_call.1} parent=19 // pred_region
          %s195 = sand.u32 %s50, 1
          %s196 = sand.u32 %s50, 1
          %s197 = smul.addr %s196, 256
          %s198 = scalar_lea.vmem [#allocation3], %s197
          %s199 = smul.u32 16, %s19
          %s200 = smul.addr %s199, 4
          %s201 = scalar_lea.vmem %s1, %s200
          // Predicated region
          $region25: #{tpu_custom_call.1} parent=23 // pred_check
            _
          $region26: #{tpu_custom_call.1} parent=23 // pred_check_branch
            %203 = sbr.rel (0) target = $region28
          $region27: #{tpu_custom_call.1} parent=23 // pred_region
            // Predicated region
            $region29: #{tpu_custom_call.1} parent=27 // pred_check
              _
            $region30: #{tpu_custom_call.1} parent=27 // pred_check_branch
              %205 = sbr.rel target = $region32
            $region31: #{tpu_custom_call.1} parent=27 // pred_region
              // Predicated region
              $region44: #{tpu_custom_call.1} parent=31 // pred_check
                _
              $region45: #{tpu_custom_call.1} parent=31 // pred_check_branch
                %346 = sbr.rel (0) target = $region47
              $region46: #{tpu_custom_call.1} parent=31 // pred_region
                loop: start=0, step=1, limit=1
                $region48: #{tpu_custom_call.1} parent=46 // loop_pre_header
                  _
                $region49: #{tpu_custom_call.1} parent=46 // loop_header
                  %s348 = sphi 0, %s352
                  %p349 = scmp.ge.s32.totalorder %s348, 1
                  %s353 = sphi %s201, %s201
                  %s354 = sphi %s198, %s198
                $region50: #{tpu_custom_call.1} parent=46 // loop_header_branch
                  %351 = sbr.rel (%p349) target = $region54
                $region51: #{tpu_custom_call.1} parent=46 // loop_body
                  _
                $region52: #{tpu_custom_call.1} parent=46 // loop_footer
                  %s352 = sadd.s32 1, %s348
                $region53: #{tpu_custom_call.1} parent=46 // loop_footer_branch
                  %347 = sbr.rel target = $region49
                $region54: #{tpu_custom_call.1} parent=46 // loop_exit
                  _
                loop: start=0, step=1, limit=1
                $region55: #{tpu_custom_call.1} parent=46 // loop_pre_header
                  _
                $region56: #{tpu_custom_call.1} parent=46 // loop_header
                  %s357 = sphi 0, %s361
                  %p358 = scmp.ge.s32.totalorder %s357, 1
                  %s362 = sphi %s201, %s201
                  %s363 = sphi %s198, %s198
                $region57: #{tpu_custom_call.1} parent=46 // loop_header_branch
                  %360 = sbr.rel (%p358) target = $region61
                $region58: #{tpu_custom_call.1} parent=46 // loop_body
                  %v364 = vld [vmem:[%s362] sm:$0xf]
                  %365 = vst [vmem:[%s363] sm:$0xf] %v364
                  %v366 = vld [vmem:[%s362 + $0x4] sm:$0xf]
                  %367 = vst [vmem:[%s363 + $0x4] sm:$0xf] %v366
                  %v368 = vld [vmem:[%s362 + $0x8] sm:$0xf]
                  %369 = vst [vmem:[%s363 + $0x8] sm:$0xf] %v368
                  %v370 = vld [vmem:[%s362 + $0xc] sm:$0xf]
                  %371 = vst [vmem:[%s363 + $0xc] sm:$0xf] %v370
                  %v372 = vld [vmem:[%s362 + $0x10] sm:$0xf]
                  %373 = vst [vmem:[%s363 + $0x10] sm:$0xf] %v372
                  %v374 = vld [vmem:[%s362 + $0x14] sm:$0xf]
                  %375 = vst [vmem:[%s363 + $0x14] sm:$0xf] %v374
                  %v376 = vld [vmem:[%s362 + $0x18] sm:$0xf]
                  %377 = vst [vmem:[%s363 + $0x18] sm:$0xf] %v376
                  %v378 = vld [vmem:[%s362 + $0x1c] sm:$0xf]
                  %379 = vst [vmem:[%s363 + $0x1c] sm:$0xf] %v378
                  %v380 = vld [vmem:[%s362 + $0x20] sm:$0xf]
                  %381 = vst [vmem:[%s363 + $0x20] sm:$0xf] %v380
                  %v382 = vld [vmem:[%s362 + $0x24] sm:$0xf]
                  %383 = vst [vmem:[%s363 + $0x24] sm:$0xf] %v382
                  %v384 = vld [vmem:[%s362 + $0x28] sm:$0xf]
                  %385 = vst [vmem:[%s363 + $0x28] sm:$0xf] %v384
                  %v386 = vld [vmem:[%s362 + $0x2c] sm:$0xf]
                  %387 = vst [vmem:[%s363 + $0x2c] sm:$0xf] %v386
                  %v388 = vld [vmem:[%s362 + $0x30] sm:$0xf]
                  %389 = vst [vmem:[%s363 + $0x30] sm:$0xf] %v388
                  %v390 = vld [vmem:[%s362 + $0x34] sm:$0xf]
                  %391 = vst [vmem:[%s363 + $0x34] sm:$0xf] %v390
                  %v392 = vld [vmem:[%s362 + $0x38] sm:$0xf]
                  %393 = vst [vmem:[%s363 + $0x38] sm:$0xf] %v392
                  %v394 = vld [vmem:[%s362 + $0x3c] sm:$0xf]
                  %395 = vst [vmem:[%s363 + $0x3c] sm:$0xf] %v394
                  %v396 = vld [vmem:[%s362 + $0x80] sm:$0xf]
                  %397 = vst [vmem:[%s363 + $0x40] sm:$0xf] %v396
                  %v398 = vld [vmem:[%s362 + $0x84] sm:$0xf]
                  %399 = vst [vmem:[%s363 + $0x44] sm:$0xf] %v398
                  %v400 = vld [vmem:[%s362 + $0x88] sm:$0xf]
                  %401 = vst [vmem:[%s363 + $0x48] sm:$0xf] %v400
                  %v402 = vld [vmem:[%s362 + $0x8c] sm:$0xf]
                  %403 = vst [vmem:[%s363 + $0x4c] sm:$0xf] %v402
                  %v404 = vld [vmem:[%s362 + $0x90] sm:$0xf]
                  %405 = vst [vmem:[%s363 + $0x50] sm:$0xf] %v404
                  %v406 = vld [vmem:[%s362 + $0x94] sm:$0xf]
                  %407 = vst [vmem:[%s363 + $0x54] sm:$0xf] %v406
                  %v408 = vld [vmem:[%s362 + $0x98] sm:$0xf]
                  %409 = vst [vmem:[%s363 + $0x58] sm:$0xf] %v408
                  %v410 = vld [vmem:[%s362 + $0x9c] sm:$0xf]
                  %411 = vst [vmem:[%s363 + $0x5c] sm:$0xf] %v410
                  %v412 = vld [vmem:[%s362 + $0xa0] sm:$0xf]
                  %413 = vst [vmem:[%s363 + $0x60] sm:$0xf] %v412
                  %v414 = vld [vmem:[%s362 + $0xa4] sm:$0xf]
                  %415 = vst [vmem:[%s363 + $0x64] sm:$0xf] %v414
                  %v416 = vld [vmem:[%s362 + $0xa8] sm:$0xf]
                  %417 = vst [vmem:[%s363 + $0x68] sm:$0xf] %v416
                  %v418 = vld [vmem:[%s362 + $0xac] sm:$0xf]
                  %419 = vst [vmem:[%s363 + $0x6c] sm:$0xf] %v418
                  %v420 = vld [vmem:[%s362 + $0xb0] sm:$0xf]
                  %421 = vst [vmem:[%s363 + $0x70] sm:$0xf] %v420
                  %v422 = vld [vmem:[%s362 + $0xb4] sm:$0xf]
                  %423 = vst [vmem:[%s363 + $0x74] sm:$0xf] %v422
                  %v424 = vld [vmem:[%s362 + $0xb8] sm:$0xf]
                  %425 = vst [vmem:[%s363 + $0x78] sm:$0xf] %v424
                  %v426 = vld [vmem:[%s362 + $0xbc] sm:$0xf]
                  %427 = vst [vmem:[%s363 + $0x7c] sm:$0xf] %v426
                  %v428 = vld [vmem:[%s362 + $0x100] sm:$0xf]
                  %429 = vst [vmem:[%s363 + $0x80] sm:$0xf] %v428
                  %v430 = vld [vmem:[%s362 + $0x104] sm:$0xf]
                  %431 = vst [vmem:[%s363 + $0x84] sm:$0xf] %v430
                  %v432 = vld [vmem:[%s362 + $0x108] sm:$0xf]
                  %433 = vst [vmem:[%s363 + $0x88] sm:$0xf] %v432
                  %v434 = vld [vmem:[%s362 + $0x10c] sm:$0xf]
                  %435 = vst [vmem:[%s363 + $0x8c] sm:$0xf] %v434
                  %v436 = vld [vmem:[%s362 + $0x110] sm:$0xf]
                  %437 = vst [vmem:[%s363 + $0x90] sm:$0xf] %v436
                  %v438 = vld [vmem:[%s362 + $0x114] sm:$0xf]
                  %439 = vst [vmem:[%s363 + $0x94] sm:$0xf] %v438
                  %v440 = vld [vmem:[%s362 + $0x118] sm:$0xf]
                  %441 = vst [vmem:[%s363 + $0x98] sm:$0xf] %v440
                  %v442 = vld [vmem:[%s362 + $0x11c] sm:$0xf]
                  %443 = vst [vmem:[%s363 + $0x9c] sm:$0xf] %v442
                  %v444 = vld [vmem:[%s362 + $0x120] sm:$0xf]
                  %445 = vst [vmem:[%s363 + $0xa0] sm:$0xf] %v444
                  %v446 = vld [vmem:[%s362 + $0x124] sm:$0xf]
                  %447 = vst [vmem:[%s363 + $0xa4] sm:$0xf] %v446
                  %v448 = vld [vmem:[%s362 + $0x128] sm:$0xf]
                  %449 = vst [vmem:[%s363 + $0xa8] sm:$0xf] %v448
                  %v450 = vld [vmem:[%s362 + $0x12c] sm:$0xf]
                  %451 = vst [vmem:[%s363 + $0xac] sm:$0xf] %v450
                  %v452 = vld [vmem:[%s362 + $0x130] sm:$0xf]
                  %453 = vst [vmem:[%s363 + $0xb0] sm:$0xf] %v452
                  %v454 = vld [vmem:[%s362 + $0x134] sm:$0xf]
                  %455 = vst [vmem:[%s363 + $0xb4] sm:$0xf] %v454
                  %v456 = vld [vmem:[%s362 + $0x138] sm:$0xf]
                  %457 = vst [vmem:[%s363 + $0xb8] sm:$0xf] %v456
                  %v458 = vld [vmem:[%s362 + $0x13c] sm:$0xf]
                  %459 = vst [vmem:[%s363 + $0xbc] sm:$0xf] %v458
                  %v460 = vld [vmem:[%s362 + $0x180] sm:$0xf]
                  %461 = vst [vmem:[%s363 + $0xc0] sm:$0xf] %v460
                  %v462 = vld [vmem:[%s362 + $0x184] sm:$0xf]
                  %463 = vst [vmem:[%s363 + $0xc4] sm:$0xf] %v462
                  %v464 = vld [vmem:[%s362 + $0x188] sm:$0xf]
                  %465 = vst [vmem:[%s363 + $0xc8] sm:$0xf] %v464
                  %v466 = vld [vmem:[%s362 + $0x18c] sm:$0xf]
                  %467 = vst [vmem:[%s363 + $0xcc] sm:$0xf] %v466
                  %v468 = vld [vmem:[%s362 + $0x190] sm:$0xf]
                  %469 = vst [vmem:[%s363 + $0xd0] sm:$0xf] %v468
                  %v470 = vld [vmem:[%s362 + $0x194] sm:$0xf]
                  %471 = vst [vmem:[%s363 + $0xd4] sm:$0xf] %v470
                  %v472 = vld [vmem:[%s362 + $0x198] sm:$0xf]
                  %473 = vst [vmem:[%s363 + $0xd8] sm:$0xf] %v472
                  %v474 = vld [vmem:[%s362 + $0x19c] sm:$0xf]
                  %475 = vst [vmem:[%s363 + $0xdc] sm:$0xf] %v474
                  %v476 = vld [vmem:[%s362 + $0x1a0] sm:$0xf]
                  %477 = vst [vmem:[%s363 + $0xe0] sm:$0xf] %v476
                  %v478 = vld [vmem:[%s362 + $0x1a4] sm:$0xf]
                  %479 = vst [vmem:[%s363 + $0xe4] sm:$0xf] %v478
                  %v480 = vld [vmem:[%s362 + $0x1a8] sm:$0xf]
                  %481 = vst [vmem:[%s363 + $0xe8] sm:$0xf] %v480
                  %v482 = vld [vmem:[%s362 + $0x1ac] sm:$0xf]
                  %483 = vst [vmem:[%s363 + $0xec] sm:$0xf] %v482
                  %v484 = vld [vmem:[%s362 + $0x1b0] sm:$0xf]
                  %485 = vst [vmem:[%s363 + $0xf0] sm:$0xf] %v484
                  %v486 = vld [vmem:[%s362 + $0x1b4] sm:$0xf]
                  %487 = vst [vmem:[%s363 + $0xf4] sm:$0xf] %v486
                  %v488 = vld [vmem:[%s362 + $0x1b8] sm:$0xf]
                  %489 = vst [vmem:[%s363 + $0xf8] sm:$0xf] %v488
                  %v490 = vld [vmem:[%s362 + $0x1bc] sm:$0xf]
                  %491 = vst [vmem:[%s363 + $0xfc] sm:$0xf] %v490
                $region59: #{tpu_custom_call.1} parent=46 // loop_footer
                  %s361 = sadd.s32 1, %s357
                $region60: #{tpu_custom_call.1} parent=46 // loop_footer_branch
                  %356 = sbr.rel target = $region56
                $region61: #{tpu_custom_call.1} parent=46 // loop_exit
                  _
              $region47: #{tpu_custom_call.1} parent=31 // pred_fallthru
                _
            $region32: #{tpu_custom_call.1} parent=27 // pred_fallthru
              _
            // Predicated region
            $region33: #{tpu_custom_call.1} parent=27 // pred_check
              _
            $region34: #{tpu_custom_call.1} parent=27 // pred_check_branch
              %207 = sbr.rel (0) target = $region36
            $region35: #{tpu_custom_call.1} parent=27 // pred_region
              loop: start=0, step=1, limit=1
              $region37: #{tpu_custom_call.1} parent=35 // loop_pre_header
                _
              $region38: #{tpu_custom_call.1} parent=35 // loop_header
                %s210 = sphi 0, %s214
                %p211 = scmp.ge.s32.totalorder %s210, 1
                %s215 = sphi %s201, %s201
                %s216 = sphi %s198, %s198
              $region39: #{tpu_custom_call.1} parent=35 // loop_header_branch
                %213 = sbr.rel (%p211) target = $region43
              $region40: #{tpu_custom_call.1} parent=35 // loop_body
                %v217 = vld [vmem:[%s215] sm:$0xf]
                %218 = vst [vmem:[%s216] sm:$0xf] %v217
                %v219 = vld [vmem:[%s215 + $0x4] sm:$0xf]
                %220 = vst [vmem:[%s216 + $0x4] sm:$0xf] %v219
                %v221 = vld [vmem:[%s215 + $0x8] sm:$0xf]
                %222 = vst [vmem:[%s216 + $0x8] sm:$0xf] %v221
                %v223 = vld [vmem:[%s215 + $0xc] sm:$0xf]
                %224 = vst [vmem:[%s216 + $0xc] sm:$0xf] %v223
                %v225 = vld [vmem:[%s215 + $0x10] sm:$0xf]
                %226 = vst [vmem:[%s216 + $0x10] sm:$0xf] %v225
                %v227 = vld [vmem:[%s215 + $0x14] sm:$0xf]
                %228 = vst [vmem:[%s216 + $0x14] sm:$0xf] %v227
                %v229 = vld [vmem:[%s215 + $0x18] sm:$0xf]
                %230 = vst [vmem:[%s216 + $0x18] sm:$0xf] %v229
                %v231 = vld [vmem:[%s215 + $0x1c] sm:$0xf]
                %232 = vst [vmem:[%s216 + $0x1c] sm:$0xf] %v231
                %v233 = vld [vmem:[%s215 + $0x20] sm:$0xf]
                %234 = vst [vmem:[%s216 + $0x20] sm:$0xf] %v233
                %v235 = vld [vmem:[%s215 + $0x24] sm:$0xf]
                %236 = vst [vmem:[%s216 + $0x24] sm:$0xf] %v235
                %v237 = vld [vmem:[%s215 + $0x28] sm:$0xf]
                %238 = vst [vmem:[%s216 + $0x28] sm:$0xf] %v237
                %v239 = vld [vmem:[%s215 + $0x2c] sm:$0xf]
                %240 = vst [vmem:[%s216 + $0x2c] sm:$0xf] %v239
                %v241 = vld [vmem:[%s215 + $0x30] sm:$0xf]
                %242 = vst [vmem:[%s216 + $0x30] sm:$0xf] %v241
                %v243 = vld [vmem:[%s215 + $0x34] sm:$0xf]
                %244 = vst [vmem:[%s216 + $0x34] sm:$0xf] %v243
                %v245 = vld [vmem:[%s215 + $0x38] sm:$0xf]
                %246 = vst [vmem:[%s216 + $0x38] sm:$0xf] %v245
                %v247 = vld [vmem:[%s215 + $0x3c] sm:$0xf]
                %248 = vst [vmem:[%s216 + $0x3c] sm:$0xf] %v247
                %v249 = vld [vmem:[%s215 + $0x80] sm:$0xf]
                %250 = vst [vmem:[%s216 + $0x40] sm:$0xf] %v249
                %v251 = vld [vmem:[%s215 + $0x84] sm:$0xf]
                %252 = vst [vmem:[%s216 + $0x44] sm:$0xf] %v251
                %v253 = vld [vmem:[%s215 + $0x88] sm:$0xf]
                %254 = vst [vmem:[%s216 + $0x48] sm:$0xf] %v253
                %v255 = vld [vmem:[%s215 + $0x8c] sm:$0xf]
                %256 = vst [vmem:[%s216 + $0x4c] sm:$0xf] %v255
                %v257 = vld [vmem:[%s215 + $0x90] sm:$0xf]
                %258 = vst [vmem:[%s216 + $0x50] sm:$0xf] %v257
                %v259 = vld [vmem:[%s215 + $0x94] sm:$0xf]
                %260 = vst [vmem:[%s216 + $0x54] sm:$0xf] %v259
                %v261 = vld [vmem:[%s215 + $0x98] sm:$0xf]
                %262 = vst [vmem:[%s216 + $0x58] sm:$0xf] %v261
                %v263 = vld [vmem:[%s215 + $0x9c] sm:$0xf]
                %264 = vst [vmem:[%s216 + $0x5c] sm:$0xf] %v263
                %v265 = vld [vmem:[%s215 + $0xa0] sm:$0xf]
                %266 = vst [vmem:[%s216 + $0x60] sm:$0xf] %v265
                %v267 = vld [vmem:[%s215 + $0xa4] sm:$0xf]
                %268 = vst [vmem:[%s216 + $0x64] sm:$0xf] %v267
                %v269 = vld [vmem:[%s215 + $0xa8] sm:$0xf]
                %270 = vst [vmem:[%s216 + $0x68] sm:$0xf] %v269
                %v271 = vld [vmem:[%s215 + $0xac] sm:$0xf]
                %272 = vst [vmem:[%s216 + $0x6c] sm:$0xf] %v271
                %v273 = vld [vmem:[%s215 + $0xb0] sm:$0xf]
                %274 = vst [vmem:[%s216 + $0x70] sm:$0xf] %v273
                %v275 = vld [vmem:[%s215 + $0xb4] sm:$0xf]
                %276 = vst [vmem:[%s216 + $0x74] sm:$0xf] %v275
                %v277 = vld [vmem:[%s215 + $0xb8] sm:$0xf]
                %278 = vst [vmem:[%s216 + $0x78] sm:$0xf] %v277
                %v279 = vld [vmem:[%s215 + $0xbc] sm:$0xf]
                %280 = vst [vmem:[%s216 + $0x7c] sm:$0xf] %v279
                %v281 = vld [vmem:[%s215 + $0x100] sm:$0xf]
                %282 = vst [vmem:[%s216 + $0x80] sm:$0xf] %v281
                %v283 = vld [vmem:[%s215 + $0x104] sm:$0xf]
                %284 = vst [vmem:[%s216 + $0x84] sm:$0xf] %v283
                %v285 = vld [vmem:[%s215 + $0x108] sm:$0xf]
                %286 = vst [vmem:[%s216 + $0x88] sm:$0xf] %v285
                %v287 = vld [vmem:[%s215 + $0x10c] sm:$0xf]
                %288 = vst [vmem:[%s216 + $0x8c] sm:$0xf] %v287
                %v289 = vld [vmem:[%s215 + $0x110] sm:$0xf]
                %290 = vst [vmem:[%s216 + $0x90] sm:$0xf] %v289
                %v291 = vld [vmem:[%s215 + $0x114] sm:$0xf]
                %292 = vst [vmem:[%s216 + $0x94] sm:$0xf] %v291
                %v293 = vld [vmem:[%s215 + $0x118] sm:$0xf]
                %294 = vst [vmem:[%s216 + $0x98] sm:$0xf] %v293
                %v295 = vld [vmem:[%s215 + $0x11c] sm:$0xf]
                %296 = vst [vmem:[%s216 + $0x9c] sm:$0xf] %v295
                %v297 = vld [vmem:[%s215 + $0x120] sm:$0xf]
                %298 = vst [vmem:[%s216 + $0xa0] sm:$0xf] %v297
                %v299 = vld [vmem:[%s215 + $0x124] sm:$0xf]
                %300 = vst [vmem:[%s216 + $0xa4] sm:$0xf] %v299
                %v301 = vld [vmem:[%s215 + $0x128] sm:$0xf]
                %302 = vst [vmem:[%s216 + $0xa8] sm:$0xf] %v301
                %v303 = vld [vmem:[%s215 + $0x12c] sm:$0xf]
                %304 = vst [vmem:[%s216 + $0xac] sm:$0xf] %v303
                %v305 = vld [vmem:[%s215 + $0x130] sm:$0xf]
                %306 = vst [vmem:[%s216 + $0xb0] sm:$0xf] %v305
                %v307 = vld [vmem:[%s215 + $0x134] sm:$0xf]
                %308 = vst [vmem:[%s216 + $0xb4] sm:$0xf] %v307
                %v309 = vld [vmem:[%s215 + $0x138] sm:$0xf]
                %310 = vst [vmem:[%s216 + $0xb8] sm:$0xf] %v309
                %v311 = vld [vmem:[%s215 + $0x13c] sm:$0xf]
                %312 = vst [vmem:[%s216 + $0xbc] sm:$0xf] %v311
                %v313 = vld [vmem:[%s215 + $0x180] sm:$0xf]
                %314 = vst [vmem:[%s216 + $0xc0] sm:$0xf] %v313
                %v315 = vld [vmem:[%s215 + $0x184] sm:$0xf]
                %316 = vst [vmem:[%s216 + $0xc4] sm:$0xf] %v315
                %v317 = vld [vmem:[%s215 + $0x188] sm:$0xf]
                %318 = vst [vmem:[%s216 + $0xc8] sm:$0xf] %v317
                %v319 = vld [vmem:[%s215 + $0x18c] sm:$0xf]
                %320 = vst [vmem:[%s216 + $0xcc] sm:$0xf] %v319
                %v321 = vld [vmem:[%s215 + $0x190] sm:$0xf]
                %322 = vst [vmem:[%s216 + $0xd0] sm:$0xf] %v321
                %v323 = vld [vmem:[%s215 + $0x194] sm:$0xf]
                %324 = vst [vmem:[%s216 + $0xd4] sm:$0xf] %v323
                %v325 = vld [vmem:[%s215 + $0x198] sm:$0xf]
                %326 = vst [vmem:[%s216 + $0xd8] sm:$0xf] %v325
                %v327 = vld [vmem:[%s215 + $0x19c] sm:$0xf]
                %328 = vst [vmem:[%s216 + $0xdc] sm:$0xf] %v327
                %v329 = vld [vmem:[%s215 + $0x1a0] sm:$0xf]
                %330 = vst [vmem:[%s216 + $0xe0] sm:$0xf] %v329
                %v331 = vld [vmem:[%s215 + $0x1a4] sm:$0xf]
                %332 = vst [vmem:[%s216 + $0xe4] sm:$0xf] %v331
                %v333 = vld [vmem:[%s215 + $0x1a8] sm:$0xf]
                %334 = vst [vmem:[%s216 + $0xe8] sm:$0xf] %v333
                %v335 = vld [vmem:[%s215 + $0x1ac] sm:$0xf]
                %336 = vst [vmem:[%s216 + $0xec] sm:$0xf] %v335
                %v337 = vld [vmem:[%s215 + $0x1b0] sm:$0xf]
                %338 = vst [vmem:[%s216 + $0xf0] sm:$0xf] %v337
                %v339 = vld [vmem:[%s215 + $0x1b4] sm:$0xf]
                %340 = vst [vmem:[%s216 + $0xf4] sm:$0xf] %v339
                %v341 = vld [vmem:[%s215 + $0x1b8] sm:$0xf]
                %342 = vst [vmem:[%s216 + $0xf8] sm:$0xf] %v341
                %v343 = vld [vmem:[%s215 + $0x1bc] sm:$0xf]
                %344 = vst [vmem:[%s216 + $0xfc] sm:$0xf] %v343
              $region41: #{tpu_custom_call.1} parent=35 // loop_footer
                %s214 = sadd.s32 1, %s210
              $region42: #{tpu_custom_call.1} parent=35 // loop_footer_branch
                %209 = sbr.rel target = $region38
              $region43: #{tpu_custom_call.1} parent=35 // loop_exit
                _
            $region36: #{tpu_custom_call.1} parent=27 // pred_fallthru
              _
          $region28: #{tpu_custom_call.1} parent=23 // pred_fallthru
            _
          %492 = vnop
        $region24: #{tpu_custom_call.1} parent=19 // pred_fallthru
          _
        // Predicated region
        $region62: #{tpu_custom_call.1} parent=19 // pred_check
          %p493 = pneg %p86
        $region63: #{tpu_custom_call.1} parent=19 // pred_check_branch
          %495 = sbr.rel (%p493) target = $region65
        $region64: #{tpu_custom_call.1} parent=19 // pred_region
          %p496 = scmp.lt.s32.totalorder %s19, 1
          %s497 = scalar_select %p496, %s19, 1
          %s498 = scalar_lea.vmem %s2, %s497
        $region65: #{tpu_custom_call.1} parent=19 // pred_fallthru
          _
        // Predicated region
        $region66: #{tpu_custom_call.1} parent=19 // pred_check
          %p499 = pneg %p112
        $region67: #{tpu_custom_call.1} parent=19 // pred_check_branch
          %501 = sbr.rel (%p499) target = $region69
        $region68: #{tpu_custom_call.1} parent=19 // pred_region
          %p502 = scmp.lt.s32.totalorder %s19, 1
          %s503 = scalar_select %p502, %s19, 1
          %s504 = scalar_lea.vmem %s3, %s503
        $region69: #{tpu_custom_call.1} parent=19 // pred_fallthru
          _
      $region20: #{tpu_custom_call.1} parent=5 // pred_fallthru
        _
      %p505 = scmp.le.s32.totalorder 1, %s19
      %p506 = scmp.lt.s32.totalorder %s19, 3
      %p507 = pnand %p505, %p506
      %p508 = pneg %p507
      // Predicated region
      $region70: #{tpu_custom_call.1} parent=5 // pred_check
        _
      $region71: #{tpu_custom_call.1} parent=5 // pred_check_branch
        %510 = sbr.rel (%p507) target = $region73
      $region72: #{tpu_custom_call.1} parent=5 // pred_region
        %s511 = ssub.s32 %s19, 1
        %s512 = sand.u32 %s53, 1
        %s513 = sand.u32 %s53, 1
        %s514 = smul.addr %s513, 256
        %s515 = scalar_lea.vmem [#allocation3], %s514
        // Predicated region
        $region74: #{tpu_custom_call.1} parent=72 // pred_check
          %p516 = pneg %p66
        $region75: #{tpu_custom_call.1} parent=72 // pred_check_branch
          %518 = sbr.rel (%p516) target = $region77
        $region76: #{tpu_custom_call.1} parent=72 // pred_region
          _
        $region77: #{tpu_custom_call.1} parent=72 // pred_fallthru
          _
        %p519 = pneg %p40
        %p520 = pneg %p37
        %s521 = sand.u32 %s53, 1
        %s522 = sand.u32 %s53, 1
        %s523 = smul.addr %s522, 256
        %s524 = scalar_lea.vmem [#allocation3], %s523
        %p525 = pneg %p66
        %p526 = pneg %p63
        %p527 = scmp.lt.s32.totalorder %s24, 1
        %s528 = scalar_select %p527, %s24, 1
        %s529 = scalar_lea.vmem %s2, %s528
        %p530 = pneg %p92
        %p531 = pneg %p89
        %p532 = scmp.lt.s32.totalorder %s24, 1
        %s533 = scalar_select %p532, %s24, 1
        %s534 = scalar_lea.vmem %s3, %s533
        %p535 = pneg %p118
        %p536 = pneg %p115
        %p537 = pneg %p144
        %p538 = pneg %p141
        %s539 = sand.u32 %s131, 1
        %s540 = scalar_lea.sflag [#allocation5], %s539
        %s541 = sand.u32 %s131, 1
        %s542 = smul.addr %s541, 4
        %s543 = scalar_lea.vmem [#allocation4], %s542
        %p544 = pneg %p170
        %p545 = pneg %p167
        %s546 = sand.u32 %s157, 1
        %s547 = scalar_lea.sflag [#allocation7], %s546
        %s548 = sand.u32 %s157, 1
        %s549 = smul.addr %s548, 2
        %s550 = scalar_lea.vmem [#allocation6], %s549
        %s551 = smul.u32 16, %s24
        %p552 = scmp.lt.s32.totalorder %s24, 1
        %s553 = scalar_select %p552, %s24, 1
        %s554 = scalar_lea.vmem %s2, %s553
        %p555 = scmp.lt.s32.totalorder %s24, 1
        %s556 = scalar_select %p555, %s24, 1
        %s557 = scalar_lea.vmem %s3, %s556
        %v558 = vld [vmem:[%s515] sm:$0xf]
        %v559 = vld [vmem:[%s515 + $0x4] sm:$0xf]
        %v560 = vld [vmem:[%s515 + $0x8] sm:$0xf]
        %v561 = vld [vmem:[%s515 + $0xc] sm:$0xf]
        %v562 = vld [vmem:[%s515 + $0x10] sm:$0xf]
        %v563 = vld [vmem:[%s515 + $0x14] sm:$0xf]
        %v564 = vld [vmem:[%s515 + $0x18] sm:$0xf]
        %v565 = vld [vmem:[%s515 + $0x1c] sm:$0xf]
        %v566 = vld [vmem:[%s515 + $0x20] sm:$0xf]
        %v567 = vld [vmem:[%s515 + $0x24] sm:$0xf]
        %v568 = vld [vmem:[%s515 + $0x28] sm:$0xf]
        %v569 = vld [vmem:[%s515 + $0x2c] sm:$0xf]
        %v570 = vld [vmem:[%s515 + $0x30] sm:$0xf]
        %v571 = vld [vmem:[%s515 + $0x34] sm:$0xf]
        %v572 = vld [vmem:[%s515 + $0x38] sm:$0xf]
        %v573 = vld [vmem:[%s515 + $0x3c] sm:$0xf]
        %v574 = vld [vmem:[%s515 + $0x40] sm:$0xf]
        %v575 = vld [vmem:[%s515 + $0x44] sm:$0xf]
        %v576 = vld [vmem:[%s515 + $0x48] sm:$0xf]
        %v577 = vld [vmem:[%s515 + $0x4c] sm:$0xf]
        %v578 = vld [vmem:[%s515 + $0x50] sm:$0xf]
        %v579 = vld [vmem:[%s515 + $0x54] sm:$0xf]
        %v580 = vld [vmem:[%s515 + $0x58] sm:$0xf]
        %v581 = vld [vmem:[%s515 + $0x5c] sm:$0xf]
        %v582 = vld [vmem:[%s515 + $0x60] sm:$0xf]
        %v583 = vld [vmem:[%s515 + $0x64] sm:$0xf]
        %v584 = vld [vmem:[%s515 + $0x68] sm:$0xf]
        %v585 = vld [vmem:[%s515 + $0x6c] sm:$0xf]
        %v586 = vld [vmem:[%s515 + $0x70] sm:$0xf]
        %v587 = vld [vmem:[%s515 + $0x74] sm:$0xf]
        %v588 = vld [vmem:[%s515 + $0x78] sm:$0xf]
        %v589 = vld [vmem:[%s515 + $0x7c] sm:$0xf]
        %v590 = vld [vmem:[%s515 + $0x80] sm:$0xf]
        %v591 = vld [vmem:[%s515 + $0x84] sm:$0xf]
        %v592 = vld [vmem:[%s515 + $0x88] sm:$0xf]
        %v593 = vld [vmem:[%s515 + $0x8c] sm:$0xf]
        %v594 = vld [vmem:[%s515 + $0x90] sm:$0xf]
        %v595 = vld [vmem:[%s515 + $0x94] sm:$0xf]
        %v596 = vld [vmem:[%s515 + $0x98] sm:$0xf]
        %v597 = vld [vmem:[%s515 + $0x9c] sm:$0xf]
        %v598 = vld [vmem:[%s515 + $0xa0] sm:$0xf]
        %v599 = vld [vmem:[%s515 + $0xa4] sm:$0xf]
        %v600 = vld [vmem:[%s515 + $0xa8] sm:$0xf]
        %v601 = vld [vmem:[%s515 + $0xac] sm:$0xf]
        %v602 = vld [vmem:[%s515 + $0xb0] sm:$0xf]
        %v603 = vld [vmem:[%s515 + $0xb4] sm:$0xf]
        %v604 = vld [vmem:[%s515 + $0xb8] sm:$0xf]
        %v605 = vld [vmem:[%s515 + $0xbc] sm:$0xf]
        %v606 = vld [vmem:[%s515 + $0xc0] sm:$0xf]
        %v607 = vld [vmem:[%s515 + $0xc4] sm:$0xf]
        %v608 = vld [vmem:[%s515 + $0xc8] sm:$0xf]
        %v609 = vld [vmem:[%s515 + $0xcc] sm:$0xf]
        %v610 = vld [vmem:[%s515 + $0xd0] sm:$0xf]
        %v611 = vld [vmem:[%s515 + $0xd4] sm:$0xf]
        %v612 = vld [vmem:[%s515 + $0xd8] sm:$0xf]
        %v613 = vld [vmem:[%s515 + $0xdc] sm:$0xf]
        %v614 = vld [vmem:[%s515 + $0xe0] sm:$0xf]
        %v615 = vld [vmem:[%s515 + $0xe4] sm:$0xf]
        %v616 = vld [vmem:[%s515 + $0xe8] sm:$0xf]
        %v617 = vld [vmem:[%s515 + $0xec] sm:$0xf]
        %v618 = vld [vmem:[%s515 + $0xf0] sm:$0xf]
        %v619 = vld [vmem:[%s515 + $0xf4] sm:$0xf]
        %v620 = vld [vmem:[%s515 + $0xf8] sm:$0xf]
        %v621 = vld [vmem:[%s515 + $0xfc] sm:$0xf]
        %v622 = vunpack.c.l.bf16 %v558
        %v623 = vunpack.c.l.bf16 %v559
        %v624 = vunpack.c.l.bf16 %v560
        %v625 = vunpack.c.l.bf16 %v561
        %v626 = vunpack.c.l.bf16 %v562
        %v627 = vunpack.c.l.bf16 %v563
        %v628 = vunpack.c.l.bf16 %v564
        %v629 = vunpack.c.l.bf16 %v565
        %v630 = vunpack.c.l.bf16 %v566
        %v631 = vunpack.c.l.bf16 %v567
        %v632 = vunpack.c.l.bf16 %v568
        %v633 = vunpack.c.l.bf16 %v569
        %v634 = vunpack.c.l.bf16 %v570
        %v635 = vunpack.c.l.bf16 %v571
        %v636 = vunpack.c.l.bf16 %v572
        %v637 = vunpack.c.l.bf16 %v573
        %v638 = vunpack.c.l.bf16 %v574
        %v639 = vunpack.c.l.bf16 %v575
        %v640 = vunpack.c.l.bf16 %v576
        %v641 = vunpack.c.l.bf16 %v577
        %v642 = vunpack.c.l.bf16 %v578
        %v643 = vunpack.c.l.bf16 %v579
        %v644 = vunpack.c.l.bf16 %v580
        %v645 = vunpack.c.l.bf16 %v581
        %v646 = vunpack.c.l.bf16 %v582
        %v647 = vunpack.c.l.bf16 %v583
        %v648 = vunpack.c.l.bf16 %v584
        %v649 = vunpack.c.l.bf16 %v585
        %v650 = vunpack.c.l.bf16 %v586
        %v651 = vunpack.c.l.bf16 %v587
        %v652 = vunpack.c.l.bf16 %v588
        %v653 = vunpack.c.l.bf16 %v589
        %v654 = vunpack.c.l.bf16 %v590
        %v655 = vunpack.c.l.bf16 %v591
        %v656 = vunpack.c.l.bf16 %v592
        %v657 = vunpack.c.l.bf16 %v593
        %v658 = vunpack.c.l.bf16 %v594
        %v659 = vunpack.c.l.bf16 %v595
        %v660 = vunpack.c.l.bf16 %v596
        %v661 = vunpack.c.l.bf16 %v597
        %v662 = vunpack.c.l.bf16 %v598
        %v663 = vunpack.c.l.bf16 %v599
        %v664 = vunpack.c.l.bf16 %v600
        %v665 = vunpack.c.l.bf16 %v601
        %v666 = vunpack.c.l.bf16 %v602
        %v667 = vunpack.c.l.bf16 %v603
        %v668 = vunpack.c.l.bf16 %v604
        %v669 = vunpack.c.l.bf16 %v605
        %v670 = vunpack.c.l.bf16 %v606
        %v671 = vunpack.c.l.bf16 %v607
        %v672 = vunpack.c.l.bf16 %v608
        %v673 = vunpack.c.l.bf16 %v609
        %v674 = vunpack.c.l.bf16 %v610
        %v675 = vunpack.c.l.bf16 %v611
        %v676 = vunpack.c.l.bf16 %v612
        %v677 = vunpack.c.l.bf16 %v613
        %v678 = vunpack.c.l.bf16 %v614
        %v679 = vunpack.c.l.bf16 %v615
        %v680 = vunpack.c.l.bf16 %v616
        %v681 = vunpack.c.l.bf16 %v617
        %v682 = vunpack.c.l.bf16 %v618
        %v683 = vunpack.c.l.bf16 %v619
        %v684 = vunpack.c.l.bf16 %v620
        %v685 = vunpack.c.l.bf16 %v621
        %v686 = vmax.f32 %v622, 1e-06
        %v687 = vmax.f32 %v623, 1e-06
        %v688 = vmax.f32 %v624, 1e-06
        %v689 = vmax.f32 %v625, 1e-06
        %v690 = vmax.f32 %v626, 1e-06
        %v691 = vmax.f32 %v627, 1e-06
        %v692 = vmax.f32 %v628, 1e-06
        %v693 = vmax.f32 %v629, 1e-06
        %v694 = vmax.f32 %v630, 1e-06
        %v695 = vmax.f32 %v631, 1e-06
        %v696 = vmax.f32 %v632, 1e-06
        %v697 = vmax.f32 %v633, 1e-06
        %v698 = vmax.f32 %v634, 1e-06
        %v699 = vmax.f32 %v635, 1e-06
        %v700 = vmax.f32 %v636, 1e-06
        %v701 = vmax.f32 %v637, 1e-06
        %v702 = vmax.f32 %v638, 1e-06
        %v703 = vmax.f32 %v639, 1e-06
        %v704 = vmax.f32 %v640, 1e-06
        %v705 = vmax.f32 %v641, 1e-06
        %v706 = vmax.f32 %v642, 1e-06
        %v707 = vmax.f32 %v643, 1e-06
        %v708 = vmax.f32 %v644, 1e-06
        %v709 = vmax.f32 %v645, 1e-06
        %v710 = vmax.f32 %v646, 1e-06
        %v711 = vmax.f32 %v647, 1e-06
        %v712 = vmax.f32 %v648, 1e-06
        %v713 = vmax.f32 %v649, 1e-06
        %v714 = vmax.f32 %v650, 1e-06
        %v715 = vmax.f32 %v651, 1e-06
        %v716 = vmax.f32 %v652, 1e-06
        %v717 = vmax.f32 %v653, 1e-06
        %v718 = vmax.f32 %v654, 1e-06
        %v719 = vmax.f32 %v655, 1e-06
        %v720 = vmax.f32 %v656, 1e-06
        %v721 = vmax.f32 %v657, 1e-06
        %v722 = vmax.f32 %v658, 1e-06
        %v723 = vmax.f32 %v659, 1e-06
        %v724 = vmax.f32 %v660, 1e-06
        %v725 = vmax.f32 %v661, 1e-06
        %v726 = vmax.f32 %v662, 1e-06
        %v727 = vmax.f32 %v663, 1e-06
        %v728 = vmax.f32 %v664, 1e-06
        %v729 = vmax.f32 %v665, 1e-06
        %v730 = vmax.f32 %v666, 1e-06
        %v731 = vmax.f32 %v667, 1e-06
        %v732 = vmax.f32 %v668, 1e-06
        %v733 = vmax.f32 %v669, 1e-06
        %v734 = vmax.f32 %v670, 1e-06
        %v735 = vmax.f32 %v671, 1e-06
        %v736 = vmax.f32 %v672, 1e-06
        %v737 = vmax.f32 %v673, 1e-06
        %v738 = vmax.f32 %v674, 1e-06
        %v739 = vmax.f32 %v675, 1e-06
        %v740 = vmax.f32 %v676, 1e-06
        %v741 = vmax.f32 %v677, 1e-06
        %v742 = vmax.f32 %v678, 1e-06
        %v743 = vmax.f32 %v679, 1e-06
        %v744 = vmax.f32 %v680, 1e-06
        %v745 = vmax.f32 %v681, 1e-06
        %v746 = vmax.f32 %v682, 1e-06
        %v747 = vmax.f32 %v683, 1e-06
        %v748 = vmax.f32 %v684, 1e-06
        %v749 = vmax.f32 %v685, 1e-06
        %v750 = vmul.f32 %v686, %v686
        %v751 = vmul.f32 %v687, %v687
        %v752 = vmul.f32 %v688, %v688
        %v753 = vmul.f32 %v689, %v689
        %v754 = vmul.f32 %v690, %v690
        %v755 = vmul.f32 %v691, %v691
        %v756 = vmul.f32 %v692, %v692
        %v757 = vmul.f32 %v693, %v693
        %v758 = vmul.f32 %v694, %v694
        %v759 = vmul.f32 %v695, %v695
        %v760 = vmul.f32 %v696, %v696
        %v761 = vmul.f32 %v697, %v697
        %v762 = vmul.f32 %v698, %v698
        %v763 = vmul.f32 %v699, %v699
        %v764 = vmul.f32 %v700, %v700
        %v765 = vmul.f32 %v701, %v701
        %v766 = vmul.f32 %v702, %v702
        %v767 = vmul.f32 %v703, %v703
        %v768 = vmul.f32 %v704, %v704
        %v769 = vmul.f32 %v705, %v705
        %v770 = vmul.f32 %v706, %v706
        %v771 = vmul.f32 %v707, %v707
        %v772 = vmul.f32 %v708, %v708
        %v773 = vmul.f32 %v709, %v709
        %v774 = vmul.f32 %v710, %v710
        %v775 = vmul.f32 %v711, %v711
        %v776 = vmul.f32 %v712, %v712
        %v777 = vmul.f32 %v713, %v713
        %v778 = vmul.f32 %v714, %v714
        %v779 = vmul.f32 %v715, %v715
        %v780 = vmul.f32 %v716, %v716
        %v781 = vmul.f32 %v717, %v717
        %v782 = vmul.f32 %v718, %v718
        %v783 = vmul.f32 %v719, %v719
        %v784 = vmul.f32 %v720, %v720
        %v785 = vmul.f32 %v721, %v721
        %v786 = vmul.f32 %v722, %v722
        %v787 = vmul.f32 %v723, %v723
        %v788 = vmul.f32 %v724, %v724
        %v789 = vmul.f32 %v725, %v725
        %v790 = vmul.f32 %v726, %v726
        %v791 = vmul.f32 %v727, %v727
        %v792 = vmul.f32 %v728, %v728
        %v793 = vmul.f32 %v729, %v729
        %v794 = vmul.f32 %v730, %v730
        %v795 = vmul.f32 %v731, %v731
        %v796 = vmul.f32 %v732, %v732
        %v797 = vmul.f32 %v733, %v733
        %v798 = vmul.f32 %v734, %v734
        %v799 = vmul.f32 %v735, %v735
        %v800 = vmul.f32 %v736, %v736
        %v801 = vmul.f32 %v737, %v737
        %v802 = vmul.f32 %v738, %v738
        %v803 = vmul.f32 %v739, %v739
        %v804 = vmul.f32 %v740, %v740
        %v805 = vmul.f32 %v741, %v741
        %v806 = vmul.f32 %v742, %v742
        %v807 = vmul.f32 %v743, %v743
        %v808 = vmul.f32 %v744, %v744
        %v809 = vmul.f32 %v745, %v745
        %v810 = vmul.f32 %v746, %v746
        %v811 = vmul.f32 %v747, %v747
        %v812 = vmul.f32 %v748, %v748
        %v813 = vmul.f32 %v749, %v749
        %v814 = vmul.f32 %v750, %v686
        %v815 = vmul.f32 %v751, %v687
        %v816 = vmul.f32 %v752, %v688
        %v817 = vmul.f32 %v753, %v689
        %v818 = vmul.f32 %v754, %v690
        %v819 = vmul.f32 %v755, %v691
        %v820 = vmul.f32 %v756, %v692
        %v821 = vmul.f32 %v757, %v693
        %v822 = vmul.f32 %v758, %v694
        %v823 = vmul.f32 %v759, %v695
        %v824 = vmul.f32 %v760, %v696
        %v825 = vmul.f32 %v761, %v697
        %v826 = vmul.f32 %v762, %v698
        %v827 = vmul.f32 %v763, %v699
        %v828 = vmul.f32 %v764, %v700
        %v829 = vmul.f32 %v765, %v701
        %v830 = vmul.f32 %v766, %v702
        %v831 = vmul.f32 %v767, %v703
        %v832 = vmul.f32 %v768, %v704
        %v833 = vmul.f32 %v769, %v705
        %v834 = vmul.f32 %v770, %v706
        %v835 = vmul.f32 %v771, %v707
        %v836 = vmul.f32 %v772, %v708
        %v837 = vmul.f32 %v773, %v709
        %v838 = vmul.f32 %v774, %v710
        %v839 = vmul.f32 %v775, %v711
        %v840 = vmul.f32 %v776, %v712
        %v841 = vmul.f32 %v777, %v713
        %v842 = vmul.f32 %v778, %v714
        %v843 = vmul.f32 %v779, %v715
        %v844 = vmul.f32 %v780, %v716
        %v845 = vmul.f32 %v781, %v717
        %v846 = vmul.f32 %v782, %v718
        %v847 = vmul.f32 %v783, %v719
        %v848 = vmul.f32 %v784, %v720
        %v849 = vmul.f32 %v785, %v721
        %v850 = vmul.f32 %v786, %v722
        %v851 = vmul.f32 %v787, %v723
        %v852 = vmul.f32 %v788, %v724
        %v853 = vmul.f32 %v789, %v725
        %v854 = vmul.f32 %v790, %v726
        %v855 = vmul.f32 %v791, %v727
        %v856 = vmul.f32 %v792, %v728
        %v857 = vmul.f32 %v793, %v729
        %v858 = vmul.f32 %v794, %v730
        %v859 = vmul.f32 %v795, %v731
        %v860 = vmul.f32 %v796, %v732
        %v861 = vmul.f32 %v797, %v733
        %v862 = vmul.f32 %v798, %v734
        %v863 = vmul.f32 %v799, %v735
        %v864 = vmul.f32 %v800, %v736
        %v865 = vmul.f32 %v801, %v737
        %v866 = vmul.f32 %v802, %v738
        %v867 = vmul.f32 %v803, %v739
        %v868 = vmul.f32 %v804, %v740
        %v869 = vmul.f32 %v805, %v741
        %v870 = vmul.f32 %v806, %v742
        %v871 = vmul.f32 %v807, %v743
        %v872 = vmul.f32 %v808, %v744
        %v873 = vmul.f32 %v809, %v745
        %v874 = vmul.f32 %v810, %v746
        %v875 = vmul.f32 %v811, %v747
        %v876 = vmul.f32 %v812, %v748
        %v877 = vmul.f32 %v813, %v749
        %vm878 = vcmask 523264
        %v879 = vsel %vm878, %v814, 0.0
        %880 = vadd.xlane.f32.xlu0 %v879
        %v881 = vpop.xlane.xlu0 %880
        %v882 = vsel %vm878, %v815, 0.0
        %883 = vadd.xlane.f32.xlu0 %v882
        %v884 = vpop.xlane.xlu0 %883
        %v885 = vsel %vm878, %v816, 0.0
        %886 = vadd.xlane.f32.xlu0 %v885
        %v887 = vpop.xlane.xlu0 %886
        %v888 = vsel %vm878, %v817, 0.0
        %889 = vadd.xlane.f32.xlu0 %v888
        %v890 = vpop.xlane.xlu0 %889
        %v891 = vsel %vm878, %v818, 0.0
        %892 = vadd.xlane.f32.xlu0 %v891
        %v893 = vpop.xlane.xlu0 %892
        %v894 = vsel %vm878, %v819, 0.0
        %895 = vadd.xlane.f32.xlu0 %v894
        %v896 = vpop.xlane.xlu0 %895
        %v897 = vsel %vm878, %v820, 0.0
        %898 = vadd.xlane.f32.xlu0 %v897
        %v899 = vpop.xlane.xlu0 %898
        %v900 = vsel %vm878, %v821, 0.0
        %901 = vadd.xlane.f32.xlu0 %v900
        %v902 = vpop.xlane.xlu0 %901
        %v903 = vsel %vm878, %v822, 0.0
        %904 = vadd.xlane.f32.xlu0 %v903
        %v905 = vpop.xlane.xlu0 %904
        %v906 = vsel %vm878, %v823, 0.0
        %907 = vadd.xlane.f32.xlu0 %v906
        %v908 = vpop.xlane.xlu0 %907
        %v909 = vsel %vm878, %v824, 0.0
        %910 = vadd.xlane.f32.xlu0 %v909
        %v911 = vpop.xlane.xlu0 %910
        %v912 = vsel %vm878, %v825, 0.0
        %913 = vadd.xlane.f32.xlu0 %v912
        %v914 = vpop.xlane.xlu0 %913
        %v915 = vsel %vm878, %v826, 0.0
        %916 = vadd.xlane.f32.xlu0 %v915
        %v917 = vpop.xlane.xlu0 %916
        %v918 = vsel %vm878, %v827, 0.0
        %919 = vadd.xlane.f32.xlu0 %v918
        %v920 = vpop.xlane.xlu0 %919
        %v921 = vsel %vm878, %v828, 0.0
        %922 = vadd.xlane.f32.xlu0 %v921
        %v923 = vpop.xlane.xlu0 %922
        %v924 = vsel %vm878, %v829, 0.0
        %925 = vadd.xlane.f32.xlu0 %v924
        %v926 = vpop.xlane.xlu0 %925
        %v927 = vsel %vm878, %v830, 0.0
        %928 = vadd.xlane.f32.xlu0 %v927
        %v929 = vpop.xlane.xlu0 %928
        %v930 = vsel %vm878, %v831, 0.0
        %931 = vadd.xlane.f32.xlu0 %v930
        %v932 = vpop.xlane.xlu0 %931
        %v933 = vsel %vm878, %v832, 0.0
        %934 = vadd.xlane.f32.xlu0 %v933
        %v935 = vpop.xlane.xlu0 %934
        %v936 = vsel %vm878, %v833, 0.0
        %937 = vadd.xlane.f32.xlu0 %v936
        %v938 = vpop.xlane.xlu0 %937
        %v939 = vsel %vm878, %v834, 0.0
        %940 = vadd.xlane.f32.xlu0 %v939
        %v941 = vpop.xlane.xlu0 %940
        %v942 = vsel %vm878, %v835, 0.0
        %943 = vadd.xlane.f32.xlu0 %v942
        %v944 = vpop.xlane.xlu0 %943
        %v945 = vsel %vm878, %v836, 0.0
        %946 = vadd.xlane.f32.xlu0 %v945
        %v947 = vpop.xlane.xlu0 %946
        %v948 = vsel %vm878, %v837, 0.0
        %949 = vadd.xlane.f32.xlu0 %v948
        %v950 = vpop.xlane.xlu0 %949
        %v951 = vsel %vm878, %v838, 0.0
        %952 = vadd.xlane.f32.xlu0 %v951
        %v953 = vpop.xlane.xlu0 %952
        %v954 = vsel %vm878, %v839, 0.0
        %955 = vadd.xlane.f32.xlu0 %v954
        %v956 = vpop.xlane.xlu0 %955
        %v957 = vsel %vm878, %v840, 0.0
        %958 = vadd.xlane.f32.xlu0 %v957
        %v959 = vpop.xlane.xlu0 %958
        %v960 = vsel %vm878, %v841, 0.0
        %961 = vadd.xlane.f32.xlu0 %v960
        %v962 = vpop.xlane.xlu0 %961
        %v963 = vsel %vm878, %v842, 0.0
        %964 = vadd.xlane.f32.xlu0 %v963
        %v965 = vpop.xlane.xlu0 %964
        %v966 = vsel %vm878, %v843, 0.0
        %967 = vadd.xlane.f32.xlu0 %v966
        %v968 = vpop.xlane.xlu0 %967
        %v969 = vsel %vm878, %v844, 0.0
        %970 = vadd.xlane.f32.xlu0 %v969
        %v971 = vpop.xlane.xlu0 %970
        %v972 = vsel %vm878, %v845, 0.0
        %973 = vadd.xlane.f32.xlu0 %v972
        %v974 = vpop.xlane.xlu0 %973
        %v975 = vsel %vm878, %v846, 0.0
        %976 = vadd.xlane.f32.xlu0 %v975
        %v977 = vpop.xlane.xlu0 %976
        %v978 = vsel %vm878, %v847, 0.0
        %979 = vadd.xlane.f32.xlu0 %v978
        %v980 = vpop.xlane.xlu0 %979
        %v981 = vsel %vm878, %v848, 0.0
        %982 = vadd.xlane.f32.xlu0 %v981
        %v983 = vpop.xlane.xlu0 %982
        %v984 = vsel %vm878, %v849, 0.0
        %985 = vadd.xlane.f32.xlu0 %v984
        %v986 = vpop.xlane.xlu0 %985
        %v987 = vsel %vm878, %v850, 0.0
        %988 = vadd.xlane.f32.xlu0 %v987
        %v989 = vpop.xlane.xlu0 %988
        %v990 = vsel %vm878, %v851, 0.0
        %991 = vadd.xlane.f32.xlu0 %v990
        %v992 = vpop.xlane.xlu0 %991
        %v993 = vsel %vm878, %v852, 0.0
        %994 = vadd.xlane.f32.xlu0 %v993
        %v995 = vpop.xlane.xlu0 %994
        %v996 = vsel %vm878, %v853, 0.0
        %997 = vadd.xlane.f32.xlu0 %v996
        %v998 = vpop.xlane.xlu0 %997
        %v999 = vsel %vm878, %v854, 0.0
        %1000 = vadd.xlane.f32.xlu0 %v999
        %v1001 = vpop.xlane.xlu0 %1000
        %v1002 = vsel %vm878, %v855, 0.0
        %1003 = vadd.xlane.f32.xlu0 %v1002
        %v1004 = vpop.xlane.xlu0 %1003
        %v1005 = vsel %vm878, %v856, 0.0
        %1006 = vadd.xlane.f32.xlu0 %v1005
        %v1007 = vpop.xlane.xlu0 %1006
        %v1008 = vsel %vm878, %v857, 0.0
        %1009 = vadd.xlane.f32.xlu0 %v1008
        %v1010 = vpop.xlane.xlu0 %1009
        %v1011 = vsel %vm878, %v858, 0.0
        %1012 = vadd.xlane.f32.xlu0 %v1011
        %v1013 = vpop.xlane.xlu0 %1012
        %v1014 = vsel %vm878, %v859, 0.0
        %1015 = vadd.xlane.f32.xlu0 %v1014
        %v1016 = vpop.xlane.xlu0 %1015
        %v1017 = vsel %vm878, %v860, 0.0
        %1018 = vadd.xlane.f32.xlu0 %v1017
        %v1019 = vpop.xlane.xlu0 %1018
        %v1020 = vsel %vm878, %v861, 0.0
        %1021 = vadd.xlane.f32.xlu0 %v1020
        %v1022 = vpop.xlane.xlu0 %1021
        %v1023 = vsel %vm878, %v862, 0.0
        %1024 = vadd.xlane.f32.xlu0 %v1023
        %v1025 = vpop.xlane.xlu0 %1024
        %v1026 = vsel %vm878, %v863, 0.0
        %1027 = vadd.xlane.f32.xlu0 %v1026
        %v1028 = vpop.xlane.xlu0 %1027
        %v1029 = vsel %vm878, %v864, 0.0
        %1030 = vadd.xlane.f32.xlu0 %v1029
        %v1031 = vpop.xlane.xlu0 %1030
        %v1032 = vsel %vm878, %v865, 0.0
        %1033 = vadd.xlane.f32.xlu0 %v1032
        %v1034 = vpop.xlane.xlu0 %1033
        %v1035 = vsel %vm878, %v866, 0.0
        %1036 = vadd.xlane.f32.xlu0 %v1035
        %v1037 = vpop.xlane.xlu0 %1036
        %v1038 = vsel %vm878, %v867, 0.0
        %1039 = vadd.xlane.f32.xlu0 %v1038
        %v1040 = vpop.xlane.xlu0 %1039
        %v1041 = vsel %vm878, %v868, 0.0
        %1042 = vadd.xlane.f32.xlu0 %v1041
        %v1043 = vpop.xlane.xlu0 %1042
        %v1044 = vsel %vm878, %v869, 0.0
        %1045 = vadd.xlane.f32.xlu0 %v1044
        %v1046 = vpop.xlane.xlu0 %1045
        %v1047 = vsel %vm878, %v870, 0.0
        %1048 = vadd.xlane.f32.xlu0 %v1047
        %v1049 = vpop.xlane.xlu0 %1048
        %v1050 = vsel %vm878, %v871, 0.0
        %1051 = vadd.xlane.f32.xlu0 %v1050
        %v1052 = vpop.xlane.xlu0 %1051
        %v1053 = vsel %vm878, %v872, 0.0
        %1054 = vadd.xlane.f32.xlu0 %v1053
        %v1055 = vpop.xlane.xlu0 %1054
        %v1056 = vsel %vm878, %v873, 0.0
        %1057 = vadd.xlane.f32.xlu0 %v1056
        %v1058 = vpop.xlane.xlu0 %1057
        %v1059 = vsel %vm878, %v874, 0.0
        %1060 = vadd.xlane.f32.xlu0 %v1059
        %v1061 = vpop.xlane.xlu0 %1060
        %v1062 = vsel %vm878, %v875, 0.0
        %1063 = vadd.xlane.f32.xlu0 %v1062
        %v1064 = vpop.xlane.xlu0 %1063
        %v1065 = vsel %vm878, %v876, 0.0
        %1066 = vadd.xlane.f32.xlu0 %v1065
        %v1067 = vpop.xlane.xlu0 %1066
        %v1068 = vsel %vm878, %v877, 0.0
        %1069 = vadd.xlane.f32.xlu0 %v1068
        %v1070 = vpop.xlane.xlu0 %1069
        %v1071 = vrcp.pop 64.0
        %v1072 = vmul.f32 %v881, %v1071
        %v1073 = vmul.f32 %v884, %v1071
        %v1074 = vmul.f32 %v887, %v1071
        %v1075 = vmul.f32 %v890, %v1071
        %v1076 = vmul.f32 %v893, %v1071
        %v1077 = vmul.f32 %v896, %v1071
        %v1078 = vmul.f32 %v899, %v1071
        %v1079 = vmul.f32 %v902, %v1071
        %v1080 = vmul.f32 %v905, %v1071
        %v1081 = vmul.f32 %v908, %v1071
        %v1082 = vmul.f32 %v911, %v1071
        %v1083 = vmul.f32 %v914, %v1071
        %v1084 = vmul.f32 %v917, %v1071
        %v1085 = vmul.f32 %v920, %v1071
        %v1086 = vmul.f32 %v923, %v1071
        %v1087 = vmul.f32 %v926, %v1071
        %v1088 = vmul.f32 %v929, %v1071
        %v1089 = vmul.f32 %v932, %v1071
        %v1090 = vmul.f32 %v935, %v1071
        %v1091 = vmul.f32 %v938, %v1071
        %v1092 = vmul.f32 %v941, %v1071
        %v1093 = vmul.f32 %v944, %v1071
        %v1094 = vmul.f32 %v947, %v1071
        %v1095 = vmul.f32 %v950, %v1071
        %v1096 = vmul.f32 %v953, %v1071
        %v1097 = vmul.f32 %v956, %v1071
        %v1098 = vmul.f32 %v959, %v1071
        %v1099 = vmul.f32 %v962, %v1071
        %v1100 = vmul.f32 %v965, %v1071
        %v1101 = vmul.f32 %v968, %v1071
        %v1102 = vmul.f32 %v971, %v1071
        %v1103 = vmul.f32 %v974, %v1071
        %v1104 = vmul.f32 %v977, %v1071
        %v1105 = vmul.f32 %v980, %v1071
        %v1106 = vmul.f32 %v983, %v1071
        %v1107 = vmul.f32 %v986, %v1071
        %v1108 = vmul.f32 %v989, %v1071
        %v1109 = vmul.f32 %v992, %v1071
        %v1110 = vmul.f32 %v995, %v1071
        %v1111 = vmul.f32 %v998, %v1071
        %v1112 = vmul.f32 %v1001, %v1071
        %v1113 = vmul.f32 %v1004, %v1071
        %v1114 = vmul.f32 %v1007, %v1071
        %v1115 = vmul.f32 %v1010, %v1071
        %v1116 = vmul.f32 %v1013, %v1071
        %v1117 = vmul.f32 %v1016, %v1071
        %v1118 = vmul.f32 %v1019, %v1071
        %v1119 = vmul.f32 %v1022, %v1071
        %v1120 = vmul.f32 %v1025, %v1071
        %v1121 = vmul.f32 %v1028, %v1071
        %v1122 = vmul.f32 %v1031, %v1071
        %v1123 = vmul.f32 %v1034, %v1071
        %v1124 = vmul.f32 %v1037, %v1071
        %v1125 = vmul.f32 %v1040, %v1071
        %v1126 = vmul.f32 %v1043, %v1071
        %v1127 = vmul.f32 %v1046, %v1071
        %v1128 = vmul.f32 %v1049, %v1071
        %v1129 = vmul.f32 %v1052, %v1071
        %v1130 = vmul.f32 %v1055, %v1071
        %v1131 = vmul.f32 %v1058, %v1071
        %v1132 = vmul.f32 %v1061, %v1071
        %v1133 = vmul.f32 %v1064, %v1071
        %v1134 = vmul.f32 %v1067, %v1071
        %v1135 = vmul.f32 %v1070, %v1071
        %v1136 = vpow.f32 %v1072, 0.33333334
        %v1137 = vpow.f32 %v1073, 0.33333334
        %v1138 = vpow.f32 %v1074, 0.33333334
        %v1139 = vpow.f32 %v1075, 0.33333334
        %v1140 = vpow.f32 %v1076, 0.33333334
        %v1141 = vpow.f32 %v1077, 0.33333334
        %v1142 = vpow.f32 %v1078, 0.33333334
        %v1143 = vpow.f32 %v1079, 0.33333334
        %v1144 = vpow.f32 %v1080, 0.33333334
        %v1145 = vpow.f32 %v1081, 0.33333334
        %v1146 = vpow.f32 %v1082, 0.33333334
        %v1147 = vpow.f32 %v1083, 0.33333334
        %v1148 = vpow.f32 %v1084, 0.33333334
        %v1149 = vpow.f32 %v1085, 0.33333334
        %v1150 = vpow.f32 %v1086, 0.33333334
        %v1151 = vpow.f32 %v1087, 0.33333334
        %v1152 = vpow.f32 %v1088, 0.33333334
        %v1153 = vpow.f32 %v1089, 0.33333334
        %v1154 = vpow.f32 %v1090, 0.33333334
        %v1155 = vpow.f32 %v1091, 0.33333334
        %v1156 = vpow.f32 %v1092, 0.33333334
        %v1157 = vpow.f32 %v1093, 0.33333334
        %v1158 = vpow.f32 %v1094, 0.33333334
        %v1159 = vpow.f32 %v1095, 0.33333334
        %v1160 = vpow.f32 %v1096, 0.33333334
        %v1161 = vpow.f32 %v1097, 0.33333334
        %v1162 = vpow.f32 %v1098, 0.33333334
        %v1163 = vpow.f32 %v1099, 0.33333334
        %v1164 = vpow.f32 %v1100, 0.33333334
        %v1165 = vpow.f32 %v1101, 0.33333334
        %v1166 = vpow.f32 %v1102, 0.33333334
        %v1167 = vpow.f32 %v1103, 0.33333334
        %v1168 = vpow.f32 %v1104, 0.33333334
        %v1169 = vpow.f32 %v1105, 0.33333334
        %v1170 = vpow.f32 %v1106, 0.33333334
        %v1171 = vpow.f32 %v1107, 0.33333334
        %v1172 = vpow.f32 %v1108, 0.33333334
        %v1173 = vpow.f32 %v1109, 0.33333334
        %v1174 = vpow.f32 %v1110, 0.33333334
        %v1175 = vpow.f32 %v1111, 0.33333334
        %v1176 = vpow.f32 %v1112, 0.33333334
        %v1177 = vpow.f32 %v1113, 0.33333334
        %v1178 = vpow.f32 %v1114, 0.33333334
        %v1179 = vpow.f32 %v1115, 0.33333334
        %v1180 = vpow.f32 %v1116, 0.33333334
        %v1181 = vpow.f32 %v1117, 0.33333334
        %v1182 = vpow.f32 %v1118, 0.33333334
        %v1183 = vpow.f32 %v1119, 0.33333334
        %v1184 = vpow.f32 %v1120, 0.33333334
        %v1185 = vpow.f32 %v1121, 0.33333334
        %v1186 = vpow.f32 %v1122, 0.33333334
        %v1187 = vpow.f32 %v1123, 0.33333334
        %v1188 = vpow.f32 %v1124, 0.33333334
        %v1189 = vpow.f32 %v1125, 0.33333334
        %v1190 = vpow.f32 %v1126, 0.33333334
        %v1191 = vpow.f32 %v1127, 0.33333334
        %v1192 = vpow.f32 %v1128, 0.33333334
        %v1193 = vpow.f32 %v1129, 0.33333334
        %v1194 = vpow.f32 %v1130, 0.33333334
        %v1195 = vpow.f32 %v1131, 0.33333334
        %v1196 = vpow.f32 %v1132, 0.33333334
        %v1197 = vpow.f32 %v1133, 0.33333334
        %v1198 = vpow.f32 %v1134, 0.33333334
        %v1199 = vpow.f32 %v1135, 0.33333334
        %v1200 = vld [vmem:[%s554] sm:$0x1]
        %v1202 = vlaneseq
        %v1203 = vshrl.u32 %v1202, 7
        %v1204 = vsub.s32 0, %v1203
        %v1205 = vrot.slane %v1200, %v1204
        %1207 = vbcast.lane.b32.xlu0 %v1205, 256
        %v1208 = vpop.permute.xlu0 %1207
        %s1210 = sor.u32 256, 8
        %1211 = vbcast.lane.b32.xlu0 %v1205, %s1210
        %v1212 = vpop.permute.xlu0 %1211
        %s1214 = sor.u32 256, 16
        %1215 = vbcast.lane.b32.xlu0 %v1205, %s1214
        %v1216 = vpop.permute.xlu0 %1215
        %s1218 = sor.u32 256, 24
        %1219 = vbcast.lane.b32.xlu0 %v1205, %s1218
        %v1220 = vpop.permute.xlu0 %1219
        %s1222 = sor.u32 256, 32
        %1223 = vbcast.lane.b32.xlu0 %v1205, %s1222
        %v1224 = vpop.permute.xlu0 %1223
        %s1226 = sor.u32 256, 40
        %1227 = vbcast.lane.b32.xlu0 %v1205, %s1226
        %v1228 = vpop.permute.xlu0 %1227
        %s1230 = sor.u32 256, 48
        %1231 = vbcast.lane.b32.xlu0 %v1205, %s1230
        %v1232 = vpop.permute.xlu0 %1231
        %s1234 = sor.u32 256, 56
        %1235 = vbcast.lane.b32.xlu0 %v1205, %s1234
        %v1236 = vpop.permute.xlu0 %1235
        %s1238 = sor.u32 256, 64
        %1239 = vbcast.lane.b32.xlu0 %v1205, %s1238
        %v1240 = vpop.permute.xlu0 %1239
        %s1242 = sor.u32 256, 72
        %1243 = vbcast.lane.b32.xlu0 %v1205, %s1242
        %v1244 = vpop.permute.xlu0 %1243
        %s1246 = sor.u32 256, 80
        %1247 = vbcast.lane.b32.xlu0 %v1205, %s1246
        %v1248 = vpop.permute.xlu0 %1247
        %s1250 = sor.u32 256, 88
        %1251 = vbcast.lane.b32.xlu0 %v1205, %s1250
        %v1252 = vpop.permute.xlu0 %1251
        %s1254 = sor.u32 256, 96
        %1255 = vbcast.lane.b32.xlu0 %v1205, %s1254
        %v1256 = vpop.permute.xlu0 %1255
        %s1258 = sor.u32 256, 104
        %1259 = vbcast.lane.b32.xlu0 %v1205, %s1258
        %v1260 = vpop.permute.xlu0 %1259
        %s1262 = sor.u32 256, 112
        %1263 = vbcast.lane.b32.xlu0 %v1205, %s1262
        %v1264 = vpop.permute.xlu0 %1263
        %s1266 = sor.u32 256, 120
        %1267 = vbcast.lane.b32.xlu0 %v1205, %s1266
        %v1268 = vpop.permute.xlu0 %1267
        %v1285 = vmul.f32 %v1136, %v1208
        %v1286 = vmul.f32 %v1137, %v1212
        %v1287 = vmul.f32 %v1138, %v1216
        %v1288 = vmul.f32 %v1139, %v1220
        %v1289 = vmul.f32 %v1140, %v1224
        %v1290 = vmul.f32 %v1141, %v1228
        %v1291 = vmul.f32 %v1142, %v1232
        %v1292 = vmul.f32 %v1143, %v1236
        %v1293 = vmul.f32 %v1144, %v1240
        %v1294 = vmul.f32 %v1145, %v1244
        %v1295 = vmul.f32 %v1146, %v1248
        %v1296 = vmul.f32 %v1147, %v1252
        %v1297 = vmul.f32 %v1148, %v1256
        %v1298 = vmul.f32 %v1149, %v1260
        %v1299 = vmul.f32 %v1150, %v1264
        %v1300 = vmul.f32 %v1151, %v1268
        %v1301 = vmul.f32 %v1152, %v1208
        %v1302 = vmul.f32 %v1153, %v1212
        %v1303 = vmul.f32 %v1154, %v1216
        %v1304 = vmul.f32 %v1155, %v1220
        %v1305 = vmul.f32 %v1156, %v1224
        %v1306 = vmul.f32 %v1157, %v1228
        %v1307 = vmul.f32 %v1158, %v1232
        %v1308 = vmul.f32 %v1159, %v1236
        %v1309 = vmul.f32 %v1160, %v1240
        %v1310 = vmul.f32 %v1161, %v1244
        %v1311 = vmul.f32 %v1162, %v1248
        %v1312 = vmul.f32 %v1163, %v1252
        %v1313 = vmul.f32 %v1164, %v1256
        %v1314 = vmul.f32 %v1165, %v1260
        %v1315 = vmul.f32 %v1166, %v1264
        %v1316 = vmul.f32 %v1167, %v1268
        %v1317 = vmul.f32 %v1168, %v1208
        %v1318 = vmul.f32 %v1169, %v1212
        %v1319 = vmul.f32 %v1170, %v1216
        %v1320 = vmul.f32 %v1171, %v1220
        %v1321 = vmul.f32 %v1172, %v1224
        %v1322 = vmul.f32 %v1173, %v1228
        %v1323 = vmul.f32 %v1174, %v1232
        %v1324 = vmul.f32 %v1175, %v1236
        %v1325 = vmul.f32 %v1176, %v1240
        %v1326 = vmul.f32 %v1177, %v1244
        %v1327 = vmul.f32 %v1178, %v1248
        %v1328 = vmul.f32 %v1179, %v1252
        %v1329 = vmul.f32 %v1180, %v1256
        %v1330 = vmul.f32 %v1181, %v1260
        %v1331 = vmul.f32 %v1182, %v1264
        %v1332 = vmul.f32 %v1183, %v1268
        %v1333 = vmul.f32 %v1184, %v1208
        %v1334 = vmul.f32 %v1185, %v1212
        %v1335 = vmul.f32 %v1186, %v1216
        %v1336 = vmul.f32 %v1187, %v1220
        %v1337 = vmul.f32 %v1188, %v1224
        %v1338 = vmul.f32 %v1189, %v1228
        %v1339 = vmul.f32 %v1190, %v1232
        %v1340 = vmul.f32 %v1191, %v1236
        %v1341 = vmul.f32 %v1192, %v1240
        %v1342 = vmul.f32 %v1193, %v1244
        %v1343 = vmul.f32 %v1194, %v1248
        %v1344 = vmul.f32 %v1195, %v1252
        %v1345 = vmul.f32 %v1196, %v1256
        %v1346 = vmul.f32 %v1197, %v1260
        %v1347 = vmul.f32 %v1198, %v1264
        %v1348 = vmul.f32 %v1199, %v1268
        %v1349 = vld [vmem:[%s557] sm:$0x1]
        %v1351 = vlaneseq
        %v1352 = vshrl.u32 %v1351, 7
        %v1353 = vsub.s32 0, %v1352
        %v1354 = vrot.slane %v1349, %v1353
        %1356 = vbcast.lane.b32.xlu0 %v1354, 256
        %v1357 = vpop.permute.xlu0 %1356
        %s1359 = sor.u32 256, 8
        %1360 = vbcast.lane.b32.xlu0 %v1354, %s1359
        %v1361 = vpop.permute.xlu0 %1360
        %s1363 = sor.u32 256, 16
        %1364 = vbcast.lane.b32.xlu0 %v1354, %s1363
        %v1365 = vpop.permute.xlu0 %1364
        %s1367 = sor.u32 256, 24
        %1368 = vbcast.lane.b32.xlu0 %v1354, %s1367
        %v1369 = vpop.permute.xlu0 %1368
        %s1371 = sor.u32 256, 32
        %1372 = vbcast.lane.b32.xlu0 %v1354, %s1371
        %v1373 = vpop.permute.xlu0 %1372
        %s1375 = sor.u32 256, 40
        %1376 = vbcast.lane.b32.xlu0 %v1354, %s1375
        %v1377 = vpop.permute.xlu0 %1376
        %s1379 = sor.u32 256, 48
        %1380 = vbcast.lane.b32.xlu0 %v1354, %s1379
        %v1381 = vpop.permute.xlu0 %1380
        %s1383 = sor.u32 256, 56
        %1384 = vbcast.lane.b32.xlu0 %v1354, %s1383
        %v1385 = vpop.permute.xlu0 %1384
        %s1387 = sor.u32 256, 64
        %1388 = vbcast.lane.b32.xlu0 %v1354, %s1387
        %v1389 = vpop.permute.xlu0 %1388
        %s1391 = sor.u32 256, 72
        %1392 = vbcast.lane.b32.xlu0 %v1354, %s1391
        %v1393 = vpop.permute.xlu0 %1392
        %s1395 = sor.u32 256, 80
        %1396 = vbcast.lane.b32.xlu0 %v1354, %s1395
        %v1397 = vpop.permute.xlu0 %1396
        %s1399 = sor.u32 256, 88
        %1400 = vbcast.lane.b32.xlu0 %v1354, %s1399
        %v1401 = vpop.permute.xlu0 %1400
        %s1403 = sor.u32 256, 96
        %1404 = vbcast.lane.b32.xlu0 %v1354, %s1403
        %v1405 = vpop.permute.xlu0 %1404
        %s1407 = sor.u32 256, 104
        %1408 = vbcast.lane.b32.xlu0 %v1354, %s1407
        %v1409 = vpop.permute.xlu0 %1408
        %s1411 = sor.u32 256, 112
        %1412 = vbcast.lane.b32.xlu0 %v1354, %s1411
        %v1413 = vpop.permute.xlu0 %1412
        %s1415 = sor.u32 256, 120
        %1416 = vbcast.lane.b32.xlu0 %v1354, %s1415
        %v1417 = vpop.permute.xlu0 %1416
        %v1434 = vadd.f32 %v1285, %v1357
        %v1435 = vadd.f32 %v1286, %v1361
        %v1436 = vadd.f32 %v1287, %v1365
        %v1437 = vadd.f32 %v1288, %v1369
        %v1438 = vadd.f32 %v1289, %v1373
        %v1439 = vadd.f32 %v1290, %v1377
        %v1440 = vadd.f32 %v1291, %v1381
        %v1441 = vadd.f32 %v1292, %v1385
        %v1442 = vadd.f32 %v1293, %v1389
        %v1443 = vadd.f32 %v1294, %v1393
        %v1444 = vadd.f32 %v1295, %v1397
        %v1445 = vadd.f32 %v1296, %v1401
        %v1446 = vadd.f32 %v1297, %v1405
        %v1447 = vadd.f32 %v1298, %v1409
        %v1448 = vadd.f32 %v1299, %v1413
        %v1449 = vadd.f32 %v1300, %v1417
        %v1450 = vadd.f32 %v1301, %v1357
        %v1451 = vadd.f32 %v1302, %v1361
        %v1452 = vadd.f32 %v1303, %v1365
        %v1453 = vadd.f32 %v1304, %v1369
        %v1454 = vadd.f32 %v1305, %v1373
        %v1455 = vadd.f32 %v1306, %v1377
        %v1456 = vadd.f32 %v1307, %v1381
        %v1457 = vadd.f32 %v1308, %v1385
        %v1458 = vadd.f32 %v1309, %v1389
        %v1459 = vadd.f32 %v1310, %v1393
        %v1460 = vadd.f32 %v1311, %v1397
        %v1461 = vadd.f32 %v1312, %v1401
        %v1462 = vadd.f32 %v1313, %v1405
        %v1463 = vadd.f32 %v1314, %v1409
        %v1464 = vadd.f32 %v1315, %v1413
        %v1465 = vadd.f32 %v1316, %v1417
        %v1466 = vadd.f32 %v1317, %v1357
        %v1467 = vadd.f32 %v1318, %v1361
        %v1468 = vadd.f32 %v1319, %v1365
        %v1469 = vadd.f32 %v1320, %v1369
        %v1470 = vadd.f32 %v1321, %v1373
        %v1471 = vadd.f32 %v1322, %v1377
        %v1472 = vadd.f32 %v1323, %v1381
        %v1473 = vadd.f32 %v1324, %v1385
        %v1474 = vadd.f32 %v1325, %v1389
        %v1475 = vadd.f32 %v1326, %v1393
        %v1476 = vadd.f32 %v1327, %v1397
        %v1477 = vadd.f32 %v1328, %v1401
        %v1478 = vadd.f32 %v1329, %v1405
        %v1479 = vadd.f32 %v1330, %v1409
        %v1480 = vadd.f32 %v1331, %v1413
        %v1481 = vadd.f32 %v1332, %v1417
        %v1482 = vadd.f32 %v1333, %v1357
        %v1483 = vadd.f32 %v1334, %v1361
        %v1484 = vadd.f32 %v1335, %v1365
        %v1485 = vadd.f32 %v1336, %v1369
        %v1486 = vadd.f32 %v1337, %v1373
        %v1487 = vadd.f32 %v1338, %v1377
        %v1488 = vadd.f32 %v1339, %v1381
        %v1489 = vadd.f32 %v1340, %v1385
        %v1490 = vadd.f32 %v1341, %v1389
        %v1491 = vadd.f32 %v1342, %v1393
        %v1492 = vadd.f32 %v1343, %v1397
        %v1493 = vadd.f32 %v1344, %v1401
        %v1494 = vadd.f32 %v1345, %v1405
        %v1495 = vadd.f32 %v1346, %v1409
        %v1496 = vadd.f32 %v1347, %v1413
        %v1497 = vadd.f32 %v1348, %v1417
        %1562 = vset.pattern.permute.xlu0 0
        %1563 = vperm.xlu0 %1562, %v1434
        %v1564 = vpop.permute.xlu0 %1563
        %1565 = vset.pattern.permute.xlu0 0
        %1566 = vperm.xlu0 %1565, %v1435
        %v1567 = vpop.permute.xlu0 %1566
        %1568 = vset.pattern.permute.xlu0 0
        %1569 = vperm.xlu0 %1568, %v1436
        %v1570 = vpop.permute.xlu0 %1569
        %1571 = vset.pattern.permute.xlu0 0
        %1572 = vperm.xlu0 %1571, %v1437
        %v1573 = vpop.permute.xlu0 %1572
        %1574 = vset.pattern.permute.xlu0 0
        %1575 = vperm.xlu0 %1574, %v1438
        %v1576 = vpop.permute.xlu0 %1575
        %1577 = vset.pattern.permute.xlu0 0
        %1578 = vperm.xlu0 %1577, %v1439
        %v1579 = vpop.permute.xlu0 %1578
        %1580 = vset.pattern.permute.xlu0 0
        %1581 = vperm.xlu0 %1580, %v1440
        %v1582 = vpop.permute.xlu0 %1581
        %1583 = vset.pattern.permute.xlu0 0
        %1584 = vperm.xlu0 %1583, %v1441
        %v1585 = vpop.permute.xlu0 %1584
        %1586 = vset.pattern.permute.xlu0 0
        %1587 = vperm.xlu0 %1586, %v1442
        %v1588 = vpop.permute.xlu0 %1587
        %1589 = vset.pattern.permute.xlu0 0
        %1590 = vperm.xlu0 %1589, %v1443
        %v1591 = vpop.permute.xlu0 %1590
        %1592 = vset.pattern.permute.xlu0 0
        %1593 = vperm.xlu0 %1592, %v1444
        %v1594 = vpop.permute.xlu0 %1593
        %1595 = vset.pattern.permute.xlu0 0
        %1596 = vperm.xlu0 %1595, %v1445
        %v1597 = vpop.permute.xlu0 %1596
        %1598 = vset.pattern.permute.xlu0 0
        %1599 = vperm.xlu0 %1598, %v1446
        %v1600 = vpop.permute.xlu0 %1599
        %1601 = vset.pattern.permute.xlu0 0
        %1602 = vperm.xlu0 %1601, %v1447
        %v1603 = vpop.permute.xlu0 %1602
        %1604 = vset.pattern.permute.xlu0 0
        %1605 = vperm.xlu0 %1604, %v1448
        %v1606 = vpop.permute.xlu0 %1605
        %1607 = vset.pattern.permute.xlu0 0
        %1608 = vperm.xlu0 %1607, %v1449
        %v1609 = vpop.permute.xlu0 %1608
        %1610 = vset.pattern.permute.xlu0 0
        %1611 = vperm.xlu0 %1610, %v1450
        %v1612 = vpop.permute.xlu0 %1611
        %1613 = vset.pattern.permute.xlu0 0
        %1614 = vperm.xlu0 %1613, %v1451
        %v1615 = vpop.permute.xlu0 %1614
        %1616 = vset.pattern.permute.xlu0 0
        %1617 = vperm.xlu0 %1616, %v1452
        %v1618 = vpop.permute.xlu0 %1617
        %1619 = vset.pattern.permute.xlu0 0
        %1620 = vperm.xlu0 %1619, %v1453
        %v1621 = vpop.permute.xlu0 %1620
        %1622 = vset.pattern.permute.xlu0 0
        %1623 = vperm.xlu0 %1622, %v1454
        %v1624 = vpop.permute.xlu0 %1623
        %1625 = vset.pattern.permute.xlu0 0
        %1626 = vperm.xlu0 %1625, %v1455
        %v1627 = vpop.permute.xlu0 %1626
        %1628 = vset.pattern.permute.xlu0 0
        %1629 = vperm.xlu0 %1628, %v1456
        %v1630 = vpop.permute.xlu0 %1629
        %1631 = vset.pattern.permute.xlu0 0
        %1632 = vperm.xlu0 %1631, %v1457
        %v1633 = vpop.permute.xlu0 %1632
        %1634 = vset.pattern.permute.xlu0 0
        %1635 = vperm.xlu0 %1634, %v1458
        %v1636 = vpop.permute.xlu0 %1635
        %1637 = vset.pattern.permute.xlu0 0
        %1638 = vperm.xlu0 %1637, %v1459
        %v1639 = vpop.permute.xlu0 %1638
        %1640 = vset.pattern.permute.xlu0 0
        %1641 = vperm.xlu0 %1640, %v1460
        %v1642 = vpop.permute.xlu0 %1641
        %1643 = vset.pattern.permute.xlu0 0
        %1644 = vperm.xlu0 %1643, %v1461
        %v1645 = vpop.permute.xlu0 %1644
        %1646 = vset.pattern.permute.xlu0 0
        %1647 = vperm.xlu0 %1646, %v1462
        %v1648 = vpop.permute.xlu0 %1647
        %1649 = vset.pattern.permute.xlu0 0
        %1650 = vperm.xlu0 %1649, %v1463
        %v1651 = vpop.permute.xlu0 %1650
        %1652 = vset.pattern.permute.xlu0 0
        %1653 = vperm.xlu0 %1652, %v1464
        %v1654 = vpop.permute.xlu0 %1653
        %1655 = vset.pattern.permute.xlu0 0
        %1656 = vperm.xlu0 %1655, %v1465
        %v1657 = vpop.permute.xlu0 %1656
        %1658 = vset.pattern.permute.xlu0 0
        %1659 = vperm.xlu0 %1658, %v1466
        %v1660 = vpop.permute.xlu0 %1659
        %1661 = vset.pattern.permute.xlu0 0
        %1662 = vperm.xlu0 %1661, %v1467
        %v1663 = vpop.permute.xlu0 %1662
        %1664 = vset.pattern.permute.xlu0 0
        %1665 = vperm.xlu0 %1664, %v1468
        %v1666 = vpop.permute.xlu0 %1665
        %1667 = vset.pattern.permute.xlu0 0
        %1668 = vperm.xlu0 %1667, %v1469
        %v1669 = vpop.permute.xlu0 %1668
        %1670 = vset.pattern.permute.xlu0 0
        %1671 = vperm.xlu0 %1670, %v1470
        %v1672 = vpop.permute.xlu0 %1671
        %1673 = vset.pattern.permute.xlu0 0
        %1674 = vperm.xlu0 %1673, %v1471
        %v1675 = vpop.permute.xlu0 %1674
        %1676 = vset.pattern.permute.xlu0 0
        %1677 = vperm.xlu0 %1676, %v1472
        %v1678 = vpop.permute.xlu0 %1677
        %1679 = vset.pattern.permute.xlu0 0
        %1680 = vperm.xlu0 %1679, %v1473
        %v1681 = vpop.permute.xlu0 %1680
        %1682 = vset.pattern.permute.xlu0 0
        %1683 = vperm.xlu0 %1682, %v1474
        %v1684 = vpop.permute.xlu0 %1683
        %1685 = vset.pattern.permute.xlu0 0
        %1686 = vperm.xlu0 %1685, %v1475
        %v1687 = vpop.permute.xlu0 %1686
        %1688 = vset.pattern.permute.xlu0 0
        %1689 = vperm.xlu0 %1688, %v1476
        %v1690 = vpop.permute.xlu0 %1689
        %1691 = vset.pattern.permute.xlu0 0
        %1692 = vperm.xlu0 %1691, %v1477
        %v1693 = vpop.permute.xlu0 %1692
        %1694 = vset.pattern.permute.xlu0 0
        %1695 = vperm.xlu0 %1694, %v1478
        %v1696 = vpop.permute.xlu0 %1695
        %1697 = vset.pattern.permute.xlu0 0
        %1698 = vperm.xlu0 %1697, %v1479
        %v1699 = vpop.permute.xlu0 %1698
        %1700 = vset.pattern.permute.xlu0 0
        %1701 = vperm.xlu0 %1700, %v1480
        %v1702 = vpop.permute.xlu0 %1701
        %1703 = vset.pattern.permute.xlu0 0
        %1704 = vperm.xlu0 %1703, %v1481
        %v1705 = vpop.permute.xlu0 %1704
        %1706 = vset.pattern.permute.xlu0 0
        %1707 = vperm.xlu0 %1706, %v1482
        %v1708 = vpop.permute.xlu0 %1707
        %1709 = vset.pattern.permute.xlu0 0
        %1710 = vperm.xlu0 %1709, %v1483
        %v1711 = vpop.permute.xlu0 %1710
        %1712 = vset.pattern.permute.xlu0 0
        %1713 = vperm.xlu0 %1712, %v1484
        %v1714 = vpop.permute.xlu0 %1713
        %1715 = vset.pattern.permute.xlu0 0
        %1716 = vperm.xlu0 %1715, %v1485
        %v1717 = vpop.permute.xlu0 %1716
        %1718 = vset.pattern.permute.xlu0 0
        %1719 = vperm.xlu0 %1718, %v1486
        %v1720 = vpop.permute.xlu0 %1719
        %1721 = vset.pattern.permute.xlu0 0
        %1722 = vperm.xlu0 %1721, %v1487
        %v1723 = vpop.permute.xlu0 %1722
        %1724 = vset.pattern.permute.xlu0 0
        %1725 = vperm.xlu0 %1724, %v1488
        %v1726 = vpop.permute.xlu0 %1725
        %1727 = vset.pattern.permute.xlu0 0
        %1728 = vperm.xlu0 %1727, %v1489
        %v1729 = vpop.permute.xlu0 %1728
        %1730 = vset.pattern.permute.xlu0 0
        %1731 = vperm.xlu0 %1730, %v1490
        %v1732 = vpop.permute.xlu0 %1731
        %1733 = vset.pattern.permute.xlu0 0
        %1734 = vperm.xlu0 %1733, %v1491
        %v1735 = vpop.permute.xlu0 %1734
        %1736 = vset.pattern.permute.xlu0 0
        %1737 = vperm.xlu0 %1736, %v1492
        %v1738 = vpop.permute.xlu0 %1737
        %1739 = vset.pattern.permute.xlu0 0
        %1740 = vperm.xlu0 %1739, %v1493
        %v1741 = vpop.permute.xlu0 %1740
        %1742 = vset.pattern.permute.xlu0 0
        %1743 = vperm.xlu0 %1742, %v1494
        %v1744 = vpop.permute.xlu0 %1743
        %1745 = vset.pattern.permute.xlu0 0
        %1746 = vperm.xlu0 %1745, %v1495
        %v1747 = vpop.permute.xlu0 %1746
        %1748 = vset.pattern.permute.xlu0 0
        %1749 = vperm.xlu0 %1748, %v1496
        %v1750 = vpop.permute.xlu0 %1749
        %1751 = vset.pattern.permute.xlu0 0
        %1752 = vperm.xlu0 %1751, %v1497
        %v1753 = vpop.permute.xlu0 %1752
        %v1754 = vlaneseq
        %v1755 = vand.u32 %v1754, 127
        %v1756 = vlaneseq
        %v1757 = vshrl.u32 %v1756, 7
        %v1758 = vsub.s32 %v1755, %v1757
        %v1759 = vrot.slane %v1564, %v1758
        %v1760 = vadd.s32 %v1755, 4294967288
        %v1761 = vlaneseq
        %v1762 = vshrl.u32 %v1761, 7
        %v1763 = vsub.s32 %v1760, %v1762
        %v1764 = vrot.slane %v1567, %v1763
        %vm1765 = vcmask 130112
        %v1766 = vsel %vm1765, %v1764, %v1759
        %v1767 = vadd.s32 %v1755, 4294967280
        %v1768 = vlaneseq
        %v1769 = vshrl.u32 %v1768, 7
        %v1770 = vsub.s32 %v1767, %v1769
        %v1771 = vrot.slane %v1570, %v1770
        %vm1772 = vcmask 195712
        %v1773 = vsel %vm1772, %v1771, %v1766
        %v1774 = vadd.s32 %v1755, 4294967272
        %v1775 = vlaneseq
        %v1776 = vshrl.u32 %v1775, 7
        %v1777 = vsub.s32 %v1774, %v1776
        %v1778 = vrot.slane %v1573, %v1777
        %vm1779 = vcmask 261312
        %v1780 = vsel %vm1779, %v1778, %v1773
        %v1781 = vadd.s32 %v1755, 4294967264
        %v1782 = vlaneseq
        %v1783 = vshrl.u32 %v1782, 7
        %v1784 = vsub.s32 %v1781, %v1783
        %v1785 = vrot.slane %v1576, %v1784
        %vm1786 = vcmask 326912
        %v1787 = vsel %vm1786, %v1785, %v1780
        %v1788 = vadd.s32 %v1755, 4294967256
        %v1789 = vlaneseq
        %v1790 = vshrl.u32 %v1789, 7
        %v1791 = vsub.s32 %v1788, %v1790
        %v1792 = vrot.slane %v1579, %v1791
        %vm1793 = vcmask 392512
        %v1794 = vsel %vm1793, %v1792, %v1787
        %v1795 = vadd.s32 %v1755, 4294967248
        %v1796 = vlaneseq
        %v1797 = vshrl.u32 %v1796, 7
        %v1798 = vsub.s32 %v1795, %v1797
        %v1799 = vrot.slane %v1582, %v1798
        %vm1800 = vcmask 458112
        %v1801 = vsel %vm1800, %v1799, %v1794
        %v1802 = vadd.s32 %v1755, 4294967240
        %v1803 = vlaneseq
        %v1804 = vshrl.u32 %v1803, 7
        %v1805 = vsub.s32 %v1802, %v1804
        %v1806 = vrot.slane %v1585, %v1805
        %vm1807 = vcmask 523712
        %v1808 = vsel %vm1807, %v1806, %v1801
        %v1809 = vadd.s32 %v1755, 4294967232
        %v1810 = vlaneseq
        %v1811 = vshrl.u32 %v1810, 7
        %v1812 = vsub.s32 %v1809, %v1811
        %v1813 = vrot.slane %v1588, %v1812
        %vm1814 = vcmask 589312
        %v1815 = vsel %vm1814, %v1813, %v1808
        %v1816 = vadd.s32 %v1755, 4294967224
        %v1817 = vlaneseq
        %v1818 = vshrl.u32 %v1817, 7
        %v1819 = vsub.s32 %v1816, %v1818
        %v1820 = vrot.slane %v1591, %v1819
        %vm1821 = vcmask 654912
        %v1822 = vsel %vm1821, %v1820, %v1815
        %v1823 = vadd.s32 %v1755, 4294967216
        %v1824 = vlaneseq
        %v1825 = vshrl.u32 %v1824, 7
        %v1826 = vsub.s32 %v1823, %v1825
        %v1827 = vrot.slane %v1594, %v1826
        %vm1828 = vcmask 720512
        %v1829 = vsel %vm1828, %v1827, %v1822
        %v1830 = vadd.s32 %v1755, 4294967208
        %v1831 = vlaneseq
        %v1832 = vshrl.u32 %v1831, 7
        %v1833 = vsub.s32 %v1830, %v1832
        %v1834 = vrot.slane %v1597, %v1833
        %vm1835 = vcmask 786112
        %v1836 = vsel %vm1835, %v1834, %v1829
        %v1837 = vadd.s32 %v1755, 4294967200
        %v1838 = vlaneseq
        %v1839 = vshrl.u32 %v1838, 7
        %v1840 = vsub.s32 %v1837, %v1839
        %v1841 = vrot.slane %v1600, %v1840
        %vm1842 = vcmask 851712
        %v1843 = vsel %vm1842, %v1841, %v1836
        %v1844 = vadd.s32 %v1755, 4294967192
        %v1845 = vlaneseq
        %v1846 = vshrl.u32 %v1845, 7
        %v1847 = vsub.s32 %v1844, %v1846
        %v1848 = vrot.slane %v1603, %v1847
        %vm1849 = vcmask 917312
        %v1850 = vsel %vm1849, %v1848, %v1843
        %v1851 = vadd.s32 %v1755, 4294967184
        %v1852 = vlaneseq
        %v1853 = vshrl.u32 %v1852, 7
        %v1854 = vsub.s32 %v1851, %v1853
        %v1855 = vrot.slane %v1606, %v1854
        %vm1856 = vcmask 982912
        %v1857 = vsel %vm1856, %v1855, %v1850
        %v1858 = vadd.s32 %v1755, 4294967176
        %v1859 = vlaneseq
        %v1860 = vshrl.u32 %v1859, 7
        %v1861 = vsub.s32 %v1858, %v1860
        %v1862 = vrot.slane %v1609, %v1861
        %vm1863 = vcmask 1048512
        %v1864 = vsel %vm1863, %v1862, %v1857
        %v1865 = vlaneseq
        %v1866 = vshrl.u32 %v1865, 7
        %v1867 = vsub.s32 %v1755, %v1866
        %v1868 = vrot.slane %v1612, %v1867
        %v1869 = vlaneseq
        %v1870 = vshrl.u32 %v1869, 7
        %v1871 = vsub.s32 %v1760, %v1870
        %v1872 = vrot.slane %v1615, %v1871
        %v1873 = vsel %vm1765, %v1872, %v1868
        %v1874 = vlaneseq
        %v1875 = vshrl.u32 %v1874, 7
        %v1876 = vsub.s32 %v1767, %v1875
        %v1877 = vrot.slane %v1618, %v1876
        %v1878 = vsel %vm1772, %v1877, %v1873
        %v1879 = vlaneseq
        %v1880 = vshrl.u32 %v1879, 7
        %v1881 = vsub.s32 %v1774, %v1880
        %v1882 = vrot.slane %v1621, %v1881
        %v1883 = vsel %vm1779, %v1882, %v1878
        %v1884 = vlaneseq
        %v1885 = vshrl.u32 %v1884, 7
        %v1886 = vsub.s32 %v1781, %v1885
        %v1887 = vrot.slane %v1624, %v1886
        %v1888 = vsel %vm1786, %v1887, %v1883
        %v1889 = vlaneseq
        %v1890 = vshrl.u32 %v1889, 7
        %v1891 = vsub.s32 %v1788, %v1890
        %v1892 = vrot.slane %v1627, %v1891
        %v1893 = vsel %vm1793, %v1892, %v1888
        %v1894 = vlaneseq
        %v1895 = vshrl.u32 %v1894, 7
        %v1896 = vsub.s32 %v1795, %v1895
        %v1897 = vrot.slane %v1630, %v1896
        %v1898 = vsel %vm1800, %v1897, %v1893
        %v1899 = vlaneseq
        %v1900 = vshrl.u32 %v1899, 7
        %v1901 = vsub.s32 %v1802, %v1900
        %v1902 = vrot.slane %v1633, %v1901
        %v1903 = vsel %vm1807, %v1902, %v1898
        %v1904 = vlaneseq
        %v1905 = vshrl.u32 %v1904, 7
        %v1906 = vsub.s32 %v1809, %v1905
        %v1907 = vrot.slane %v1636, %v1906
        %v1908 = vsel %vm1814, %v1907, %v1903
        %v1909 = vlaneseq
        %v1910 = vshrl.u32 %v1909, 7
        %v1911 = vsub.s32 %v1816, %v1910
        %v1912 = vrot.slane %v1639, %v1911
        %v1913 = vsel %vm1821, %v1912, %v1908
        %v1914 = vlaneseq
        %v1915 = vshrl.u32 %v1914, 7
        %v1916 = vsub.s32 %v1823, %v1915
        %v1917 = vrot.slane %v1642, %v1916
        %v1918 = vsel %vm1828, %v1917, %v1913
        %v1919 = vlaneseq
        %v1920 = vshrl.u32 %v1919, 7
        %v1921 = vsub.s32 %v1830, %v1920
        %v1922 = vrot.slane %v1645, %v1921
        %v1923 = vsel %vm1835, %v1922, %v1918
        %v1924 = vlaneseq
        %v1925 = vshrl.u32 %v1924, 7
        %v1926 = vsub.s32 %v1837, %v1925
        %v1927 = vrot.slane %v1648, %v1926
        %v1928 = vsel %vm1842, %v1927, %v1923
        %v1929 = vlaneseq
        %v1930 = vshrl.u32 %v1929, 7
        %v1931 = vsub.s32 %v1844, %v1930
        %v1932 = vrot.slane %v1651, %v1931
        %v1933 = vsel %vm1849, %v1932, %v1928
        %v1934 = vlaneseq
        %v1935 = vshrl.u32 %v1934, 7
        %v1936 = vsub.s32 %v1851, %v1935
        %v1937 = vrot.slane %v1654, %v1936
        %v1938 = vsel %vm1856, %v1937, %v1933
        %v1939 = vlaneseq
        %v1940 = vshrl.u32 %v1939, 7
        %v1941 = vsub.s32 %v1858, %v1940
        %v1942 = vrot.slane %v1657, %v1941
        %v1943 = vsel %vm1863, %v1942, %v1938
        %v1944 = vlaneseq
        %v1945 = vshrl.u32 %v1944, 7
        %v1946 = vsub.s32 %v1755, %v1945
        %v1947 = vrot.slane %v1660, %v1946
        %v1948 = vlaneseq
        %v1949 = vshrl.u32 %v1948, 7
        %v1950 = vsub.s32 %v1760, %v1949
        %v1951 = vrot.slane %v1663, %v1950
        %v1952 = vsel %vm1765, %v1951, %v1947
        %v1953 = vlaneseq
        %v1954 = vshrl.u32 %v1953, 7
        %v1955 = vsub.s32 %v1767, %v1954
        %v1956 = vrot.slane %v1666, %v1955
        %v1957 = vsel %vm1772, %v1956, %v1952
        %v1958 = vlaneseq
        %v1959 = vshrl.u32 %v1958, 7
        %v1960 = vsub.s32 %v1774, %v1959
        %v1961 = vrot.slane %v1669, %v1960
        %v1962 = vsel %vm1779, %v1961, %v1957
        %v1963 = vlaneseq
        %v1964 = vshrl.u32 %v1963, 7
        %v1965 = vsub.s32 %v1781, %v1964
        %v1966 = vrot.slane %v1672, %v1965
        %v1967 = vsel %vm1786, %v1966, %v1962
        %v1968 = vlaneseq
        %v1969 = vshrl.u32 %v1968, 7
        %v1970 = vsub.s32 %v1788, %v1969
        %v1971 = vrot.slane %v1675, %v1970
        %v1972 = vsel %vm1793, %v1971, %v1967
        %v1973 = vlaneseq
        %v1974 = vshrl.u32 %v1973, 7
        %v1975 = vsub.s32 %v1795, %v1974
        %v1976 = vrot.slane %v1678, %v1975
        %v1977 = vsel %vm1800, %v1976, %v1972
        %v1978 = vlaneseq
        %v1979 = vshrl.u32 %v1978, 7
        %v1980 = vsub.s32 %v1802, %v1979
        %v1981 = vrot.slane %v1681, %v1980
        %v1982 = vsel %vm1807, %v1981, %v1977
        %v1983 = vlaneseq
        %v1984 = vshrl.u32 %v1983, 7
        %v1985 = vsub.s32 %v1809, %v1984
        %v1986 = vrot.slane %v1684, %v1985
        %v1987 = vsel %vm1814, %v1986, %v1982
        %v1988 = vlaneseq
        %v1989 = vshrl.u32 %v1988, 7
        %v1990 = vsub.s32 %v1816, %v1989
        %v1991 = vrot.slane %v1687, %v1990
        %v1992 = vsel %vm1821, %v1991, %v1987
        %v1993 = vlaneseq
        %v1994 = vshrl.u32 %v1993, 7
        %v1995 = vsub.s32 %v1823, %v1994
        %v1996 = vrot.slane %v1690, %v1995
        %v1997 = vsel %vm1828, %v1996, %v1992
        %v1998 = vlaneseq
        %v1999 = vshrl.u32 %v1998, 7
        %v2000 = vsub.s32 %v1830, %v1999
        %v2001 = vrot.slane %v1693, %v2000
        %v2002 = vsel %vm1835, %v2001, %v1997
        %v2003 = vlaneseq
        %v2004 = vshrl.u32 %v2003, 7
        %v2005 = vsub.s32 %v1837, %v2004
        %v2006 = vrot.slane %v1696, %v2005
        %v2007 = vsel %vm1842, %v2006, %v2002
        %v2008 = vlaneseq
        %v2009 = vshrl.u32 %v2008, 7
        %v2010 = vsub.s32 %v1844, %v2009
        %v2011 = vrot.slane %v1699, %v2010
        %v2012 = vsel %vm1849, %v2011, %v2007
        %v2013 = vlaneseq
        %v2014 = vshrl.u32 %v2013, 7
        %v2015 = vsub.s32 %v1851, %v2014
        %v2016 = vrot.slane %v1702, %v2015
        %v2017 = vsel %vm1856, %v2016, %v2012
        %v2018 = vlaneseq
        %v2019 = vshrl.u32 %v2018, 7
        %v2020 = vsub.s32 %v1858, %v2019
        %v2021 = vrot.slane %v1705, %v2020
        %v2022 = vsel %vm1863, %v2021, %v2017
        %v2023 = vlaneseq
        %v2024 = vshrl.u32 %v2023, 7
        %v2025 = vsub.s32 %v1755, %v2024
        %v2026 = vrot.slane %v1708, %v2025
        %v2027 = vlaneseq
        %v2028 = vshrl.u32 %v2027, 7
        %v2029 = vsub.s32 %v1760, %v2028
        %v2030 = vrot.slane %v1711, %v2029
        %v2031 = vsel %vm1765, %v2030, %v2026
        %v2032 = vlaneseq
        %v2033 = vshrl.u32 %v2032, 7
        %v2034 = vsub.s32 %v1767, %v2033
        %v2035 = vrot.slane %v1714, %v2034
        %v2036 = vsel %vm1772, %v2035, %v2031
        %v2037 = vlaneseq
        %v2038 = vshrl.u32 %v2037, 7
        %v2039 = vsub.s32 %v1774, %v2038
        %v2040 = vrot.slane %v1717, %v2039
        %v2041 = vsel %vm1779, %v2040, %v2036
        %v2042 = vlaneseq
        %v2043 = vshrl.u32 %v2042, 7
        %v2044 = vsub.s32 %v1781, %v2043
        %v2045 = vrot.slane %v1720, %v2044
        %v2046 = vsel %vm1786, %v2045, %v2041
        %v2047 = vlaneseq
        %v2048 = vshrl.u32 %v2047, 7
        %v2049 = vsub.s32 %v1788, %v2048
        %v2050 = vrot.slane %v1723, %v2049
        %v2051 = vsel %vm1793, %v2050, %v2046
        %v2052 = vlaneseq
        %v2053 = vshrl.u32 %v2052, 7
        %v2054 = vsub.s32 %v1795, %v2053
        %v2055 = vrot.slane %v1726, %v2054
        %v2056 = vsel %vm1800, %v2055, %v2051
        %v2057 = vlaneseq
        %v2058 = vshrl.u32 %v2057, 7
        %v2059 = vsub.s32 %v1802, %v2058
        %v2060 = vrot.slane %v1729, %v2059
        %v2061 = vsel %vm1807, %v2060, %v2056
        %v2062 = vlaneseq
        %v2063 = vshrl.u32 %v2062, 7
        %v2064 = vsub.s32 %v1809, %v2063
        %v2065 = vrot.slane %v1732, %v2064
        %v2066 = vsel %vm1814, %v2065, %v2061
        %v2067 = vlaneseq
        %v2068 = vshrl.u32 %v2067, 7
        %v2069 = vsub.s32 %v1816, %v2068
        %v2070 = vrot.slane %v1735, %v2069
        %v2071 = vsel %vm1821, %v2070, %v2066
        %v2072 = vlaneseq
        %v2073 = vshrl.u32 %v2072, 7
        %v2074 = vsub.s32 %v1823, %v2073
        %v2075 = vrot.slane %v1738, %v2074
        %v2076 = vsel %vm1828, %v2075, %v2071
        %v2077 = vlaneseq
        %v2078 = vshrl.u32 %v2077, 7
        %v2079 = vsub.s32 %v1830, %v2078
        %v2080 = vrot.slane %v1741, %v2079
        %v2081 = vsel %vm1835, %v2080, %v2076
        %v2082 = vlaneseq
        %v2083 = vshrl.u32 %v2082, 7
        %v2084 = vsub.s32 %v1837, %v2083
        %v2085 = vrot.slane %v1744, %v2084
        %v2086 = vsel %vm1842, %v2085, %v2081
        %v2087 = vlaneseq
        %v2088 = vshrl.u32 %v2087, 7
        %v2089 = vsub.s32 %v1844, %v2088
        %v2090 = vrot.slane %v1747, %v2089
        %v2091 = vsel %vm1849, %v2090, %v2086
        %v2092 = vlaneseq
        %v2093 = vshrl.u32 %v2092, 7
        %v2094 = vsub.s32 %v1851, %v2093
        %v2095 = vrot.slane %v1750, %v2094
        %v2096 = vsel %vm1856, %v2095, %v2091
        %v2097 = vlaneseq
        %v2098 = vshrl.u32 %v2097, 7
        %v2099 = vsub.s32 %v1858, %v2098
        %v2100 = vrot.slane %v1753, %v2099
        %v2101 = vsel %vm1863, %v2100, %v2096
        %vm2102 = vcmask 1041409
        %v2103 = vsel %vm2102, %v1943, %v1864
        %vm2104 = vcmask 1042434
        %v2105 = vsel %vm2104, %v2022, %v2103
        %vm2106 = vcmask 1043459
        %v2107 = vsel %vm2106, %v2101, %v2105
        %2109 = vst [vmem:[%s543] sm:$0xf] %v2107
        %v2110 = vpack.c.bf16 %v1435, %v1434
        %v2111 = vpack.c.bf16 %v1437, %v1436
        %v2112 = vpack.c.bf16 %v1439, %v1438
        %v2113 = vpack.c.bf16 %v1441, %v1440
        %v2114 = vpack.c.bf16 %v1443, %v1442
        %v2115 = vpack.c.bf16 %v1445, %v1444
        %v2116 = vpack.c.bf16 %v1447, %v1446
        %v2117 = vpack.c.bf16 %v1449, %v1448
        %v2118 = vpack.c.bf16 %v1451, %v1450
        %v2119 = vpack.c.bf16 %v1453, %v1452
        %v2120 = vpack.c.bf16 %v1455, %v1454
        %v2121 = vpack.c.bf16 %v1457, %v1456
        %v2122 = vpack.c.bf16 %v1459, %v1458
        %v2123 = vpack.c.bf16 %v1461, %v1460
        %v2124 = vpack.c.bf16 %v1463, %v1462
        %v2125 = vpack.c.bf16 %v1465, %v1464
        %v2126 = vpack.c.bf16 %v1467, %v1466
        %v2127 = vpack.c.bf16 %v1469, %v1468
        %v2128 = vpack.c.bf16 %v1471, %v1470
        %v2129 = vpack.c.bf16 %v1473, %v1472
        %v2130 = vpack.c.bf16 %v1475, %v1474
        %v2131 = vpack.c.bf16 %v1477, %v1476
        %v2132 = vpack.c.bf16 %v1479, %v1478
        %v2133 = vpack.c.bf16 %v1481, %v1480
        %v2134 = vpack.c.bf16 %v1483, %v1482
        %v2135 = vpack.c.bf16 %v1485, %v1484
        %v2136 = vpack.c.bf16 %v1487, %v1486
        %v2137 = vpack.c.bf16 %v1489, %v1488
        %v2138 = vpack.c.bf16 %v1491, %v1490
        %v2139 = vpack.c.bf16 %v1493, %v1492
        %v2140 = vpack.c.bf16 %v1495, %v1494
        %v2141 = vpack.c.bf16 %v1497, %v1496
        %v2174 = vcombine.high %v2110, %v2110
        %v2176 = vunpack.c.l.s4 1983009808
        %v2177 = vunpack.c.0.s8 %v2176
        %v2178 = vlaneseq
        %v2179 = vshrl.u32 %v2178, 7
        %v2180 = vsub.s32 %v2177, %v2179
        %v2181 = vrot.slane %v2110, %v2180
        %v2183 = vunpack.c.l.s4 1983009808
        %v2184 = vunpack.c.0.s8 %v2183
        %v2185 = vlaneseq
        %v2186 = vshrl.u32 %v2185, 7
        %v2187 = vsub.s32 %v2184, %v2186
        %v2188 = vrot.slane %v2174, %v2187
        %v2189 = vcombine.high %v2181, %v2181
        %v2190 = vcombine.high %v2188, %v2188
        %v2191 = vcombine.high %v2111, %v2111
        %v2193 = vunpack.c.l.s4 1983009808
        %v2194 = vunpack.c.0.s8 %v2193
        %v2195 = vlaneseq
        %v2196 = vshrl.u32 %v2195, 7
        %v2197 = vsub.s32 %v2194, %v2196
        %v2198 = vrot.slane %v2111, %v2197
        %v2200 = vunpack.c.l.s4 1983009808
        %v2201 = vunpack.c.0.s8 %v2200
        %v2202 = vlaneseq
        %v2203 = vshrl.u32 %v2202, 7
        %v2204 = vsub.s32 %v2201, %v2203
        %v2205 = vrot.slane %v2191, %v2204
        %v2206 = vcombine.high %v2198, %v2198
        %v2207 = vcombine.high %v2205, %v2205
        %v2208 = vcombine.high %v2112, %v2112
        %v2210 = vunpack.c.l.s4 1983009808
        %v2211 = vunpack.c.0.s8 %v2210
        %v2212 = vlaneseq
        %v2213 = vshrl.u32 %v2212, 7
        %v2214 = vsub.s32 %v2211, %v2213
        %v2215 = vrot.slane %v2112, %v2214
        %v2217 = vunpack.c.l.s4 1983009808
        %v2218 = vunpack.c.0.s8 %v2217
        %v2219 = vlaneseq
        %v2220 = vshrl.u32 %v2219, 7
        %v2221 = vsub.s32 %v2218, %v2220
        %v2222 = vrot.slane %v2208, %v2221
        %v2223 = vcombine.high %v2215, %v2215
        %v2224 = vcombine.high %v2222, %v2222
        %v2225 = vcombine.high %v2113, %v2113
        %v2227 = vunpack.c.l.s4 1983009808
        %v2228 = vunpack.c.0.s8 %v2227
        %v2229 = vlaneseq
        %v2230 = vshrl.u32 %v2229, 7
        %v2231 = vsub.s32 %v2228, %v2230
        %v2232 = vrot.slane %v2113, %v2231
        %v2234 = vunpack.c.l.s4 1983009808
        %v2235 = vunpack.c.0.s8 %v2234
        %v2236 = vlaneseq
        %v2237 = vshrl.u32 %v2236, 7
        %v2238 = vsub.s32 %v2235, %v2237
        %v2239 = vrot.slane %v2225, %v2238
        %v2240 = vcombine.high %v2232, %v2232
        %v2241 = vcombine.high %v2239, %v2239
        %v2242 = vcombine.high %v2114, %v2114
        %v2244 = vunpack.c.l.s4 1983009808
        %v2245 = vunpack.c.0.s8 %v2244
        %v2246 = vlaneseq
        %v2247 = vshrl.u32 %v2246, 7
        %v2248 = vsub.s32 %v2245, %v2247
        %v2249 = vrot.slane %v2114, %v2248
        %v2251 = vunpack.c.l.s4 1983009808
        %v2252 = vunpack.c.0.s8 %v2251
        %v2253 = vlaneseq
        %v2254 = vshrl.u32 %v2253, 7
        %v2255 = vsub.s32 %v2252, %v2254
        %v2256 = vrot.slane %v2242, %v2255
        %v2257 = vcombine.high %v2249, %v2249
        %v2258 = vcombine.high %v2256, %v2256
        %v2259 = vcombine.high %v2115, %v2115
        %v2261 = vunpack.c.l.s4 1983009808
        %v2262 = vunpack.c.0.s8 %v2261
        %v2263 = vlaneseq
        %v2264 = vshrl.u32 %v2263, 7
        %v2265 = vsub.s32 %v2262, %v2264
        %v2266 = vrot.slane %v2115, %v2265
        %v2268 = vunpack.c.l.s4 1983009808
        %v2269 = vunpack.c.0.s8 %v2268
        %v2270 = vlaneseq
        %v2271 = vshrl.u32 %v2270, 7
        %v2272 = vsub.s32 %v2269, %v2271
        %v2273 = vrot.slane %v2259, %v2272
        %v2274 = vcombine.high %v2266, %v2266
        %v2275 = vcombine.high %v2273, %v2273
        %v2276 = vcombine.high %v2116, %v2116
        %v2278 = vunpack.c.l.s4 1983009808
        %v2279 = vunpack.c.0.s8 %v2278
        %v2280 = vlaneseq
        %v2281 = vshrl.u32 %v2280, 7
        %v2282 = vsub.s32 %v2279, %v2281
        %v2283 = vrot.slane %v2116, %v2282
        %v2285 = vunpack.c.l.s4 1983009808
        %v2286 = vunpack.c.0.s8 %v2285
        %v2287 = vlaneseq
        %v2288 = vshrl.u32 %v2287, 7
        %v2289 = vsub.s32 %v2286, %v2288
        %v2290 = vrot.slane %v2276, %v2289
        %v2291 = vcombine.high %v2283, %v2283
        %v2292 = vcombine.high %v2290, %v2290
        %v2293 = vcombine.high %v2117, %v2117
        %v2295 = vunpack.c.l.s4 1983009808
        %v2296 = vunpack.c.0.s8 %v2295
        %v2297 = vlaneseq
        %v2298 = vshrl.u32 %v2297, 7
        %v2299 = vsub.s32 %v2296, %v2298
        %v2300 = vrot.slane %v2117, %v2299
        %v2302 = vunpack.c.l.s4 1983009808
        %v2303 = vunpack.c.0.s8 %v2302
        %v2304 = vlaneseq
        %v2305 = vshrl.u32 %v2304, 7
        %v2306 = vsub.s32 %v2303, %v2305
        %v2307 = vrot.slane %v2293, %v2306
        %v2308 = vcombine.high %v2300, %v2300
        %v2309 = vcombine.high %v2307, %v2307
        %v2310 = vcombine.high %v2118, %v2118
        %v2312 = vunpack.c.l.s4 1983009808
        %v2313 = vunpack.c.0.s8 %v2312
        %v2314 = vlaneseq
        %v2315 = vshrl.u32 %v2314, 7
        %v2316 = vsub.s32 %v2313, %v2315
        %v2317 = vrot.slane %v2118, %v2316
        %v2319 = vunpack.c.l.s4 1983009808
        %v2320 = vunpack.c.0.s8 %v2319
        %v2321 = vlaneseq
        %v2322 = vshrl.u32 %v2321, 7
        %v2323 = vsub.s32 %v2320, %v2322
        %v2324 = vrot.slane %v2310, %v2323
        %v2325 = vcombine.high %v2317, %v2317
        %v2326 = vcombine.high %v2324, %v2324
        %v2327 = vcombine.high %v2119, %v2119
        %v2329 = vunpack.c.l.s4 1983009808
        %v2330 = vunpack.c.0.s8 %v2329
        %v2331 = vlaneseq
        %v2332 = vshrl.u32 %v2331, 7
        %v2333 = vsub.s32 %v2330, %v2332
        %v2334 = vrot.slane %v2119, %v2333
        %v2336 = vunpack.c.l.s4 1983009808
        %v2337 = vunpack.c.0.s8 %v2336
        %v2338 = vlaneseq
        %v2339 = vshrl.u32 %v2338, 7
        %v2340 = vsub.s32 %v2337, %v2339
        %v2341 = vrot.slane %v2327, %v2340
        %v2342 = vcombine.high %v2334, %v2334
        %v2343 = vcombine.high %v2341, %v2341
        %v2344 = vcombine.high %v2120, %v2120
        %v2346 = vunpack.c.l.s4 1983009808
        %v2347 = vunpack.c.0.s8 %v2346
        %v2348 = vlaneseq
        %v2349 = vshrl.u32 %v2348, 7
        %v2350 = vsub.s32 %v2347, %v2349
        %v2351 = vrot.slane %v2120, %v2350
        %v2353 = vunpack.c.l.s4 1983009808
        %v2354 = vunpack.c.0.s8 %v2353
        %v2355 = vlaneseq
        %v2356 = vshrl.u32 %v2355, 7
        %v2357 = vsub.s32 %v2354, %v2356
        %v2358 = vrot.slane %v2344, %v2357
        %v2359 = vcombine.high %v2351, %v2351
        %v2360 = vcombine.high %v2358, %v2358
        %v2361 = vcombine.high %v2121, %v2121
        %v2363 = vunpack.c.l.s4 1983009808
        %v2364 = vunpack.c.0.s8 %v2363
        %v2365 = vlaneseq
        %v2366 = vshrl.u32 %v2365, 7
        %v2367 = vsub.s32 %v2364, %v2366
        %v2368 = vrot.slane %v2121, %v2367
        %v2370 = vunpack.c.l.s4 1983009808
        %v2371 = vunpack.c.0.s8 %v2370
        %v2372 = vlaneseq
        %v2373 = vshrl.u32 %v2372, 7
        %v2374 = vsub.s32 %v2371, %v2373
        %v2375 = vrot.slane %v2361, %v2374
        %v2376 = vcombine.high %v2368, %v2368
        %v2377 = vcombine.high %v2375, %v2375
        %v2378 = vcombine.high %v2122, %v2122
        %v2380 = vunpack.c.l.s4 1983009808
        %v2381 = vunpack.c.0.s8 %v2380
        %v2382 = vlaneseq
        %v2383 = vshrl.u32 %v2382, 7
        %v2384 = vsub.s32 %v2381, %v2383
        %v2385 = vrot.slane %v2122, %v2384
        %v2387 = vunpack.c.l.s4 1983009808
        %v2388 = vunpack.c.0.s8 %v2387
        %v2389 = vlaneseq
        %v2390 = vshrl.u32 %v2389, 7
        %v2391 = vsub.s32 %v2388, %v2390
        %v2392 = vrot.slane %v2378, %v2391
        %v2393 = vcombine.high %v2385, %v2385
        %v2394 = vcombine.high %v2392, %v2392
        %v2395 = vcombine.high %v2123, %v2123
        %v2397 = vunpack.c.l.s4 1983009808
        %v2398 = vunpack.c.0.s8 %v2397
        %v2399 = vlaneseq
        %v2400 = vshrl.u32 %v2399, 7
        %v2401 = vsub.s32 %v2398, %v2400
        %v2402 = vrot.slane %v2123, %v2401
        %v2404 = vunpack.c.l.s4 1983009808
        %v2405 = vunpack.c.0.s8 %v2404
        %v2406 = vlaneseq
        %v2407 = vshrl.u32 %v2406, 7
        %v2408 = vsub.s32 %v2405, %v2407
        %v2409 = vrot.slane %v2395, %v2408
        %v2410 = vcombine.high %v2402, %v2402
        %v2411 = vcombine.high %v2409, %v2409
        %v2412 = vcombine.high %v2124, %v2124
        %v2414 = vunpack.c.l.s4 1983009808
        %v2415 = vunpack.c.0.s8 %v2414
        %v2416 = vlaneseq
        %v2417 = vshrl.u32 %v2416, 7
        %v2418 = vsub.s32 %v2415, %v2417
        %v2419 = vrot.slane %v2124, %v2418
        %v2421 = vunpack.c.l.s4 1983009808
        %v2422 = vunpack.c.0.s8 %v2421
        %v2423 = vlaneseq
        %v2424 = vshrl.u32 %v2423, 7
        %v2425 = vsub.s32 %v2422, %v2424
        %v2426 = vrot.slane %v2412, %v2425
        %v2427 = vcombine.high %v2419, %v2419
        %v2428 = vcombine.high %v2426, %v2426
        %v2429 = vcombine.high %v2125, %v2125
        %v2431 = vunpack.c.l.s4 1983009808
        %v2432 = vunpack.c.0.s8 %v2431
        %v2433 = vlaneseq
        %v2434 = vshrl.u32 %v2433, 7
        %v2435 = vsub.s32 %v2432, %v2434
        %v2436 = vrot.slane %v2125, %v2435
        %v2438 = vunpack.c.l.s4 1983009808
        %v2439 = vunpack.c.0.s8 %v2438
        %v2440 = vlaneseq
        %v2441 = vshrl.u32 %v2440, 7
        %v2442 = vsub.s32 %v2439, %v2441
        %v2443 = vrot.slane %v2429, %v2442
        %v2444 = vcombine.high %v2436, %v2436
        %v2445 = vcombine.high %v2443, %v2443
        %v2446 = vcombine.high %v2126, %v2126
        %v2448 = vunpack.c.l.s4 1983009808
        %v2449 = vunpack.c.0.s8 %v2448
        %v2450 = vlaneseq
        %v2451 = vshrl.u32 %v2450, 7
        %v2452 = vsub.s32 %v2449, %v2451
        %v2453 = vrot.slane %v2126, %v2452
        %v2455 = vunpack.c.l.s4 1983009808
        %v2456 = vunpack.c.0.s8 %v2455
        %v2457 = vlaneseq
        %v2458 = vshrl.u32 %v2457, 7
        %v2459 = vsub.s32 %v2456, %v2458
        %v2460 = vrot.slane %v2446, %v2459
        %v2461 = vcombine.high %v2453, %v2453
        %v2462 = vcombine.high %v2460, %v2460
        %v2463 = vcombine.high %v2127, %v2127
        %v2465 = vunpack.c.l.s4 1983009808
        %v2466 = vunpack.c.0.s8 %v2465
        %v2467 = vlaneseq
        %v2468 = vshrl.u32 %v2467, 7
        %v2469 = vsub.s32 %v2466, %v2468
        %v2470 = vrot.slane %v2127, %v2469
        %v2472 = vunpack.c.l.s4 1983009808
        %v2473 = vunpack.c.0.s8 %v2472
        %v2474 = vlaneseq
        %v2475 = vshrl.u32 %v2474, 7
        %v2476 = vsub.s32 %v2473, %v2475
        %v2477 = vrot.slane %v2463, %v2476
        %v2478 = vcombine.high %v2470, %v2470
        %v2479 = vcombine.high %v2477, %v2477
        %v2480 = vcombine.high %v2128, %v2128
        %v2482 = vunpack.c.l.s4 1983009808
        %v2483 = vunpack.c.0.s8 %v2482
        %v2484 = vlaneseq
        %v2485 = vshrl.u32 %v2484, 7
        %v2486 = vsub.s32 %v2483, %v2485
        %v2487 = vrot.slane %v2128, %v2486
        %v2489 = vunpack.c.l.s4 1983009808
        %v2490 = vunpack.c.0.s8 %v2489
        %v2491 = vlaneseq
        %v2492 = vshrl.u32 %v2491, 7
        %v2493 = vsub.s32 %v2490, %v2492
        %v2494 = vrot.slane %v2480, %v2493
        %v2495 = vcombine.high %v2487, %v2487
        %v2496 = vcombine.high %v2494, %v2494
        %v2497 = vcombine.high %v2129, %v2129
        %v2499 = vunpack.c.l.s4 1983009808
        %v2500 = vunpack.c.0.s8 %v2499
        %v2501 = vlaneseq
        %v2502 = vshrl.u32 %v2501, 7
        %v2503 = vsub.s32 %v2500, %v2502
        %v2504 = vrot.slane %v2129, %v2503
        %v2506 = vunpack.c.l.s4 1983009808
        %v2507 = vunpack.c.0.s8 %v2506
        %v2508 = vlaneseq
        %v2509 = vshrl.u32 %v2508, 7
        %v2510 = vsub.s32 %v2507, %v2509
        %v2511 = vrot.slane %v2497, %v2510
        %v2512 = vcombine.high %v2504, %v2504
        %v2513 = vcombine.high %v2511, %v2511
        %v2514 = vcombine.high %v2130, %v2130
        %v2516 = vunpack.c.l.s4 1983009808
        %v2517 = vunpack.c.0.s8 %v2516
        %v2518 = vlaneseq
        %v2519 = vshrl.u32 %v2518, 7
        %v2520 = vsub.s32 %v2517, %v2519
        %v2521 = vrot.slane %v2130, %v2520
        %v2523 = vunpack.c.l.s4 1983009808
        %v2524 = vunpack.c.0.s8 %v2523
        %v2525 = vlaneseq
        %v2526 = vshrl.u32 %v2525, 7
        %v2527 = vsub.s32 %v2524, %v2526
        %v2528 = vrot.slane %v2514, %v2527
        %v2529 = vcombine.high %v2521, %v2521
        %v2530 = vcombine.high %v2528, %v2528
        %v2531 = vcombine.high %v2131, %v2131
        %v2533 = vunpack.c.l.s4 1983009808
        %v2534 = vunpack.c.0.s8 %v2533
        %v2535 = vlaneseq
        %v2536 = vshrl.u32 %v2535, 7
        %v2537 = vsub.s32 %v2534, %v2536
        %v2538 = vrot.slane %v2131, %v2537
        %v2540 = vunpack.c.l.s4 1983009808
        %v2541 = vunpack.c.0.s8 %v2540
        %v2542 = vlaneseq
        %v2543 = vshrl.u32 %v2542, 7
        %v2544 = vsub.s32 %v2541, %v2543
        %v2545 = vrot.slane %v2531, %v2544
        %v2546 = vcombine.high %v2538, %v2538
        %v2547 = vcombine.high %v2545, %v2545
        %v2548 = vcombine.high %v2132, %v2132
        %v2550 = vunpack.c.l.s4 1983009808
        %v2551 = vunpack.c.0.s8 %v2550
        %v2552 = vlaneseq
        %v2553 = vshrl.u32 %v2552, 7
        %v2554 = vsub.s32 %v2551, %v2553
        %v2555 = vrot.slane %v2132, %v2554
        %v2557 = vunpack.c.l.s4 1983009808
        %v2558 = vunpack.c.0.s8 %v2557
        %v2559 = vlaneseq
        %v2560 = vshrl.u32 %v2559, 7
        %v2561 = vsub.s32 %v2558, %v2560
        %v2562 = vrot.slane %v2548, %v2561
        %v2563 = vcombine.high %v2555, %v2555
        %v2564 = vcombine.high %v2562, %v2562
        %v2565 = vcombine.high %v2133, %v2133
        %v2567 = vunpack.c.l.s4 1983009808
        %v2568 = vunpack.c.0.s8 %v2567
        %v2569 = vlaneseq
        %v2570 = vshrl.u32 %v2569, 7
        %v2571 = vsub.s32 %v2568, %v2570
        %v2572 = vrot.slane %v2133, %v2571
        %v2574 = vunpack.c.l.s4 1983009808
        %v2575 = vunpack.c.0.s8 %v2574
        %v2576 = vlaneseq
        %v2577 = vshrl.u32 %v2576, 7
        %v2578 = vsub.s32 %v2575, %v2577
        %v2579 = vrot.slane %v2565, %v2578
        %v2580 = vcombine.high %v2572, %v2572
        %v2581 = vcombine.high %v2579, %v2579
        %v2582 = vcombine.high %v2134, %v2134
        %v2584 = vunpack.c.l.s4 1983009808
        %v2585 = vunpack.c.0.s8 %v2584
        %v2586 = vlaneseq
        %v2587 = vshrl.u32 %v2586, 7
        %v2588 = vsub.s32 %v2585, %v2587
        %v2589 = vrot.slane %v2134, %v2588
        %v2591 = vunpack.c.l.s4 1983009808
        %v2592 = vunpack.c.0.s8 %v2591
        %v2593 = vlaneseq
        %v2594 = vshrl.u32 %v2593, 7
        %v2595 = vsub.s32 %v2592, %v2594
        %v2596 = vrot.slane %v2582, %v2595
        %v2597 = vcombine.high %v2589, %v2589
        %v2598 = vcombine.high %v2596, %v2596
        %v2599 = vcombine.high %v2135, %v2135
        %v2601 = vunpack.c.l.s4 1983009808
        %v2602 = vunpack.c.0.s8 %v2601
        %v2603 = vlaneseq
        %v2604 = vshrl.u32 %v2603, 7
        %v2605 = vsub.s32 %v2602, %v2604
        %v2606 = vrot.slane %v2135, %v2605
        %v2608 = vunpack.c.l.s4 1983009808
        %v2609 = vunpack.c.0.s8 %v2608
        %v2610 = vlaneseq
        %v2611 = vshrl.u32 %v2610, 7
        %v2612 = vsub.s32 %v2609, %v2611
        %v2613 = vrot.slane %v2599, %v2612
        %v2614 = vcombine.high %v2606, %v2606
        %v2615 = vcombine.high %v2613, %v2613
        %v2616 = vcombine.high %v2136, %v2136
        %v2618 = vunpack.c.l.s4 1983009808
        %v2619 = vunpack.c.0.s8 %v2618
        %v2620 = vlaneseq
        %v2621 = vshrl.u32 %v2620, 7
        %v2622 = vsub.s32 %v2619, %v2621
        %v2623 = vrot.slane %v2136, %v2622
        %v2625 = vunpack.c.l.s4 1983009808
        %v2626 = vunpack.c.0.s8 %v2625
        %v2627 = vlaneseq
        %v2628 = vshrl.u32 %v2627, 7
        %v2629 = vsub.s32 %v2626, %v2628
        %v2630 = vrot.slane %v2616, %v2629
        %v2631 = vcombine.high %v2623, %v2623
        %v2632 = vcombine.high %v2630, %v2630
        %v2633 = vcombine.high %v2137, %v2137
        %v2635 = vunpack.c.l.s4 1983009808
        %v2636 = vunpack.c.0.s8 %v2635
        %v2637 = vlaneseq
        %v2638 = vshrl.u32 %v2637, 7
        %v2639 = vsub.s32 %v2636, %v2638
        %v2640 = vrot.slane %v2137, %v2639
        %v2642 = vunpack.c.l.s4 1983009808
        %v2643 = vunpack.c.0.s8 %v2642
        %v2644 = vlaneseq
        %v2645 = vshrl.u32 %v2644, 7
        %v2646 = vsub.s32 %v2643, %v2645
        %v2647 = vrot.slane %v2633, %v2646
        %v2648 = vcombine.high %v2640, %v2640
        %v2649 = vcombine.high %v2647, %v2647
        %v2650 = vcombine.high %v2138, %v2138
        %v2652 = vunpack.c.l.s4 1983009808
        %v2653 = vunpack.c.0.s8 %v2652
        %v2654 = vlaneseq
        %v2655 = vshrl.u32 %v2654, 7
        %v2656 = vsub.s32 %v2653, %v2655
        %v2657 = vrot.slane %v2138, %v2656
        %v2659 = vunpack.c.l.s4 1983009808
        %v2660 = vunpack.c.0.s8 %v2659
        %v2661 = vlaneseq
        %v2662 = vshrl.u32 %v2661, 7
        %v2663 = vsub.s32 %v2660, %v2662
        %v2664 = vrot.slane %v2650, %v2663
        %v2665 = vcombine.high %v2657, %v2657
        %v2666 = vcombine.high %v2664, %v2664
        %v2667 = vcombine.high %v2139, %v2139
        %v2669 = vunpack.c.l.s4 1983009808
        %v2670 = vunpack.c.0.s8 %v2669
        %v2671 = vlaneseq
        %v2672 = vshrl.u32 %v2671, 7
        %v2673 = vsub.s32 %v2670, %v2672
        %v2674 = vrot.slane %v2139, %v2673
        %v2676 = vunpack.c.l.s4 1983009808
        %v2677 = vunpack.c.0.s8 %v2676
        %v2678 = vlaneseq
        %v2679 = vshrl.u32 %v2678, 7
        %v2680 = vsub.s32 %v2677, %v2679
        %v2681 = vrot.slane %v2667, %v2680
        %v2682 = vcombine.high %v2674, %v2674
        %v2683 = vcombine.high %v2681, %v2681
        %v2684 = vcombine.high %v2140, %v2140
        %v2686 = vunpack.c.l.s4 1983009808
        %v2687 = vunpack.c.0.s8 %v2686
        %v2688 = vlaneseq
        %v2689 = vshrl.u32 %v2688, 7
        %v2690 = vsub.s32 %v2687, %v2689
        %v2691 = vrot.slane %v2140, %v2690
        %v2693 = vunpack.c.l.s4 1983009808
        %v2694 = vunpack.c.0.s8 %v2693
        %v2695 = vlaneseq
        %v2696 = vshrl.u32 %v2695, 7
        %v2697 = vsub.s32 %v2694, %v2696
        %v2698 = vrot.slane %v2684, %v2697
        %v2699 = vcombine.high %v2691, %v2691
        %v2700 = vcombine.high %v2698, %v2698
        %v2701 = vcombine.high %v2141, %v2141
        %v2703 = vunpack.c.l.s4 1983009808
        %v2704 = vunpack.c.0.s8 %v2703
        %v2705 = vlaneseq
        %v2706 = vshrl.u32 %v2705, 7
        %v2707 = vsub.s32 %v2704, %v2706
        %v2708 = vrot.slane %v2141, %v2707
        %v2710 = vunpack.c.l.s4 1983009808
        %v2711 = vunpack.c.0.s8 %v2710
        %v2712 = vlaneseq
        %v2713 = vshrl.u32 %v2712, 7
        %v2714 = vsub.s32 %v2711, %v2713
        %v2715 = vrot.slane %v2701, %v2714
        %v2716 = vcombine.high %v2708, %v2708
        %v2717 = vcombine.high %v2715, %v2715
        %v2718 = vcombine.low %v2181, %v2189
        %v2720 = vunpack.c.l.s4 1983009808
        %v2721 = vunpack.c.0.s8 %v2720
        %v2722 = vlaneseq
        %v2723 = vshrl.u32 %v2722, 7
        %v2724 = vsub.s32 %v2721, %v2723
        %v2725 = vrot.slane %v2718, %v2724
        %v2726 = vcombine.low %v2188, %v2190
        %v2728 = vunpack.c.l.s4 1983009808
        %v2729 = vunpack.c.0.s8 %v2728
        %v2730 = vlaneseq
        %v2731 = vshrl.u32 %v2730, 7
        %v2732 = vsub.s32 %v2729, %v2731
        %v2733 = vrot.slane %v2726, %v2732
        %v2734 = vcombine.low %v2198, %v2206
        %v2736 = vunpack.c.l.s4 1983009808
        %v2737 = vunpack.c.0.s8 %v2736
        %v2738 = vlaneseq
        %v2739 = vshrl.u32 %v2738, 7
        %v2740 = vsub.s32 %v2737, %v2739
        %v2741 = vrot.slane %v2734, %v2740
        %v2742 = vcombine.low %v2205, %v2207
        %v2744 = vunpack.c.l.s4 1983009808
        %v2745 = vunpack.c.0.s8 %v2744
        %v2746 = vlaneseq
        %v2747 = vshrl.u32 %v2746, 7
        %v2748 = vsub.s32 %v2745, %v2747
        %v2749 = vrot.slane %v2742, %v2748
        %v2750 = vcombine.low %v2215, %v2223
        %v2752 = vunpack.c.l.s4 1983009808
        %v2753 = vunpack.c.0.s8 %v2752
        %v2754 = vlaneseq
        %v2755 = vshrl.u32 %v2754, 7
        %v2756 = vsub.s32 %v2753, %v2755
        %v2757 = vrot.slane %v2750, %v2756
        %v2758 = vcombine.low %v2222, %v2224
        %v2760 = vunpack.c.l.s4 1983009808
        %v2761 = vunpack.c.0.s8 %v2760
        %v2762 = vlaneseq
        %v2763 = vshrl.u32 %v2762, 7
        %v2764 = vsub.s32 %v2761, %v2763
        %v2765 = vrot.slane %v2758, %v2764
        %v2766 = vcombine.low %v2232, %v2240
        %v2768 = vunpack.c.l.s4 1983009808
        %v2769 = vunpack.c.0.s8 %v2768
        %v2770 = vlaneseq
        %v2771 = vshrl.u32 %v2770, 7
        %v2772 = vsub.s32 %v2769, %v2771
        %v2773 = vrot.slane %v2766, %v2772
        %v2774 = vcombine.low %v2239, %v2241
        %v2776 = vunpack.c.l.s4 1983009808
        %v2777 = vunpack.c.0.s8 %v2776
        %v2778 = vlaneseq
        %v2779 = vshrl.u32 %v2778, 7
        %v2780 = vsub.s32 %v2777, %v2779
        %v2781 = vrot.slane %v2774, %v2780
        %v2782 = vcombine.low %v2249, %v2257
        %v2784 = vunpack.c.l.s4 1983009808
        %v2785 = vunpack.c.0.s8 %v2784
        %v2786 = vlaneseq
        %v2787 = vshrl.u32 %v2786, 7
        %v2788 = vsub.s32 %v2785, %v2787
        %v2789 = vrot.slane %v2782, %v2788
        %v2790 = vcombine.low %v2256, %v2258
        %v2792 = vunpack.c.l.s4 1983009808
        %v2793 = vunpack.c.0.s8 %v2792
        %v2794 = vlaneseq
        %v2795 = vshrl.u32 %v2794, 7
        %v2796 = vsub.s32 %v2793, %v2795
        %v2797 = vrot.slane %v2790, %v2796
        %v2798 = vcombine.low %v2266, %v2274
        %v2800 = vunpack.c.l.s4 1983009808
        %v2801 = vunpack.c.0.s8 %v2800
        %v2802 = vlaneseq
        %v2803 = vshrl.u32 %v2802, 7
        %v2804 = vsub.s32 %v2801, %v2803
        %v2805 = vrot.slane %v2798, %v2804
        %v2806 = vcombine.low %v2273, %v2275
        %v2808 = vunpack.c.l.s4 1983009808
        %v2809 = vunpack.c.0.s8 %v2808
        %v2810 = vlaneseq
        %v2811 = vshrl.u32 %v2810, 7
        %v2812 = vsub.s32 %v2809, %v2811
        %v2813 = vrot.slane %v2806, %v2812
        %v2814 = vcombine.low %v2283, %v2291
        %v2816 = vunpack.c.l.s4 1983009808
        %v2817 = vunpack.c.0.s8 %v2816
        %v2818 = vlaneseq
        %v2819 = vshrl.u32 %v2818, 7
        %v2820 = vsub.s32 %v2817, %v2819
        %v2821 = vrot.slane %v2814, %v2820
        %v2822 = vcombine.low %v2290, %v2292
        %v2824 = vunpack.c.l.s4 1983009808
        %v2825 = vunpack.c.0.s8 %v2824
        %v2826 = vlaneseq
        %v2827 = vshrl.u32 %v2826, 7
        %v2828 = vsub.s32 %v2825, %v2827
        %v2829 = vrot.slane %v2822, %v2828
        %v2830 = vcombine.low %v2300, %v2308
        %v2832 = vunpack.c.l.s4 1983009808
        %v2833 = vunpack.c.0.s8 %v2832
        %v2834 = vlaneseq
        %v2835 = vshrl.u32 %v2834, 7
        %v2836 = vsub.s32 %v2833, %v2835
        %v2837 = vrot.slane %v2830, %v2836
        %v2838 = vcombine.low %v2307, %v2309
        %v2840 = vunpack.c.l.s4 1983009808
        %v2841 = vunpack.c.0.s8 %v2840
        %v2842 = vlaneseq
        %v2843 = vshrl.u32 %v2842, 7
        %v2844 = vsub.s32 %v2841, %v2843
        %v2845 = vrot.slane %v2838, %v2844
        %v2846 = vcombine.low %v2317, %v2325
        %v2848 = vunpack.c.l.s4 1983009808
        %v2849 = vunpack.c.0.s8 %v2848
        %v2850 = vlaneseq
        %v2851 = vshrl.u32 %v2850, 7
        %v2852 = vsub.s32 %v2849, %v2851
        %v2853 = vrot.slane %v2846, %v2852
        %v2854 = vcombine.low %v2324, %v2326
        %v2856 = vunpack.c.l.s4 1983009808
        %v2857 = vunpack.c.0.s8 %v2856
        %v2858 = vlaneseq
        %v2859 = vshrl.u32 %v2858, 7
        %v2860 = vsub.s32 %v2857, %v2859
        %v2861 = vrot.slane %v2854, %v2860
        %v2862 = vcombine.low %v2334, %v2342
        %v2864 = vunpack.c.l.s4 1983009808
        %v2865 = vunpack.c.0.s8 %v2864
        %v2866 = vlaneseq
        %v2867 = vshrl.u32 %v2866, 7
        %v2868 = vsub.s32 %v2865, %v2867
        %v2869 = vrot.slane %v2862, %v2868
        %v2870 = vcombine.low %v2341, %v2343
        %v2872 = vunpack.c.l.s4 1983009808
        %v2873 = vunpack.c.0.s8 %v2872
        %v2874 = vlaneseq
        %v2875 = vshrl.u32 %v2874, 7
        %v2876 = vsub.s32 %v2873, %v2875
        %v2877 = vrot.slane %v2870, %v2876
        %v2878 = vcombine.low %v2351, %v2359
        %v2880 = vunpack.c.l.s4 1983009808
        %v2881 = vunpack.c.0.s8 %v2880
        %v2882 = vlaneseq
        %v2883 = vshrl.u32 %v2882, 7
        %v2884 = vsub.s32 %v2881, %v2883
        %v2885 = vrot.slane %v2878, %v2884
        %v2886 = vcombine.low %v2358, %v2360
        %v2888 = vunpack.c.l.s4 1983009808
        %v2889 = vunpack.c.0.s8 %v2888
        %v2890 = vlaneseq
        %v2891 = vshrl.u32 %v2890, 7
        %v2892 = vsub.s32 %v2889, %v2891
        %v2893 = vrot.slane %v2886, %v2892
        %v2894 = vcombine.low %v2368, %v2376
        %v2896 = vunpack.c.l.s4 1983009808
        %v2897 = vunpack.c.0.s8 %v2896
        %v2898 = vlaneseq
        %v2899 = vshrl.u32 %v2898, 7
        %v2900 = vsub.s32 %v2897, %v2899
        %v2901 = vrot.slane %v2894, %v2900
        %v2902 = vcombine.low %v2375, %v2377
        %v2904 = vunpack.c.l.s4 1983009808
        %v2905 = vunpack.c.0.s8 %v2904
        %v2906 = vlaneseq
        %v2907 = vshrl.u32 %v2906, 7
        %v2908 = vsub.s32 %v2905, %v2907
        %v2909 = vrot.slane %v2902, %v2908
        %v2910 = vcombine.low %v2385, %v2393
        %v2912 = vunpack.c.l.s4 1983009808
        %v2913 = vunpack.c.0.s8 %v2912
        %v2914 = vlaneseq
        %v2915 = vshrl.u32 %v2914, 7
        %v2916 = vsub.s32 %v2913, %v2915
        %v2917 = vrot.slane %v2910, %v2916
        %v2918 = vcombine.low %v2392, %v2394
        %v2920 = vunpack.c.l.s4 1983009808
        %v2921 = vunpack.c.0.s8 %v2920
        %v2922 = vlaneseq
        %v2923 = vshrl.u32 %v2922, 7
        %v2924 = vsub.s32 %v2921, %v2923
        %v2925 = vrot.slane %v2918, %v2924
        %v2926 = vcombine.low %v2402, %v2410
        %v2928 = vunpack.c.l.s4 1983009808
        %v2929 = vunpack.c.0.s8 %v2928
        %v2930 = vlaneseq
        %v2931 = vshrl.u32 %v2930, 7
        %v2932 = vsub.s32 %v2929, %v2931
        %v2933 = vrot.slane %v2926, %v2932
        %v2934 = vcombine.low %v2409, %v2411
        %v2936 = vunpack.c.l.s4 1983009808
        %v2937 = vunpack.c.0.s8 %v2936
        %v2938 = vlaneseq
        %v2939 = vshrl.u32 %v2938, 7
        %v2940 = vsub.s32 %v2937, %v2939
        %v2941 = vrot.slane %v2934, %v2940
        %v2942 = vcombine.low %v2419, %v2427
        %v2944 = vunpack.c.l.s4 1983009808
        %v2945 = vunpack.c.0.s8 %v2944
        %v2946 = vlaneseq
        %v2947 = vshrl.u32 %v2946, 7
        %v2948 = vsub.s32 %v2945, %v2947
        %v2949 = vrot.slane %v2942, %v2948
        %v2950 = vcombine.low %v2426, %v2428
        %v2952 = vunpack.c.l.s4 1983009808
        %v2953 = vunpack.c.0.s8 %v2952
        %v2954 = vlaneseq
        %v2955 = vshrl.u32 %v2954, 7
        %v2956 = vsub.s32 %v2953, %v2955
        %v2957 = vrot.slane %v2950, %v2956
        %v2958 = vcombine.low %v2436, %v2444
        %v2960 = vunpack.c.l.s4 1983009808
        %v2961 = vunpack.c.0.s8 %v2960
        %v2962 = vlaneseq
        %v2963 = vshrl.u32 %v2962, 7
        %v2964 = vsub.s32 %v2961, %v2963
        %v2965 = vrot.slane %v2958, %v2964
        %v2966 = vcombine.low %v2443, %v2445
        %v2968 = vunpack.c.l.s4 1983009808
        %v2969 = vunpack.c.0.s8 %v2968
        %v2970 = vlaneseq
        %v2971 = vshrl.u32 %v2970, 7
        %v2972 = vsub.s32 %v2969, %v2971
        %v2973 = vrot.slane %v2966, %v2972
        %v2974 = vcombine.low %v2453, %v2461
        %v2976 = vunpack.c.l.s4 1983009808
        %v2977 = vunpack.c.0.s8 %v2976
        %v2978 = vlaneseq
        %v2979 = vshrl.u32 %v2978, 7
        %v2980 = vsub.s32 %v2977, %v2979
        %v2981 = vrot.slane %v2974, %v2980
        %v2982 = vcombine.low %v2460, %v2462
        %v2984 = vunpack.c.l.s4 1983009808
        %v2985 = vunpack.c.0.s8 %v2984
        %v2986 = vlaneseq
        %v2987 = vshrl.u32 %v2986, 7
        %v2988 = vsub.s32 %v2985, %v2987
        %v2989 = vrot.slane %v2982, %v2988
        %v2990 = vcombine.low %v2470, %v2478
        %v2992 = vunpack.c.l.s4 1983009808
        %v2993 = vunpack.c.0.s8 %v2992
        %v2994 = vlaneseq
        %v2995 = vshrl.u32 %v2994, 7
        %v2996 = vsub.s32 %v2993, %v2995
        %v2997 = vrot.slane %v2990, %v2996
        %v2998 = vcombine.low %v2477, %v2479
        %v3000 = vunpack.c.l.s4 1983009808
        %v3001 = vunpack.c.0.s8 %v3000
        %v3002 = vlaneseq
        %v3003 = vshrl.u32 %v3002, 7
        %v3004 = vsub.s32 %v3001, %v3003
        %v3005 = vrot.slane %v2998, %v3004
        %v3006 = vcombine.low %v2487, %v2495
        %v3008 = vunpack.c.l.s4 1983009808
        %v3009 = vunpack.c.0.s8 %v3008
        %v3010 = vlaneseq
        %v3011 = vshrl.u32 %v3010, 7
        %v3012 = vsub.s32 %v3009, %v3011
        %v3013 = vrot.slane %v3006, %v3012
        %v3014 = vcombine.low %v2494, %v2496
        %v3016 = vunpack.c.l.s4 1983009808
        %v3017 = vunpack.c.0.s8 %v3016
        %v3018 = vlaneseq
        %v3019 = vshrl.u32 %v3018, 7
        %v3020 = vsub.s32 %v3017, %v3019
        %v3021 = vrot.slane %v3014, %v3020
        %v3022 = vcombine.low %v2504, %v2512
        %v3024 = vunpack.c.l.s4 1983009808
        %v3025 = vunpack.c.0.s8 %v3024
        %v3026 = vlaneseq
        %v3027 = vshrl.u32 %v3026, 7
        %v3028 = vsub.s32 %v3025, %v3027
        %v3029 = vrot.slane %v3022, %v3028
        %v3030 = vcombine.low %v2511, %v2513
        %v3032 = vunpack.c.l.s4 1983009808
        %v3033 = vunpack.c.0.s8 %v3032
        %v3034 = vlaneseq
        %v3035 = vshrl.u32 %v3034, 7
        %v3036 = vsub.s32 %v3033, %v3035
        %v3037 = vrot.slane %v3030, %v3036
        %v3038 = vcombine.low %v2521, %v2529
        %v3040 = vunpack.c.l.s4 1983009808
        %v3041 = vunpack.c.0.s8 %v3040
        %v3042 = vlaneseq
        %v3043 = vshrl.u32 %v3042, 7
        %v3044 = vsub.s32 %v3041, %v3043
        %v3045 = vrot.slane %v3038, %v3044
        %v3046 = vcombine.low %v2528, %v2530
        %v3048 = vunpack.c.l.s4 1983009808
        %v3049 = vunpack.c.0.s8 %v3048
        %v3050 = vlaneseq
        %v3051 = vshrl.u32 %v3050, 7
        %v3052 = vsub.s32 %v3049, %v3051
        %v3053 = vrot.slane %v3046, %v3052
        %v3054 = vcombine.low %v2538, %v2546
        %v3056 = vunpack.c.l.s4 1983009808
        %v3057 = vunpack.c.0.s8 %v3056
        %v3058 = vlaneseq
        %v3059 = vshrl.u32 %v3058, 7
        %v3060 = vsub.s32 %v3057, %v3059
        %v3061 = vrot.slane %v3054, %v3060
        %v3062 = vcombine.low %v2545, %v2547
        %v3064 = vunpack.c.l.s4 1983009808
        %v3065 = vunpack.c.0.s8 %v3064
        %v3066 = vlaneseq
        %v3067 = vshrl.u32 %v3066, 7
        %v3068 = vsub.s32 %v3065, %v3067
        %v3069 = vrot.slane %v3062, %v3068
        %v3070 = vcombine.low %v2555, %v2563
        %v3072 = vunpack.c.l.s4 1983009808
        %v3073 = vunpack.c.0.s8 %v3072
        %v3074 = vlaneseq
        %v3075 = vshrl.u32 %v3074, 7
        %v3076 = vsub.s32 %v3073, %v3075
        %v3077 = vrot.slane %v3070, %v3076
        %v3078 = vcombine.low %v2562, %v2564
        %v3080 = vunpack.c.l.s4 1983009808
        %v3081 = vunpack.c.0.s8 %v3080
        %v3082 = vlaneseq
        %v3083 = vshrl.u32 %v3082, 7
        %v3084 = vsub.s32 %v3081, %v3083
        %v3085 = vrot.slane %v3078, %v3084
        %v3086 = vcombine.low %v2572, %v2580
        %v3088 = vunpack.c.l.s4 1983009808
        %v3089 = vunpack.c.0.s8 %v3088
        %v3090 = vlaneseq
        %v3091 = vshrl.u32 %v3090, 7
        %v3092 = vsub.s32 %v3089, %v3091
        %v3093 = vrot.slane %v3086, %v3092
        %v3094 = vcombine.low %v2579, %v2581
        %v3096 = vunpack.c.l.s4 1983009808
        %v3097 = vunpack.c.0.s8 %v3096
        %v3098 = vlaneseq
        %v3099 = vshrl.u32 %v3098, 7
        %v3100 = vsub.s32 %v3097, %v3099
        %v3101 = vrot.slane %v3094, %v3100
        %v3102 = vcombine.low %v2589, %v2597
        %v3104 = vunpack.c.l.s4 1983009808
        %v3105 = vunpack.c.0.s8 %v3104
        %v3106 = vlaneseq
        %v3107 = vshrl.u32 %v3106, 7
        %v3108 = vsub.s32 %v3105, %v3107
        %v3109 = vrot.slane %v3102, %v3108
        %v3110 = vcombine.low %v2596, %v2598
        %v3112 = vunpack.c.l.s4 1983009808
        %v3113 = vunpack.c.0.s8 %v3112
        %v3114 = vlaneseq
        %v3115 = vshrl.u32 %v3114, 7
        %v3116 = vsub.s32 %v3113, %v3115
        %v3117 = vrot.slane %v3110, %v3116
        %v3118 = vcombine.low %v2606, %v2614
        %v3120 = vunpack.c.l.s4 1983009808
        %v3121 = vunpack.c.0.s8 %v3120
        %v3122 = vlaneseq
        %v3123 = vshrl.u32 %v3122, 7
        %v3124 = vsub.s32 %v3121, %v3123
        %v3125 = vrot.slane %v3118, %v3124
        %v3126 = vcombine.low %v2613, %v2615
        %v3128 = vunpack.c.l.s4 1983009808
        %v3129 = vunpack.c.0.s8 %v3128
        %v3130 = vlaneseq
        %v3131 = vshrl.u32 %v3130, 7
        %v3132 = vsub.s32 %v3129, %v3131
        %v3133 = vrot.slane %v3126, %v3132
        %v3134 = vcombine.low %v2623, %v2631
        %v3136 = vunpack.c.l.s4 1983009808
        %v3137 = vunpack.c.0.s8 %v3136
        %v3138 = vlaneseq
        %v3139 = vshrl.u32 %v3138, 7
        %v3140 = vsub.s32 %v3137, %v3139
        %v3141 = vrot.slane %v3134, %v3140
        %v3142 = vcombine.low %v2630, %v2632
        %v3144 = vunpack.c.l.s4 1983009808
        %v3145 = vunpack.c.0.s8 %v3144
        %v3146 = vlaneseq
        %v3147 = vshrl.u32 %v3146, 7
        %v3148 = vsub.s32 %v3145, %v3147
        %v3149 = vrot.slane %v3142, %v3148
        %v3150 = vcombine.low %v2640, %v2648
        %v3152 = vunpack.c.l.s4 1983009808
        %v3153 = vunpack.c.0.s8 %v3152
        %v3154 = vlaneseq
        %v3155 = vshrl.u32 %v3154, 7
        %v3156 = vsub.s32 %v3153, %v3155
        %v3157 = vrot.slane %v3150, %v3156
        %v3158 = vcombine.low %v2647, %v2649
        %v3160 = vunpack.c.l.s4 1983009808
        %v3161 = vunpack.c.0.s8 %v3160
        %v3162 = vlaneseq
        %v3163 = vshrl.u32 %v3162, 7
        %v3164 = vsub.s32 %v3161, %v3163
        %v3165 = vrot.slane %v3158, %v3164
        %v3166 = vcombine.low %v2657, %v2665
        %v3168 = vunpack.c.l.s4 1983009808
        %v3169 = vunpack.c.0.s8 %v3168
        %v3170 = vlaneseq
        %v3171 = vshrl.u32 %v3170, 7
        %v3172 = vsub.s32 %v3169, %v3171
        %v3173 = vrot.slane %v3166, %v3172
        %v3174 = vcombine.low %v2664, %v2666
        %v3176 = vunpack.c.l.s4 1983009808
        %v3177 = vunpack.c.0.s8 %v3176
        %v3178 = vlaneseq
        %v3179 = vshrl.u32 %v3178, 7
        %v3180 = vsub.s32 %v3177, %v3179
        %v3181 = vrot.slane %v3174, %v3180
        %v3182 = vcombine.low %v2674, %v2682
        %v3184 = vunpack.c.l.s4 1983009808
        %v3185 = vunpack.c.0.s8 %v3184
        %v3186 = vlaneseq
        %v3187 = vshrl.u32 %v3186, 7
        %v3188 = vsub.s32 %v3185, %v3187
        %v3189 = vrot.slane %v3182, %v3188
        %v3190 = vcombine.low %v2681, %v2683
        %v3192 = vunpack.c.l.s4 1983009808
        %v3193 = vunpack.c.0.s8 %v3192
        %v3194 = vlaneseq
        %v3195 = vshrl.u32 %v3194, 7
        %v3196 = vsub.s32 %v3193, %v3195
        %v3197 = vrot.slane %v3190, %v3196
        %v3198 = vcombine.low %v2691, %v2699
        %v3200 = vunpack.c.l.s4 1983009808
        %v3201 = vunpack.c.0.s8 %v3200
        %v3202 = vlaneseq
        %v3203 = vshrl.u32 %v3202, 7
        %v3204 = vsub.s32 %v3201, %v3203
        %v3205 = vrot.slane %v3198, %v3204
        %v3206 = vcombine.low %v2698, %v2700
        %v3208 = vunpack.c.l.s4 1983009808
        %v3209 = vunpack.c.0.s8 %v3208
        %v3210 = vlaneseq
        %v3211 = vshrl.u32 %v3210, 7
        %v3212 = vsub.s32 %v3209, %v3211
        %v3213 = vrot.slane %v3206, %v3212
        %v3214 = vcombine.low %v2708, %v2716
        %v3216 = vunpack.c.l.s4 1983009808
        %v3217 = vunpack.c.0.s8 %v3216
        %v3218 = vlaneseq
        %v3219 = vshrl.u32 %v3218, 7
        %v3220 = vsub.s32 %v3217, %v3219
        %v3221 = vrot.slane %v3214, %v3220
        %v3222 = vcombine.low %v2715, %v2717
        %v3224 = vunpack.c.l.s4 1983009808
        %v3225 = vunpack.c.0.s8 %v3224
        %v3226 = vlaneseq
        %v3227 = vshrl.u32 %v3226, 7
        %v3228 = vsub.s32 %v3225, %v3227
        %v3229 = vrot.slane %v3222, %v3228
        %v3230 = vunpack.c.l.b16 %v2725
        %v3231 = vunpack.c.l.b16 %v2733
        %v3232 = vunpack.c.l.b16 %v2741
        %v3233 = vunpack.c.l.b16 %v2749
        %v3234 = vunpack.c.l.b16 %v2757
        %v3235 = vunpack.c.l.b16 %v2765
        %v3236 = vunpack.c.l.b16 %v2773
        %v3237 = vunpack.c.l.b16 %v2781
        %v3238 = vunpack.c.l.b16 %v2789
        %v3239 = vunpack.c.l.b16 %v2797
        %v3240 = vunpack.c.l.b16 %v2805
        %v3241 = vunpack.c.l.b16 %v2813
        %v3242 = vunpack.c.l.b16 %v2821
        %v3243 = vunpack.c.l.b16 %v2829
        %v3244 = vunpack.c.l.b16 %v2837
        %v3245 = vunpack.c.l.b16 %v2845
        %v3246 = vunpack.c.l.b16 %v2853
        %v3247 = vunpack.c.l.b16 %v2861
        %v3248 = vunpack.c.l.b16 %v2869
        %v3249 = vunpack.c.l.b16 %v2877
        %v3250 = vunpack.c.l.b16 %v2885
        %v3251 = vunpack.c.l.b16 %v2893
        %v3252 = vunpack.c.l.b16 %v2901
        %v3253 = vunpack.c.l.b16 %v2909
        %v3254 = vunpack.c.l.b16 %v2917
        %v3255 = vunpack.c.l.b16 %v2925
        %v3256 = vunpack.c.l.b16 %v2933
        %v3257 = vunpack.c.l.b16 %v2941
        %v3258 = vunpack.c.l.b16 %v2949
        %v3259 = vunpack.c.l.b16 %v2957
        %v3260 = vunpack.c.l.b16 %v2965
        %v3261 = vunpack.c.l.b16 %v2973
        %v3262 = vunpack.c.l.b16 %v2981
        %v3263 = vunpack.c.l.b16 %v2989
        %v3264 = vunpack.c.l.b16 %v2997
        %v3265 = vunpack.c.l.b16 %v3005
        %v3266 = vunpack.c.l.b16 %v3013
        %v3267 = vunpack.c.l.b16 %v3021
        %v3268 = vunpack.c.l.b16 %v3029
        %v3269 = vunpack.c.l.b16 %v3037
        %v3270 = vunpack.c.l.b16 %v3045
        %v3271 = vunpack.c.l.b16 %v3053
        %v3272 = vunpack.c.l.b16 %v3061
        %v3273 = vunpack.c.l.b16 %v3069
        %v3274 = vunpack.c.l.b16 %v3077
        %v3275 = vunpack.c.l.b16 %v3085
        %v3276 = vunpack.c.l.b16 %v3093
        %v3277 = vunpack.c.l.b16 %v3101
        %v3278 = vunpack.c.l.b16 %v3109
        %v3279 = vunpack.c.l.b16 %v3117
        %v3280 = vunpack.c.l.b16 %v3125
        %v3281 = vunpack.c.l.b16 %v3133
        %v3282 = vunpack.c.l.b16 %v3141
        %v3283 = vunpack.c.l.b16 %v3149
        %v3284 = vunpack.c.l.b16 %v3157
        %v3285 = vunpack.c.l.b16 %v3165
        %v3286 = vunpack.c.l.b16 %v3173
        %v3287 = vunpack.c.l.b16 %v3181
        %v3288 = vunpack.c.l.b16 %v3189
        %v3289 = vunpack.c.l.b16 %v3197
        %v3290 = vunpack.c.l.b16 %v3205
        %v3291 = vunpack.c.l.b16 %v3213
        %v3292 = vunpack.c.l.b16 %v3221
        %v3293 = vunpack.c.l.b16 %v3229
        %3294 = vset.pattern.permute.xlu0 0
        %3295 = vperm.xlu0 %3294, %v3230
        %v3296 = vpop.permute.xlu0 %3295
        %3297 = vset.pattern.permute.xlu0 0
        %3298 = vperm.xlu0 %3297, %v3231
        %v3299 = vpop.permute.xlu0 %3298
        %3300 = vset.pattern.permute.xlu0 0
        %3301 = vperm.xlu0 %3300, %v3232
        %v3302 = vpop.permute.xlu0 %3301
        %3303 = vset.pattern.permute.xlu0 0
        %3304 = vperm.xlu0 %3303, %v3233
        %v3305 = vpop.permute.xlu0 %3304
        %3306 = vset.pattern.permute.xlu0 0
        %3307 = vperm.xlu0 %3306, %v3234
        %v3308 = vpop.permute.xlu0 %3307
        %3309 = vset.pattern.permute.xlu0 0
        %3310 = vperm.xlu0 %3309, %v3235
        %v3311 = vpop.permute.xlu0 %3310
        %3312 = vset.pattern.permute.xlu0 0
        %3313 = vperm.xlu0 %3312, %v3236
        %v3314 = vpop.permute.xlu0 %3313
        %3315 = vset.pattern.permute.xlu0 0
        %3316 = vperm.xlu0 %3315, %v3237
        %v3317 = vpop.permute.xlu0 %3316
        %3318 = vset.pattern.permute.xlu0 0
        %3319 = vperm.xlu0 %3318, %v3238
        %v3320 = vpop.permute.xlu0 %3319
        %3321 = vset.pattern.permute.xlu0 0
        %3322 = vperm.xlu0 %3321, %v3239
        %v3323 = vpop.permute.xlu0 %3322
        %3324 = vset.pattern.permute.xlu0 0
        %3325 = vperm.xlu0 %3324, %v3240
        %v3326 = vpop.permute.xlu0 %3325
        %3327 = vset.pattern.permute.xlu0 0
        %3328 = vperm.xlu0 %3327, %v3241
        %v3329 = vpop.permute.xlu0 %3328
        %3330 = vset.pattern.permute.xlu0 0
        %3331 = vperm.xlu0 %3330, %v3242
        %v3332 = vpop.permute.xlu0 %3331
        %3333 = vset.pattern.permute.xlu0 0
        %3334 = vperm.xlu0 %3333, %v3243
        %v3335 = vpop.permute.xlu0 %3334
        %3336 = vset.pattern.permute.xlu0 0
        %3337 = vperm.xlu0 %3336, %v3244
        %v3338 = vpop.permute.xlu0 %3337
        %3339 = vset.pattern.permute.xlu0 0
        %3340 = vperm.xlu0 %3339, %v3245
        %v3341 = vpop.permute.xlu0 %3340
        %3342 = vset.pattern.permute.xlu0 0
        %3343 = vperm.xlu0 %3342, %v3246
        %v3344 = vpop.permute.xlu0 %3343
        %3345 = vset.pattern.permute.xlu0 0
        %3346 = vperm.xlu0 %3345, %v3247
        %v3347 = vpop.permute.xlu0 %3346
        %3348 = vset.pattern.permute.xlu0 0
        %3349 = vperm.xlu0 %3348, %v3248
        %v3350 = vpop.permute.xlu0 %3349
        %3351 = vset.pattern.permute.xlu0 0
        %3352 = vperm.xlu0 %3351, %v3249
        %v3353 = vpop.permute.xlu0 %3352
        %3354 = vset.pattern.permute.xlu0 0
        %3355 = vperm.xlu0 %3354, %v3250
        %v3356 = vpop.permute.xlu0 %3355
        %3357 = vset.pattern.permute.xlu0 0
        %3358 = vperm.xlu0 %3357, %v3251
        %v3359 = vpop.permute.xlu0 %3358
        %3360 = vset.pattern.permute.xlu0 0
        %3361 = vperm.xlu0 %3360, %v3252
        %v3362 = vpop.permute.xlu0 %3361
        %3363 = vset.pattern.permute.xlu0 0
        %3364 = vperm.xlu0 %3363, %v3253
        %v3365 = vpop.permute.xlu0 %3364
        %3366 = vset.pattern.permute.xlu0 0
        %3367 = vperm.xlu0 %3366, %v3254
        %v3368 = vpop.permute.xlu0 %3367
        %3369 = vset.pattern.permute.xlu0 0
        %3370 = vperm.xlu0 %3369, %v3255
        %v3371 = vpop.permute.xlu0 %3370
        %3372 = vset.pattern.permute.xlu0 0
        %3373 = vperm.xlu0 %3372, %v3256
        %v3374 = vpop.permute.xlu0 %3373
        %3375 = vset.pattern.permute.xlu0 0
        %3376 = vperm.xlu0 %3375, %v3257
        %v3377 = vpop.permute.xlu0 %3376
        %3378 = vset.pattern.permute.xlu0 0
        %3379 = vperm.xlu0 %3378, %v3258
        %v3380 = vpop.permute.xlu0 %3379
        %3381 = vset.pattern.permute.xlu0 0
        %3382 = vperm.xlu0 %3381, %v3259
        %v3383 = vpop.permute.xlu0 %3382
        %3384 = vset.pattern.permute.xlu0 0
        %3385 = vperm.xlu0 %3384, %v3260
        %v3386 = vpop.permute.xlu0 %3385
        %3387 = vset.pattern.permute.xlu0 0
        %3388 = vperm.xlu0 %3387, %v3261
        %v3389 = vpop.permute.xlu0 %3388
        %3390 = vset.pattern.permute.xlu0 0
        %3391 = vperm.xlu0 %3390, %v3262
        %v3392 = vpop.permute.xlu0 %3391
        %3393 = vset.pattern.permute.xlu0 0
        %3394 = vperm.xlu0 %3393, %v3263
        %v3395 = vpop.permute.xlu0 %3394
        %3396 = vset.pattern.permute.xlu0 0
        %3397 = vperm.xlu0 %3396, %v3264
        %v3398 = vpop.permute.xlu0 %3397
        %3399 = vset.pattern.permute.xlu0 0
        %3400 = vperm.xlu0 %3399, %v3265
        %v3401 = vpop.permute.xlu0 %3400
        %3402 = vset.pattern.permute.xlu0 0
        %3403 = vperm.xlu0 %3402, %v3266
        %v3404 = vpop.permute.xlu0 %3403
        %3405 = vset.pattern.permute.xlu0 0
        %3406 = vperm.xlu0 %3405, %v3267
        %v3407 = vpop.permute.xlu0 %3406
        %3408 = vset.pattern.permute.xlu0 0
        %3409 = vperm.xlu0 %3408, %v3268
        %v3410 = vpop.permute.xlu0 %3409
        %3411 = vset.pattern.permute.xlu0 0
        %3412 = vperm.xlu0 %3411, %v3269
        %v3413 = vpop.permute.xlu0 %3412
        %3414 = vset.pattern.permute.xlu0 0
        %3415 = vperm.xlu0 %3414, %v3270
        %v3416 = vpop.permute.xlu0 %3415
        %3417 = vset.pattern.permute.xlu0 0
        %3418 = vperm.xlu0 %3417, %v3271
        %v3419 = vpop.permute.xlu0 %3418
        %3420 = vset.pattern.permute.xlu0 0
        %3421 = vperm.xlu0 %3420, %v3272
        %v3422 = vpop.permute.xlu0 %3421
        %3423 = vset.pattern.permute.xlu0 0
        %3424 = vperm.xlu0 %3423, %v3273
        %v3425 = vpop.permute.xlu0 %3424
        %3426 = vset.pattern.permute.xlu0 0
        %3427 = vperm.xlu0 %3426, %v3274
        %v3428 = vpop.permute.xlu0 %3427
        %3429 = vset.pattern.permute.xlu0 0
        %3430 = vperm.xlu0 %3429, %v3275
        %v3431 = vpop.permute.xlu0 %3430
        %3432 = vset.pattern.permute.xlu0 0
        %3433 = vperm.xlu0 %3432, %v3276
        %v3434 = vpop.permute.xlu0 %3433
        %3435 = vset.pattern.permute.xlu0 0
        %3436 = vperm.xlu0 %3435, %v3277
        %v3437 = vpop.permute.xlu0 %3436
        %3438 = vset.pattern.permute.xlu0 0
        %3439 = vperm.xlu0 %3438, %v3278
        %v3440 = vpop.permute.xlu0 %3439
        %3441 = vset.pattern.permute.xlu0 0
        %3442 = vperm.xlu0 %3441, %v3279
        %v3443 = vpop.permute.xlu0 %3442
        %3444 = vset.pattern.permute.xlu0 0
        %3445 = vperm.xlu0 %3444, %v3280
        %v3446 = vpop.permute.xlu0 %3445
        %3447 = vset.pattern.permute.xlu0 0
        %3448 = vperm.xlu0 %3447, %v3281
        %v3449 = vpop.permute.xlu0 %3448
        %3450 = vset.pattern.permute.xlu0 0
        %3451 = vperm.xlu0 %3450, %v3282
        %v3452 = vpop.permute.xlu0 %3451
        %3453 = vset.pattern.permute.xlu0 0
        %3454 = vperm.xlu0 %3453, %v3283
        %v3455 = vpop.permute.xlu0 %3454
        %3456 = vset.pattern.permute.xlu0 0
        %3457 = vperm.xlu0 %3456, %v3284
        %v3458 = vpop.permute.xlu0 %3457
        %3459 = vset.pattern.permute.xlu0 0
        %3460 = vperm.xlu0 %3459, %v3285
        %v3461 = vpop.permute.xlu0 %3460
        %3462 = vset.pattern.permute.xlu0 0
        %3463 = vperm.xlu0 %3462, %v3286
        %v3464 = vpop.permute.xlu0 %3463
        %3465 = vset.pattern.permute.xlu0 0
        %3466 = vperm.xlu0 %3465, %v3287
        %v3467 = vpop.permute.xlu0 %3466
        %3468 = vset.pattern.permute.xlu0 0
        %3469 = vperm.xlu0 %3468, %v3288
        %v3470 = vpop.permute.xlu0 %3469
        %3471 = vset.pattern.permute.xlu0 0
        %3472 = vperm.xlu0 %3471, %v3289
        %v3473 = vpop.permute.xlu0 %3472
        %3474 = vset.pattern.permute.xlu0 0
        %3475 = vperm.xlu0 %3474, %v3290
        %v3476 = vpop.permute.xlu0 %3475
        %3477 = vset.pattern.permute.xlu0 0
        %3478 = vperm.xlu0 %3477, %v3291
        %v3479 = vpop.permute.xlu0 %3478
        %3480 = vset.pattern.permute.xlu0 0
        %3481 = vperm.xlu0 %3480, %v3292
        %v3482 = vpop.permute.xlu0 %3481
        %3483 = vset.pattern.permute.xlu0 0
        %3484 = vperm.xlu0 %3483, %v3293
        %v3485 = vpop.permute.xlu0 %3484
        %v3486 = vlaneseq
        %v3487 = vshrl.u32 %v3486, 7
        %v3488 = vsub.s32 %v1755, %v3487
        %v3489 = vrot.slane %v3296, %v3488
        %v3490 = vlaneseq
        %v3491 = vshrl.u32 %v3490, 7
        %v3492 = vsub.s32 %v1760, %v3491
        %v3493 = vrot.slane %v3299, %v3492
        %v3494 = vsel %vm1765, %v3493, %v3489
        %v3495 = vlaneseq
        %v3496 = vshrl.u32 %v3495, 7
        %v3497 = vsub.s32 %v1767, %v3496
        %v3498 = vrot.slane %v3302, %v3497
        %v3499 = vsel %vm1772, %v3498, %v3494
        %v3500 = vlaneseq
        %v3501 = vshrl.u32 %v3500, 7
        %v3502 = vsub.s32 %v1774, %v3501
        %v3503 = vrot.slane %v3305, %v3502
        %v3504 = vsel %vm1779, %v3503, %v3499
        %v3505 = vlaneseq
        %v3506 = vshrl.u32 %v3505, 7
        %v3507 = vsub.s32 %v1781, %v3506
        %v3508 = vrot.slane %v3308, %v3507
        %v3509 = vsel %vm1786, %v3508, %v3504
        %v3510 = vlaneseq
        %v3511 = vshrl.u32 %v3510, 7
        %v3512 = vsub.s32 %v1788, %v3511
        %v3513 = vrot.slane %v3311, %v3512
        %v3514 = vsel %vm1793, %v3513, %v3509
        %v3515 = vlaneseq
        %v3516 = vshrl.u32 %v3515, 7
        %v3517 = vsub.s32 %v1795, %v3516
        %v3518 = vrot.slane %v3314, %v3517
        %v3519 = vsel %vm1800, %v3518, %v3514
        %v3520 = vlaneseq
        %v3521 = vshrl.u32 %v3520, 7
        %v3522 = vsub.s32 %v1802, %v3521
        %v3523 = vrot.slane %v3317, %v3522
        %v3524 = vsel %vm1807, %v3523, %v3519
        %v3525 = vlaneseq
        %v3526 = vshrl.u32 %v3525, 7
        %v3527 = vsub.s32 %v1809, %v3526
        %v3528 = vrot.slane %v3320, %v3527
        %v3529 = vsel %vm1814, %v3528, %v3524
        %v3530 = vlaneseq
        %v3531 = vshrl.u32 %v3530, 7
        %v3532 = vsub.s32 %v1816, %v3531
        %v3533 = vrot.slane %v3323, %v3532
        %v3534 = vsel %vm1821, %v3533, %v3529
        %v3535 = vlaneseq
        %v3536 = vshrl.u32 %v3535, 7
        %v3537 = vsub.s32 %v1823, %v3536
        %v3538 = vrot.slane %v3326, %v3537
        %v3539 = vsel %vm1828, %v3538, %v3534
        %v3540 = vlaneseq
        %v3541 = vshrl.u32 %v3540, 7
        %v3542 = vsub.s32 %v1830, %v3541
        %v3543 = vrot.slane %v3329, %v3542
        %v3544 = vsel %vm1835, %v3543, %v3539
        %v3545 = vlaneseq
        %v3546 = vshrl.u32 %v3545, 7
        %v3547 = vsub.s32 %v1837, %v3546
        %v3548 = vrot.slane %v3332, %v3547
        %v3549 = vsel %vm1842, %v3548, %v3544
        %v3550 = vlaneseq
        %v3551 = vshrl.u32 %v3550, 7
        %v3552 = vsub.s32 %v1844, %v3551
        %v3553 = vrot.slane %v3335, %v3552
        %v3554 = vsel %vm1849, %v3553, %v3549
        %v3555 = vlaneseq
        %v3556 = vshrl.u32 %v3555, 7
        %v3557 = vsub.s32 %v1851, %v3556
        %v3558 = vrot.slane %v3338, %v3557
        %v3559 = vsel %vm1856, %v3558, %v3554
        %v3560 = vlaneseq
        %v3561 = vshrl.u32 %v3560, 7
        %v3562 = vsub.s32 %v1858, %v3561
        %v3563 = vrot.slane %v3341, %v3562
        %v3564 = vsel %vm1863, %v3563, %v3559
        %v3565 = vlaneseq
        %v3566 = vshrl.u32 %v3565, 7
        %v3567 = vsub.s32 %v1755, %v3566
        %v3568 = vrot.slane %v3344, %v3567
        %v3569 = vlaneseq
        %v3570 = vshrl.u32 %v3569, 7
        %v3571 = vsub.s32 %v1760, %v3570
        %v3572 = vrot.slane %v3347, %v3571
        %v3573 = vsel %vm1765, %v3572, %v3568
        %v3574 = vlaneseq
        %v3575 = vshrl.u32 %v3574, 7
        %v3576 = vsub.s32 %v1767, %v3575
        %v3577 = vrot.slane %v3350, %v3576
        %v3578 = vsel %vm1772, %v3577, %v3573
        %v3579 = vlaneseq
        %v3580 = vshrl.u32 %v3579, 7
        %v3581 = vsub.s32 %v1774, %v3580
        %v3582 = vrot.slane %v3353, %v3581
        %v3583 = vsel %vm1779, %v3582, %v3578
        %v3584 = vlaneseq
        %v3585 = vshrl.u32 %v3584, 7
        %v3586 = vsub.s32 %v1781, %v3585
        %v3587 = vrot.slane %v3356, %v3586
        %v3588 = vsel %vm1786, %v3587, %v3583
        %v3589 = vlaneseq
        %v3590 = vshrl.u32 %v3589, 7
        %v3591 = vsub.s32 %v1788, %v3590
        %v3592 = vrot.slane %v3359, %v3591
        %v3593 = vsel %vm1793, %v3592, %v3588
        %v3594 = vlaneseq
        %v3595 = vshrl.u32 %v3594, 7
        %v3596 = vsub.s32 %v1795, %v3595
        %v3597 = vrot.slane %v3362, %v3596
        %v3598 = vsel %vm1800, %v3597, %v3593
        %v3599 = vlaneseq
        %v3600 = vshrl.u32 %v3599, 7
        %v3601 = vsub.s32 %v1802, %v3600
        %v3602 = vrot.slane %v3365, %v3601
        %v3603 = vsel %vm1807, %v3602, %v3598
        %v3604 = vlaneseq
        %v3605 = vshrl.u32 %v3604, 7
        %v3606 = vsub.s32 %v1809, %v3605
        %v3607 = vrot.slane %v3368, %v3606
        %v3608 = vsel %vm1814, %v3607, %v3603
        %v3609 = vlaneseq
        %v3610 = vshrl.u32 %v3609, 7
        %v3611 = vsub.s32 %v1816, %v3610
        %v3612 = vrot.slane %v3371, %v3611
        %v3613 = vsel %vm1821, %v3612, %v3608
        %v3614 = vlaneseq
        %v3615 = vshrl.u32 %v3614, 7
        %v3616 = vsub.s32 %v1823, %v3615
        %v3617 = vrot.slane %v3374, %v3616
        %v3618 = vsel %vm1828, %v3617, %v3613
        %v3619 = vlaneseq
        %v3620 = vshrl.u32 %v3619, 7
        %v3621 = vsub.s32 %v1830, %v3620
        %v3622 = vrot.slane %v3377, %v3621
        %v3623 = vsel %vm1835, %v3622, %v3618
        %v3624 = vlaneseq
        %v3625 = vshrl.u32 %v3624, 7
        %v3626 = vsub.s32 %v1837, %v3625
        %v3627 = vrot.slane %v3380, %v3626
        %v3628 = vsel %vm1842, %v3627, %v3623
        %v3629 = vlaneseq
        %v3630 = vshrl.u32 %v3629, 7
        %v3631 = vsub.s32 %v1844, %v3630
        %v3632 = vrot.slane %v3383, %v3631
        %v3633 = vsel %vm1849, %v3632, %v3628
        %v3634 = vlaneseq
        %v3635 = vshrl.u32 %v3634, 7
        %v3636 = vsub.s32 %v1851, %v3635
        %v3637 = vrot.slane %v3386, %v3636
        %v3638 = vsel %vm1856, %v3637, %v3633
        %v3639 = vlaneseq
        %v3640 = vshrl.u32 %v3639, 7
        %v3641 = vsub.s32 %v1858, %v3640
        %v3642 = vrot.slane %v3389, %v3641
        %v3643 = vsel %vm1863, %v3642, %v3638
        %v3644 = vlaneseq
        %v3645 = vshrl.u32 %v3644, 7
        %v3646 = vsub.s32 %v1755, %v3645
        %v3647 = vrot.slane %v3392, %v3646
        %v3648 = vlaneseq
        %v3649 = vshrl.u32 %v3648, 7
        %v3650 = vsub.s32 %v1760, %v3649
        %v3651 = vrot.slane %v3395, %v3650
        %v3652 = vsel %vm1765, %v3651, %v3647
        %v3653 = vlaneseq
        %v3654 = vshrl.u32 %v3653, 7
        %v3655 = vsub.s32 %v1767, %v3654
        %v3656 = vrot.slane %v3398, %v3655
        %v3657 = vsel %vm1772, %v3656, %v3652
        %v3658 = vlaneseq
        %v3659 = vshrl.u32 %v3658, 7
        %v3660 = vsub.s32 %v1774, %v3659
        %v3661 = vrot.slane %v3401, %v3660
        %v3662 = vsel %vm1779, %v3661, %v3657
        %v3663 = vlaneseq
        %v3664 = vshrl.u32 %v3663, 7
        %v3665 = vsub.s32 %v1781, %v3664
        %v3666 = vrot.slane %v3404, %v3665
        %v3667 = vsel %vm1786, %v3666, %v3662
        %v3668 = vlaneseq
        %v3669 = vshrl.u32 %v3668, 7
        %v3670 = vsub.s32 %v1788, %v3669
        %v3671 = vrot.slane %v3407, %v3670
        %v3672 = vsel %vm1793, %v3671, %v3667
        %v3673 = vlaneseq
        %v3674 = vshrl.u32 %v3673, 7
        %v3675 = vsub.s32 %v1795, %v3674
        %v3676 = vrot.slane %v3410, %v3675
        %v3677 = vsel %vm1800, %v3676, %v3672
        %v3678 = vlaneseq
        %v3679 = vshrl.u32 %v3678, 7
        %v3680 = vsub.s32 %v1802, %v3679
        %v3681 = vrot.slane %v3413, %v3680
        %v3682 = vsel %vm1807, %v3681, %v3677
        %v3683 = vlaneseq
        %v3684 = vshrl.u32 %v3683, 7
        %v3685 = vsub.s32 %v1809, %v3684
        %v3686 = vrot.slane %v3416, %v3685
        %v3687 = vsel %vm1814, %v3686, %v3682
        %v3688 = vlaneseq
        %v3689 = vshrl.u32 %v3688, 7
        %v3690 = vsub.s32 %v1816, %v3689
        %v3691 = vrot.slane %v3419, %v3690
        %v3692 = vsel %vm1821, %v3691, %v3687
        %v3693 = vlaneseq
        %v3694 = vshrl.u32 %v3693, 7
        %v3695 = vsub.s32 %v1823, %v3694
        %v3696 = vrot.slane %v3422, %v3695
        %v3697 = vsel %vm1828, %v3696, %v3692
        %v3698 = vlaneseq
        %v3699 = vshrl.u32 %v3698, 7
        %v3700 = vsub.s32 %v1830, %v3699
        %v3701 = vrot.slane %v3425, %v3700
        %v3702 = vsel %vm1835, %v3701, %v3697
        %v3703 = vlaneseq
        %v3704 = vshrl.u32 %v3703, 7
        %v3705 = vsub.s32 %v1837, %v3704
        %v3706 = vrot.slane %v3428, %v3705
        %v3707 = vsel %vm1842, %v3706, %v3702
        %v3708 = vlaneseq
        %v3709 = vshrl.u32 %v3708, 7
        %v3710 = vsub.s32 %v1844, %v3709
        %v3711 = vrot.slane %v3431, %v3710
        %v3712 = vsel %vm1849, %v3711, %v3707
        %v3713 = vlaneseq
        %v3714 = vshrl.u32 %v3713, 7
        %v3715 = vsub.s32 %v1851, %v3714
        %v3716 = vrot.slane %v3434, %v3715
        %v3717 = vsel %vm1856, %v3716, %v3712
        %v3718 = vlaneseq
        %v3719 = vshrl.u32 %v3718, 7
        %v3720 = vsub.s32 %v1858, %v3719
        %v3721 = vrot.slane %v3437, %v3720
        %v3722 = vsel %vm1863, %v3721, %v3717
        %v3723 = vlaneseq
        %v3724 = vshrl.u32 %v3723, 7
        %v3725 = vsub.s32 %v1755, %v3724
        %v3726 = vrot.slane %v3440, %v3725
        %v3727 = vlaneseq
        %v3728 = vshrl.u32 %v3727, 7
        %v3729 = vsub.s32 %v1760, %v3728
        %v3730 = vrot.slane %v3443, %v3729
        %v3731 = vsel %vm1765, %v3730, %v3726
        %v3732 = vlaneseq
        %v3733 = vshrl.u32 %v3732, 7
        %v3734 = vsub.s32 %v1767, %v3733
        %v3735 = vrot.slane %v3446, %v3734
        %v3736 = vsel %vm1772, %v3735, %v3731
        %v3737 = vlaneseq
        %v3738 = vshrl.u32 %v3737, 7
        %v3739 = vsub.s32 %v1774, %v3738
        %v3740 = vrot.slane %v3449, %v3739
        %v3741 = vsel %vm1779, %v3740, %v3736
        %v3742 = vlaneseq
        %v3743 = vshrl.u32 %v3742, 7
        %v3744 = vsub.s32 %v1781, %v3743
        %v3745 = vrot.slane %v3452, %v3744
        %v3746 = vsel %vm1786, %v3745, %v3741
        %v3747 = vlaneseq
        %v3748 = vshrl.u32 %v3747, 7
        %v3749 = vsub.s32 %v1788, %v3748
        %v3750 = vrot.slane %v3455, %v3749
        %v3751 = vsel %vm1793, %v3750, %v3746
        %v3752 = vlaneseq
        %v3753 = vshrl.u32 %v3752, 7
        %v3754 = vsub.s32 %v1795, %v3753
        %v3755 = vrot.slane %v3458, %v3754
        %v3756 = vsel %vm1800, %v3755, %v3751
        %v3757 = vlaneseq
        %v3758 = vshrl.u32 %v3757, 7
        %v3759 = vsub.s32 %v1802, %v3758
        %v3760 = vrot.slane %v3461, %v3759
        %v3761 = vsel %vm1807, %v3760, %v3756
        %v3762 = vlaneseq
        %v3763 = vshrl.u32 %v3762, 7
        %v3764 = vsub.s32 %v1809, %v3763
        %v3765 = vrot.slane %v3464, %v3764
        %v3766 = vsel %vm1814, %v3765, %v3761
        %v3767 = vlaneseq
        %v3768 = vshrl.u32 %v3767, 7
        %v3769 = vsub.s32 %v1816, %v3768
        %v3770 = vrot.slane %v3467, %v3769
        %v3771 = vsel %vm1821, %v3770, %v3766
        %v3772 = vlaneseq
        %v3773 = vshrl.u32 %v3772, 7
        %v3774 = vsub.s32 %v1823, %v3773
        %v3775 = vrot.slane %v3470, %v3774
        %v3776 = vsel %vm1828, %v3775, %v3771
        %v3777 = vlaneseq
        %v3778 = vshrl.u32 %v3777, 7
        %v3779 = vsub.s32 %v1830, %v3778
        %v3780 = vrot.slane %v3473, %v3779
        %v3781 = vsel %vm1835, %v3780, %v3776
        %v3782 = vlaneseq
        %v3783 = vshrl.u32 %v3782, 7
        %v3784 = vsub.s32 %v1837, %v3783
        %v3785 = vrot.slane %v3476, %v3784
        %v3786 = vsel %vm1842, %v3785, %v3781
        %v3787 = vlaneseq
        %v3788 = vshrl.u32 %v3787, 7
        %v3789 = vsub.s32 %v1844, %v3788
        %v3790 = vrot.slane %v3479, %v3789
        %v3791 = vsel %vm1849, %v3790, %v3786
        %v3792 = vlaneseq
        %v3793 = vshrl.u32 %v3792, 7
        %v3794 = vsub.s32 %v1851, %v3793
        %v3795 = vrot.slane %v3482, %v3794
        %v3796 = vsel %vm1856, %v3795, %v3791
        %v3797 = vlaneseq
        %v3798 = vshrl.u32 %v3797, 7
        %v3799 = vsub.s32 %v1858, %v3798
        %v3800 = vrot.slane %v3485, %v3799
        %v3801 = vsel %vm1863, %v3800, %v3796
        %v3802 = vsel %vm2102, %v3643, %v3564
        %v3803 = vsel %vm2104, %v3722, %v3802
        %v3804 = vsel %vm2106, %v3801, %v3803
        %v3805 = vpack.c.b16 %v3804, %v3804
        %v3807 = vunpack.c.l.s4 1983009808
        %v3808 = vunpack.c.0.s8 %v3807
        %v3809 = vlaneseq
        %v3810 = vshrl.u32 %v3809, 7
        %v3811 = vsub.s32 %v3808, %v3810
        %v3812 = vrot.slane %v3805, %v3811
        %3814 = vst [vmem:[%s550] sm:$0x3] %v3812
        %s3815 = sand.u32 %s131, 1
        %s3816 = scalar_lea.sflag [#allocation5], %s3815
        %s3817 = sand.u32 %s131, 1
        %s3818 = smul.addr %s3817, 4
        %s3819 = scalar_lea.vmem [#allocation4], %s3818
        %s3820 = sand.u32 %s157, 1
        %s3821 = scalar_lea.sflag [#allocation7], %s3820
        %s3822 = sand.u32 %s157, 1
        %s3823 = smul.addr %s3822, 2
        %s3824 = scalar_lea.vmem [#allocation6], %s3823
        // Predicated region
        $region78: #{tpu_custom_call.1} parent=72 // pred_check
          %p3825 = pneg %p141
        $region79: #{tpu_custom_call.1} parent=72 // pred_check_branch
          %3827 = sbr.rel (%p3825) target = $region81
        $region80: #{tpu_custom_call.1} parent=72 // pred_region
          %s3829 = ssub.s32 64, 64
          %3830 = vsyncadd %s3816, %s3829
          %s3831 = smul.addr %s24, 64
          %s3832 = scalar_lea.hbm %s4, %s3831
          %s3834 = sshll.u32 %s3819, 4
          %s3835 = int_to_ptr.vmem [resolvable:$true] %s3834
          %3837 = dma.vmem_to_hbm [thread:$0]  %s3835, 64, %s3832, %s3816
        $region81: #{tpu_custom_call.1} parent=72 // pred_fallthru
          _
        // Predicated region
        $region82: #{tpu_custom_call.1} parent=72 // pred_check
          %p3838 = pneg %p167
        $region83: #{tpu_custom_call.1} parent=72 // pred_check_branch
          %3840 = sbr.rel (%p3838) target = $region85
        $region84: #{tpu_custom_call.1} parent=72 // pred_region
          %s3842 = ssub.s32 32, 32
          %3843 = vsyncadd %s3821, %s3842
          %s3844 = smul.addr %s24, 32
          %s3845 = scalar_lea.hbm %s5, %s3844
          %s3847 = sshll.u32 %s3824, 4
          %s3848 = int_to_ptr.vmem [resolvable:$true] %s3847
          %3850 = dma.vmem_to_hbm [thread:$0]  %s3848, 32, %s3845, %s3821
        $region85: #{tpu_custom_call.1} parent=72 // pred_fallthru
          _
      $region73: #{tpu_custom_call.1} parent=5 // pred_fallthru
        _
      %p3851 = scmp.le.s32.totalorder 2, %s19
      // Predicated region
      $region86: #{tpu_custom_call.1} parent=5 // pred_check
        %p3852 = pneg %p3851
      $region87: #{tpu_custom_call.1} parent=5 // pred_check_branch
        %3854 = sbr.rel (%p3852) target = $region89
      $region88: #{tpu_custom_call.1} parent=5 // pred_region
        %s3855 = ssub.s32 %s19, 2
        // Predicated region
        $region90: #{tpu_custom_call.1} parent=88 // pred_check
          %p3856 = pneg %p147
        $region91: #{tpu_custom_call.1} parent=88 // pred_check_branch
          %3858 = sbr.rel (%p3856) target = $region93
        $region92: #{tpu_custom_call.1} parent=88 // pred_region
          %s3859 = sand.u32 %s132, 1
          %s3860 = scalar_lea.sflag [#allocation5], %s3859
          %s3861 = sand.u32 %s132, 1
          %s3862 = smul.addr %s3861, 4
          %s3863 = scalar_lea.vmem [#allocation4], %s3862
          %3864 = dma.done %s3860, 64
        $region93: #{tpu_custom_call.1} parent=88 // pred_fallthru
          _
        // Predicated region
        $region94: #{tpu_custom_call.1} parent=88 // pred_check
          %p3865 = pneg %p173
        $region95: #{tpu_custom_call.1} parent=88 // pred_check_branch
          %3867 = sbr.rel (%p3865) target = $region97
        $region96: #{tpu_custom_call.1} parent=88 // pred_region
          %s3868 = sand.u32 %s158, 1
          %s3869 = scalar_lea.sflag [#allocation7], %s3868
          %s3870 = sand.u32 %s158, 1
          %s3871 = smul.addr %s3870, 2
          %s3872 = scalar_lea.vmem [#allocation6], %s3871
          %3873 = dma.done %s3869, 32
        $region97: #{tpu_custom_call.1} parent=88 // pred_fallthru
          _
      $region89: #{tpu_custom_call.1} parent=5 // pred_fallthru
        _
    $region6: #{tpu_custom_call.1} parent=1 // loop_footer
      %s23 = sadd.s32 1, %s19
    $region7: #{tpu_custom_call.1} parent=1 // loop_footer_branch
      %18 = sbr.rel target = $region3
    $region8: #{tpu_custom_call.1} parent=1 // loop_exit
      _
    %3874 = vsyncpa [#allocation5], 1
    %s3875 = scalar_lea.sflag [#allocation5], 1
    %3876 = vsyncpa %s3875, 1
    %3877 = vsyncpa [#allocation7], 1
    %s3878 = scalar_lea.sflag [#allocation7], 1
    %3879 = vsyncpa %s3878, 1

</llo_original>
